<compile_context>
chip_gen: v7x
topology: tpu7x:2x2x1
jax: 0.10.0
libtpu: 0.0.40
codegen_flags: <defaults>
</compile_context>

<pallas_src>
import jax
import jax.numpy as jnp
from jax.experimental import pallas as pl
from jax.experimental.pallas import tpu as pltpu  # noqa: F401  (TPU backend assumed)

# ---------------- config (small synthetic CLIP-like vision tower) ----------------
B = 2
C = 3
IMG = 16
PATCH = 8
NUM_PATCHES = (IMG // PATCH) * (IMG // PATCH)   # 4
SEQ = NUM_PATCHES + 1                           # 5  (CLS + patches)
HIDDEN = 32
NUM_HEADS = 4
HEAD_DIM = HIDDEN // NUM_HEADS                  # 8
MLP = 4 * HIDDEN                                # 128
NUM_LAYERS = 2
PROJ_DIM = 16
PATCH_DIM = C * PATCH * PATCH                   # 192
EPS = 1e-5
SCALE = 1.0 / (HEAD_DIM ** 0.5)


def _layernorm(x, w, b):
    mu = jnp.mean(x, axis=-1, keepdims=True)
    var = jnp.mean((x - mu) ** 2, axis=-1, keepdims=True)
    return (x - mu) * jax.lax.rsqrt(var + EPS) * w + b


def _split_heads(z):
    # (B*SEQ, HIDDEN) -> (B*NUM_HEADS, SEQ, HEAD_DIM)
    # Only static row/lane slices + leading-axis stack (no minor-dim reshapes).
    parts = []
    for b in range(B):
        rows = z[b * SEQ:(b + 1) * SEQ, :]                         # (T, D)
        for h in range(NUM_HEADS):
            parts.append(rows[:, h * HEAD_DIM:(h + 1) * HEAD_DIM])  # (T, hd)
    return jnp.stack(parts, axis=0)


def _merge_heads(o):
    # (B*NUM_HEADS, SEQ, HEAD_DIM) -> (B*SEQ, HIDDEN)
    per_batch = []
    for b in range(B):
        heads = [o[b * NUM_HEADS + h] for h in range(NUM_HEADS)]    # each (T, hd)
        per_batch.append(jnp.concatenate(heads, axis=-1))           # (T, D)
    return jnp.concatenate(per_batch, axis=0)                       # (B*T, D)


# ---------------- the single fused kernel -------------------------------------------
def fused_kernel(patches_ref, wpe_ref, cls_ref, pos_ref, plnw_ref, plnb_ref,
                 ln1w_ref, ln1b_ref, wq_ref, bq_ref, wk_ref, bk_ref,
                 wv_ref, bv_ref, wo_ref, bo_ref, ln2w_ref, ln2b_ref,
                 w1_ref, b1_ref, w2_ref, b2_ref, wp_ref, bp_ref, out_ref):
    # --- patch embed (conv-as-matmul) for the whole batch in one MXU call ---
    pe = jnp.dot(patches_ref[...], wpe_ref[...],
                 preferred_element_type=jnp.float32)                # (B*P, D)

    # --- CLS + positional embedding, flattened to (B*SEQ, D) ---
    rows = []
    for b in range(B):                                              # B=2, static unroll
        xb = jnp.concatenate(
            [cls_ref[...], pe[b * NUM_PATCHES:(b + 1) * NUM_PATCHES, :]], axis=0)
        rows.append(xb + pos_ref[...])
    x = jnp.concatenate(rows, axis=0)                               # (B*T, D)
    x = _layernorm(x, plnw_ref[...], plnb_ref[...])                 # CLIP pre_layernorm

    # --- encoder layers (NUM_LAYERS=2, statically unrolled; weights stacked on dim 0) ---
    for l in range(NUM_LAYERS):
        h = _layernorm(x, ln1w_ref[l], ln1b_ref[l])
        q = jnp.dot(h, wq_ref[l], preferred_element_type=jnp.float32) + bq_ref[l]
        k = jnp.dot(h, wk_ref[l], preferred_element_type=jnp.float32) + bk_ref[l]
        v = jnp.dot(h, wv_ref[l], preferred_element_type=jnp.float32) + bv_ref[l]

        qh, kh, vh = _split_heads(q), _split_heads(k), _split_heads(v)   # (B*H, T, hd)
        s = jnp.einsum('ntd,nsd->nts', qh, kh,
                       preferred_element_type=jnp.float32) * SCALE       # (B*H, T, T)
        s = s - jnp.max(s, axis=-1, keepdims=True)
        e = jnp.exp(s)
        p = e * pl.reciprocal(jnp.sum(e, axis=-1, keepdims=True), approx=True)
        o = jnp.einsum('nts,nsd->ntd', p, vh,
                       preferred_element_type=jnp.float32)               # (B*H, T, hd)
        attn = _merge_heads(o)                                           # (B*T, D)

        attn = jnp.dot(attn, wo_ref[l], preferred_element_type=jnp.float32) + bo_ref[l]
        x = x + attn

        h2 = _layernorm(x, ln2w_ref[l], ln2b_ref[l])
        ff = jnp.dot(h2, w1_ref[l], preferred_element_type=jnp.float32) + b1_ref[l]
        ff = ff * jax.nn.sigmoid(1.702 * ff)                             # quick_gelu (CLIP)
        ff = jnp.dot(ff, w2_ref[l], preferred_element_type=jnp.float32) + b2_ref[l]
        x = x + ff

    # --- head: take each image's CLS row, project, single lane-dense (B, PROJ_DIM) store ---
    cls_rows = jnp.concatenate([x[b * SEQ:b * SEQ + 1, :] for b in range(B)], axis=0)
    out_ref[...] = (jnp.dot(cls_rows, wp_ref[...],
                            preferred_element_type=jnp.float32) + bp_ref[...])


def fused_forward_call(patches_flat, p):
    # No grid: single invocation, all operands placed whole in VMEM (everything is tiny).
    return pl.pallas_call(
        fused_kernel,
        out_shape=jax.ShapeDtypeStruct((B, PROJ_DIM), jnp.float32),
    )(patches_flat, p["wpe"], p["cls"], p["pos"], p["pre_lnw"], p["pre_lnb"],
      p["ln1w"], p["ln1b"], p["wq"], p["bq"], p["wk"], p["bk"],
      p["wv"], p["bv"], p["wo"], p["bo"], p["ln2w"], p["ln2b"],
      p["w1"], p["b1"], p["w2"], p["b2"], p["wp"], p["bp"])


# ---------------- params (deterministic, synthetic; layer weights stacked on dim 0) --
def init_params(key):
    keys = iter(jax.random.split(key, 64))
    nrm = lambda shape, s=0.02: (s * jax.random.normal(next(keys), shape)).astype(jnp.float32)
    ones = lambda shape: jnp.ones(shape, jnp.float32)
    zeros = lambda shape: jnp.zeros(shape, jnp.float32)
    L = NUM_LAYERS
    return dict(
        wpe=nrm((PATCH_DIM, HIDDEN)),              # conv2d(patch, stride=patch, bias=False)
        cls=nrm((1, HIDDEN)),
        pos=nrm((SEQ, HIDDEN)),
        pre_lnw=ones((1, HIDDEN)), pre_lnb=zeros((1, HIDDEN)),
        ln1w=ones((L, 1, HIDDEN)), ln1b=zeros((L, 1, HIDDEN)),
        wq=nrm((L, HIDDEN, HIDDEN)), bq=zeros((L, 1, HIDDEN)),
        wk=nrm((L, HIDDEN, HIDDEN)), bk=zeros((L, 1, HIDDEN)),
        wv=nrm((L, HIDDEN, HIDDEN)), bv=zeros((L, 1, HIDDEN)),
        wo=nrm((L, HIDDEN, HIDDEN)), bo=zeros((L, 1, HIDDEN)),
        ln2w=ones((L, 1, HIDDEN)), ln2b=zeros((L, 1, HIDDEN)),
        w1=nrm((L, HIDDEN, MLP)), b1=zeros((L, 1, MLP)),
        w2=nrm((L, MLP, HIDDEN)), b2=zeros((L, 1, HIDDEN)),
        wp=nrm((HIDDEN, PROJ_DIM)), bp=zeros((1, PROJ_DIM)),   # self.proj
    )


# ---------------- glue: NCHW -> flattened patches, then forward ----------------------
def extract_patches(pixel_values):
    Bn, Cn, H, W = pixel_values.shape
    x = pixel_values.reshape(Bn, Cn, H // PATCH, PATCH, W // PATCH, PATCH)
    x = x.transpose(0, 2, 4, 1, 3, 5)                  # (B, Hp, Wp, C, p, p)
    return x.reshape(Bn * NUM_PATCHES, PATCH_DIM)      # matches conv weight (C,p,p) order


def image_prefix_captioner_forward(pixel_values, params):
    patches = extract_patches(pixel_values.astype(jnp.float32))   # (B*P, C*p*p)
    # TODO(synk): the generate_kwargs branch (language_model.generate autoregressive
    # decoding) has no Pallas equivalent here; this implements the prefix_embed path.
    prefix_2d = fused_forward_call(patches, params)               # (B, PROJ_DIM)
    return prefix_2d.reshape(B, 1, PROJ_DIM)                      # .unsqueeze(1)


if __name__ == "__main__":
    key = jax.random.PRNGKey(0)
    pkey, xkey = jax.random.split(key)
    params = init_params(pkey)
    pixel_values = jax.random.normal(xkey, (B, C, IMG, IMG), jnp.float32)
    fwd = jax.jit(image_prefix_captioner_forward)
    out = fwd(pixel_values, params)
    jax.block_until_ready(out)
    assert out.shape == (B, 1, PROJ_DIM) and out.dtype == jnp.float32
    assert bool(jnp.all(jnp.isfinite(out)))
    print("KERNEL_OK")
</pallas_src>

<mosaic_0001>
module attributes {stable_mosaic.version = 11 : i64} {
  func.func @fused_kernel(%arg0: memref<8x192xf32, #tpu.memory_space<vmem>>, %arg1: memref<192x32xf32, #tpu.memory_space<vmem>>, %arg2: memref<1x32xf32, #tpu.memory_space<vmem>>, %arg3: memref<5x32xf32, #tpu.memory_space<vmem>>, %arg4: memref<1x32xf32, #tpu.memory_space<vmem>>, %arg5: memref<1x32xf32, #tpu.memory_space<vmem>>, %arg6: memref<2x1x32xf32, #tpu.memory_space<vmem>>, %arg7: memref<2x1x32xf32, #tpu.memory_space<vmem>>, %arg8: memref<2x32x32xf32, #tpu.memory_space<vmem>>, %arg9: memref<2x1x32xf32, #tpu.memory_space<vmem>>, %arg10: memref<2x32x32xf32, #tpu.memory_space<vmem>>, %arg11: memref<2x1x32xf32, #tpu.memory_space<vmem>>, %arg12: memref<2x32x32xf32, #tpu.memory_space<vmem>>, %arg13: memref<2x1x32xf32, #tpu.memory_space<vmem>>, %arg14: memref<2x32x32xf32, #tpu.memory_space<vmem>>, %arg15: memref<2x1x32xf32, #tpu.memory_space<vmem>>, %arg16: memref<2x1x32xf32, #tpu.memory_space<vmem>>, %arg17: memref<2x1x32xf32, #tpu.memory_space<vmem>>, %arg18: memref<2x32x128xf32, #tpu.memory_space<vmem>>, %arg19: memref<2x1x128xf32, #tpu.memory_space<vmem>>, %arg20: memref<2x128x32xf32, #tpu.memory_space<vmem>>, %arg21: memref<2x1x32xf32, #tpu.memory_space<vmem>>, %arg22: memref<32x16xf32, #tpu.memory_space<vmem>>, %arg23: memref<1x16xf32, #tpu.memory_space<vmem>>, %arg24: memref<2x16xf32, #tpu.memory_space<vmem>>) attributes {dimension_semantics = [], scalar_prefetch = 0 : i64, scratch_operands = 0 : i64, tpu.core_type = #tpu.core_type<tc>} {
    %c0 = arith.constant 0 : index
    %c0_0 = arith.constant 0 : index
    %0 = vector.load %arg0[%c0, %c0_0] : memref<8x192xf32, #tpu.memory_space<vmem>>, vector<8x192xf32>
    %c0_1 = arith.constant 0 : index
    %c0_2 = arith.constant 0 : index
    %1 = vector.load %arg1[%c0_1, %c0_2] : memref<192x32xf32, #tpu.memory_space<vmem>>, vector<192x32xf32>
    %cst = arith.constant dense<0.000000e+00> : vector<8x32xf32>
    %2 = tpu.matmul %0, %1, %cst {dimension_numbers = #tpu.dot_dimension_numbers<[1], [0], [0], [1], [0, 0, 1, 1], [], []>} : vector<8x192xf32>, vector<192x32xf32>, vector<8x32xf32> -> vector<8x32xf32>
    %c0_3 = arith.constant 0 : index
    %c0_4 = arith.constant 0 : index
    %3 = vector.load %arg2[%c0_3, %c0_4] : memref<1x32xf32, #tpu.memory_space<vmem>>, vector<1x32xf32>
    %4 = vector.extract_strided_slice %2 {offsets = [0, 0], sizes = [4, 32], strides = [1, 1]} : vector<8x32xf32> to vector<4x32xf32>
    %5 = tpu.concatenate %3, %4 in 0 : vector<1x32xf32>, vector<4x32xf32> -> vector<5x32xf32>
    %c0_5 = arith.constant 0 : index
    %c0_6 = arith.constant 0 : index
    %6 = vector.load %arg3[%c0_5, %c0_6] : memref<5x32xf32, #tpu.memory_space<vmem>>, vector<5x32xf32>
    %7 = arith.addf %5, %6 : vector<5x32xf32>
    %c0_7 = arith.constant 0 : index
    %c0_8 = arith.constant 0 : index
    %8 = vector.load %arg2[%c0_7, %c0_8] : memref<1x32xf32, #tpu.memory_space<vmem>>, vector<1x32xf32>
    %9 = vector.extract_strided_slice %2 {offsets = [4, 0], sizes = [4, 32], strides = [1, 1]} : vector<8x32xf32> to vector<4x32xf32>
    %10 = tpu.concatenate %8, %9 in 0 : vector<1x32xf32>, vector<4x32xf32> -> vector<5x32xf32>
    %c0_9 = arith.constant 0 : index
    %c0_10 = arith.constant 0 : index
    %11 = vector.load %arg3[%c0_9, %c0_10] : memref<5x32xf32, #tpu.memory_space<vmem>>, vector<5x32xf32>
    %12 = arith.addf %10, %11 : vector<5x32xf32>
    %13 = tpu.concatenate %7, %12 in 0 : vector<5x32xf32>, vector<5x32xf32> -> vector<10x32xf32>
    %c0_11 = arith.constant 0 : index
    %c0_12 = arith.constant 0 : index
    %14 = vector.load %arg4[%c0_11, %c0_12] : memref<1x32xf32, #tpu.memory_space<vmem>>, vector<1x32xf32>
    %c0_13 = arith.constant 0 : index
    %c0_14 = arith.constant 0 : index
    %15 = vector.load %arg5[%c0_13, %c0_14] : memref<1x32xf32, #tpu.memory_space<vmem>>, vector<1x32xf32>
    %cst_15 = arith.constant dense<0.000000e+00> : vector<10xf32>
    %16 = vector.multi_reduction <add>, %13, %cst_15 [1] : vector<10x32xf32> to vector<10xf32>
    %17 = vector.shape_cast %16 : vector<10xf32> to vector<10x1xf32>
    %cst_16 = arith.constant 3.200000e+01 : f32
    %18 = vector.broadcast %cst_16 : f32 to vector<10x1xf32>
    %19 = arith.divf %17, %18 : vector<10x1xf32>
    %20 = vector.broadcast %19 : vector<10x1xf32> to vector<10x32xf32>
    %21 = arith.subf %13, %20 : vector<10x32xf32>
    %22 = arith.mulf %21, %21 : vector<10x32xf32>
    %cst_17 = arith.constant dense<0.000000e+00> : vector<10xf32>
    %23 = vector.multi_reduction <add>, %22, %cst_17 [1] : vector<10x32xf32> to vector<10xf32>
    %24 = vector.shape_cast %23 : vector<10xf32> to vector<10x1xf32>
    %cst_18 = arith.constant 3.200000e+01 : f32
    %25 = vector.broadcast %cst_18 : f32 to vector<10x1xf32>
    %26 = arith.divf %24, %25 : vector<10x1xf32>
    %27 = vector.broadcast %19 : vector<10x1xf32> to vector<10x32xf32>
    %28 = arith.subf %13, %27 : vector<10x32xf32>
    %cst_19 = arith.constant 9.99999974E-6 : f32
    %29 = vector.broadcast %cst_19 : f32 to vector<10x1xf32>
    %30 = arith.addf %26, %29 : vector<10x1xf32>
    %31 = math.rsqrt %30 : vector<10x1xf32>
    %32 = vector.broadcast %31 : vector<10x1xf32> to vector<10x32xf32>
    %33 = arith.mulf %28, %32 : vector<10x32xf32>
    %34 = vector.broadcast %14 : vector<1x32xf32> to vector<10x32xf32>
    %35 = arith.mulf %33, %34 : vector<10x32xf32>
    %36 = vector.broadcast %15 : vector<1x32xf32> to vector<10x32xf32>
    %37 = arith.addf %35, %36 : vector<10x32xf32>
    %c0_20 = arith.constant 0 : index
    %c0_21 = arith.constant 0 : index
    %c0_22 = arith.constant 0 : index
    %38 = vector.load %arg6[%c0_20, %c0_21, %c0_22] : memref<2x1x32xf32, #tpu.memory_space<vmem>>, vector<1x1x32xf32>
    %39 = vector.shape_cast %38 : vector<1x1x32xf32> to vector<1x32xf32>
    %c0_23 = arith.constant 0 : index
    %c0_24 = arith.constant 0 : index
    %c0_25 = arith.constant 0 : index
    %40 = vector.load %arg7[%c0_23, %c0_24, %c0_25] : memref<2x1x32xf32, #tpu.memory_space<vmem>>, vector<1x1x32xf32>
    %41 = vector.shape_cast %40 : vector<1x1x32xf32> to vector<1x32xf32>
    %cst_26 = arith.constant dense<0.000000e+00> : vector<10xf32>
    %42 = vector.multi_reduction <add>, %37, %cst_26 [1] : vector<10x32xf32> to vector<10xf32>
    %43 = vector.shape_cast %42 : vector<10xf32> to vector<10x1xf32>
    %cst_27 = arith.constant 3.200000e+01 : f32
    %44 = vector.broadcast %cst_27 : f32 to vector<10x1xf32>
    %45 = arith.divf %43, %44 : vector<10x1xf32>
    %46 = vector.broadcast %45 : vector<10x1xf32> to vector<10x32xf32>
    %47 = arith.subf %37, %46 : vector<10x32xf32>
    %48 = arith.mulf %47, %47 : vector<10x32xf32>
    %cst_28 = arith.constant dense<0.000000e+00> : vector<10xf32>
    %49 = vector.multi_reduction <add>, %48, %cst_28 [1] : vector<10x32xf32> to vector<10xf32>
    %50 = vector.shape_cast %49 : vector<10xf32> to vector<10x1xf32>
    %cst_29 = arith.constant 3.200000e+01 : f32
    %51 = vector.broadcast %cst_29 : f32 to vector<10x1xf32>
    %52 = arith.divf %50, %51 : vector<10x1xf32>
    %53 = vector.broadcast %45 : vector<10x1xf32> to vector<10x32xf32>
    %54 = arith.subf %37, %53 : vector<10x32xf32>
    %cst_30 = arith.constant 9.99999974E-6 : f32
    %55 = vector.broadcast %cst_30 : f32 to vector<10x1xf32>
    %56 = arith.addf %52, %55 : vector<10x1xf32>
    %57 = math.rsqrt %56 : vector<10x1xf32>
    %58 = vector.broadcast %57 : vector<10x1xf32> to vector<10x32xf32>
    %59 = arith.mulf %54, %58 : vector<10x32xf32>
    %60 = vector.broadcast %39 : vector<1x32xf32> to vector<10x32xf32>
    %61 = arith.mulf %59, %60 : vector<10x32xf32>
    %62 = vector.broadcast %41 : vector<1x32xf32> to vector<10x32xf32>
    %63 = arith.addf %61, %62 : vector<10x32xf32>
    %c0_31 = arith.constant 0 : index
    %c0_32 = arith.constant 0 : index
    %c0_33 = arith.constant 0 : index
    %64 = vector.load %arg8[%c0_31, %c0_32, %c0_33] : memref<2x32x32xf32, #tpu.memory_space<vmem>>, vector<1x32x32xf32>
    %65 = vector.shape_cast %64 : vector<1x32x32xf32> to vector<32x32xf32>
    %cst_34 = arith.constant dense<0.000000e+00> : vector<10x32xf32>
    %66 = tpu.matmul %63, %65, %cst_34 {dimension_numbers = #tpu.dot_dimension_numbers<[1], [0], [0], [1], [0, 0, 1, 1], [], []>} : vector<10x32xf32>, vector<32x32xf32>, vector<10x32xf32> -> vector<10x32xf32>
    %c0_35 = arith.constant 0 : index
    %c0_36 = arith.constant 0 : index
    %c0_37 = arith.constant 0 : index
    %67 = vector.load %arg9[%c0_35, %c0_36, %c0_37] : memref<2x1x32xf32, #tpu.memory_space<vmem>>, vector<1x1x32xf32>
    %68 = vector.shape_cast %67 : vector<1x1x32xf32> to vector<1x32xf32>
    %69 = vector.broadcast %68 : vector<1x32xf32> to vector<10x32xf32>
    %70 = arith.addf %66, %69 : vector<10x32xf32>
    %c0_38 = arith.constant 0 : index
    %c0_39 = arith.constant 0 : index
    %c0_40 = arith.constant 0 : index
    %71 = vector.load %arg10[%c0_38, %c0_39, %c0_40] : memref<2x32x32xf32, #tpu.memory_space<vmem>>, vector<1x32x32xf32>
    %72 = vector.shape_cast %71 : vector<1x32x32xf32> to vector<32x32xf32>
    %cst_41 = arith.constant dense<0.000000e+00> : vector<10x32xf32>
    %73 = tpu.matmul %63, %72, %cst_41 {dimension_numbers = #tpu.dot_dimension_numbers<[1], [0], [0], [1], [0, 0, 1, 1], [], []>} : vector<10x32xf32>, vector<32x32xf32>, vector<10x32xf32> -> vector<10x32xf32>
    %c0_42 = arith.constant 0 : index
    %c0_43 = arith.constant 0 : index
    %c0_44 = arith.constant 0 : index
    %74 = vector.load %arg11[%c0_42, %c0_43, %c0_44] : memref<2x1x32xf32, #tpu.memory_space<vmem>>, vector<1x1x32xf32>
    %75 = vector.shape_cast %74 : vector<1x1x32xf32> to vector<1x32xf32>
    %76 = vector.broadcast %75 : vector<1x32xf32> to vector<10x32xf32>
    %77 = arith.addf %73, %76 : vector<10x32xf32>
    %c0_45 = arith.constant 0 : index
    %c0_46 = arith.constant 0 : index
    %c0_47 = arith.constant 0 : index
    %78 = vector.load %arg12[%c0_45, %c0_46, %c0_47] : memref<2x32x32xf32, #tpu.memory_space<vmem>>, vector<1x32x32xf32>
    %79 = vector.shape_cast %78 : vector<1x32x32xf32> to vector<32x32xf32>
    %cst_48 = arith.constant dense<0.000000e+00> : vector<10x32xf32>
    %80 = tpu.matmul %63, %79, %cst_48 {dimension_numbers = #tpu.dot_dimension_numbers<[1], [0], [0], [1], [0, 0, 1, 1], [], []>} : vector<10x32xf32>, vector<32x32xf32>, vector<10x32xf32> -> vector<10x32xf32>
    %c0_49 = arith.constant 0 : index
    %c0_50 = arith.constant 0 : index
    %c0_51 = arith.constant 0 : index
    %81 = vector.load %arg13[%c0_49, %c0_50, %c0_51] : memref<2x1x32xf32, #tpu.memory_space<vmem>>, vector<1x1x32xf32>
    %82 = vector.shape_cast %81 : vector<1x1x32xf32> to vector<1x32xf32>
    %83 = vector.broadcast %82 : vector<1x32xf32> to vector<10x32xf32>
    %84 = arith.addf %80, %83 : vector<10x32xf32>
    %85 = vector.extract_strided_slice %70 {offsets = [0, 0], sizes = [5, 32], strides = [1, 1]} : vector<10x32xf32> to vector<5x32xf32>
    %86 = vector.extract_strided_slice %85 {offsets = [0, 0], sizes = [5, 8], strides = [1, 1]} : vector<5x32xf32> to vector<5x8xf32>
    %87 = vector.extract_strided_slice %85 {offsets = [0, 8], sizes = [5, 8], strides = [1, 1]} : vector<5x32xf32> to vector<5x8xf32>
    %88 = vector.extract_strided_slice %85 {offsets = [0, 16], sizes = [5, 8], strides = [1, 1]} : vector<5x32xf32> to vector<5x8xf32>
    %89 = vector.extract_strided_slice %85 {offsets = [0, 24], sizes = [5, 8], strides = [1, 1]} : vector<5x32xf32> to vector<5x8xf32>
    %90 = vector.extract_strided_slice %70 {offsets = [5, 0], sizes = [5, 32], strides = [1, 1]} : vector<10x32xf32> to vector<5x32xf32>
    %91 = vector.extract_strided_slice %90 {offsets = [0, 0], sizes = [5, 8], strides = [1, 1]} : vector<5x32xf32> to vector<5x8xf32>
    %92 = vector.extract_strided_slice %90 {offsets = [0, 8], sizes = [5, 8], strides = [1, 1]} : vector<5x32xf32> to vector<5x8xf32>
    %93 = vector.extract_strided_slice %90 {offsets = [0, 16], sizes = [5, 8], strides = [1, 1]} : vector<5x32xf32> to vector<5x8xf32>
    %94 = vector.extract_strided_slice %90 {offsets = [0, 24], sizes = [5, 8], strides = [1, 1]} : vector<5x32xf32> to vector<5x8xf32>
    %95 = vector.shape_cast %86 : vector<5x8xf32> to vector<1x5x8xf32>
    %96 = vector.shape_cast %87 : vector<5x8xf32> to vector<1x5x8xf32>
    %97 = vector.shape_cast %88 : vector<5x8xf32> to vector<1x5x8xf32>
    %98 = vector.shape_cast %89 : vector<5x8xf32> to vector<1x5x8xf32>
    %99 = vector.shape_cast %91 : vector<5x8xf32> to vector<1x5x8xf32>
    %100 = vector.shape_cast %92 : vector<5x8xf32> to vector<1x5x8xf32>
    %101 = vector.shape_cast %93 : vector<5x8xf32> to vector<1x5x8xf32>
    %102 = vector.shape_cast %94 : vector<5x8xf32> to vector<1x5x8xf32>
    %103 = tpu.concatenate %95, %96, %97, %98, %99, %100, %101, %102 in 0 : vector<1x5x8xf32>, vector<1x5x8xf32>, vector<1x5x8xf32>, vector<1x5x8xf32>, vector<1x5x8xf32>, vector<1x5x8xf32>, vector<1x5x8xf32>, vector<1x5x8xf32> -> vector<8x5x8xf32>
    %104 = vector.extract_strided_slice %77 {offsets = [0, 0], sizes = [5, 32], strides = [1, 1]} : vector<10x32xf32> to vector<5x32xf32>
    %105 = vector.extract_strided_slice %104 {offsets = [0, 0], sizes = [5, 8], strides = [1, 1]} : vector<5x32xf32> to vector<5x8xf32>
    %106 = vector.extract_strided_slice %104 {offsets = [0, 8], sizes = [5, 8], strides = [1, 1]} : vector<5x32xf32> to vector<5x8xf32>
    %107 = vector.extract_strided_slice %104 {offsets = [0, 16], sizes = [5, 8], strides = [1, 1]} : vector<5x32xf32> to vector<5x8xf32>
    %108 = vector.extract_strided_slice %104 {offsets = [0, 24], sizes = [5, 8], strides = [1, 1]} : vector<5x32xf32> to vector<5x8xf32>
    %109 = vector.extract_strided_slice %77 {offsets = [5, 0], sizes = [5, 32], strides = [1, 1]} : vector<10x32xf32> to vector<5x32xf32>
    %110 = vector.extract_strided_slice %109 {offsets = [0, 0], sizes = [5, 8], strides = [1, 1]} : vector<5x32xf32> to vector<5x8xf32>
    %111 = vector.extract_strided_slice %109 {offsets = [0, 8], sizes = [5, 8], strides = [1, 1]} : vector<5x32xf32> to vector<5x8xf32>
    %112 = vector.extract_strided_slice %109 {offsets = [0, 16], sizes = [5, 8], strides = [1, 1]} : vector<5x32xf32> to vector<5x8xf32>
    %113 = vector.extract_strided_slice %109 {offsets = [0, 24], sizes = [5, 8], strides = [1, 1]} : vector<5x32xf32> to vector<5x8xf32>
    %114 = vector.shape_cast %105 : vector<5x8xf32> to vector<1x5x8xf32>
    %115 = vector.shape_cast %106 : vector<5x8xf32> to vector<1x5x8xf32>
    %116 = vector.shape_cast %107 : vector<5x8xf32> to vector<1x5x8xf32>
    %117 = vector.shape_cast %108 : vector<5x8xf32> to vector<1x5x8xf32>
    %118 = vector.shape_cast %110 : vector<5x8xf32> to vector<1x5x8xf32>
    %119 = vector.shape_cast %111 : vector<5x8xf32> to vector<1x5x8xf32>
    %120 = vector.shape_cast %112 : vector<5x8xf32> to vector<1x5x8xf32>
    %121 = vector.shape_cast %113 : vector<5x8xf32> to vector<1x5x8xf32>
    %122 = tpu.concatenate %114, %115, %116, %117, %118, %119, %120, %121 in 0 : vector<1x5x8xf32>, vector<1x5x8xf32>, vector<1x5x8xf32>, vector<1x5x8xf32>, vector<1x5x8xf32>, vector<1x5x8xf32>, vector<1x5x8xf32>, vector<1x5x8xf32> -> vector<8x5x8xf32>
    %123 = vector.extract_strided_slice %84 {offsets = [0, 0], sizes = [5, 32], strides = [1, 1]} : vector<10x32xf32> to vector<5x32xf32>
    %124 = vector.extract_strided_slice %123 {offsets = [0, 0], sizes = [5, 8], strides = [1, 1]} : vector<5x32xf32> to vector<5x8xf32>
    %125 = vector.extract_strided_slice %123 {offsets = [0, 8], sizes = [5, 8], strides = [1, 1]} : vector<5x32xf32> to vector<5x8xf32>
    %126 = vector.extract_strided_slice %123 {offsets = [0, 16], sizes = [5, 8], strides = [1, 1]} : vector<5x32xf32> to vector<5x8xf32>
    %127 = vector.extract_strided_slice %123 {offsets = [0, 24], sizes = [5, 8], strides = [1, 1]} : vector<5x32xf32> to vector<5x8xf32>
    %128 = vector.extract_strided_slice %84 {offsets = [5, 0], sizes = [5, 32], strides = [1, 1]} : vector<10x32xf32> to vector<5x32xf32>
    %129 = vector.extract_strided_slice %128 {offsets = [0, 0], sizes = [5, 8], strides = [1, 1]} : vector<5x32xf32> to vector<5x8xf32>
    %130 = vector.extract_strided_slice %128 {offsets = [0, 8], sizes = [5, 8], strides = [1, 1]} : vector<5x32xf32> to vector<5x8xf32>
    %131 = vector.extract_strided_slice %128 {offsets = [0, 16], sizes = [5, 8], strides = [1, 1]} : vector<5x32xf32> to vector<5x8xf32>
    %132 = vector.extract_strided_slice %128 {offsets = [0, 24], sizes = [5, 8], strides = [1, 1]} : vector<5x32xf32> to vector<5x8xf32>
    %133 = vector.shape_cast %124 : vector<5x8xf32> to vector<1x5x8xf32>
    %134 = vector.shape_cast %125 : vector<5x8xf32> to vector<1x5x8xf32>
    %135 = vector.shape_cast %126 : vector<5x8xf32> to vector<1x5x8xf32>
    %136 = vector.shape_cast %127 : vector<5x8xf32> to vector<1x5x8xf32>
    %137 = vector.shape_cast %129 : vector<5x8xf32> to vector<1x5x8xf32>
    %138 = vector.shape_cast %130 : vector<5x8xf32> to vector<1x5x8xf32>
    %139 = vector.shape_cast %131 : vector<5x8xf32> to vector<1x5x8xf32>
    %140 = vector.shape_cast %132 : vector<5x8xf32> to vector<1x5x8xf32>
    %141 = tpu.concatenate %133, %134, %135, %136, %137, %138, %139, %140 in 0 : vector<1x5x8xf32>, vector<1x5x8xf32>, vector<1x5x8xf32>, vector<1x5x8xf32>, vector<1x5x8xf32>, vector<1x5x8xf32>, vector<1x5x8xf32>, vector<1x5x8xf32> -> vector<8x5x8xf32>
    "tpu.trace_start"() <{level = 10 : i32, message = "ntd,nsd->nts"}> : () -> ()
    %cst_52 = arith.constant dense<0.000000e+00> : vector<8x5x5xf32>
    %142 = tpu.matmul %103, %122, %cst_52 {dimension_numbers = #tpu.dot_dimension_numbers<[2], [2], [1], [1], [0, 0, 0, 1, 1, 1], [0], [0]>} : vector<8x5x8xf32>, vector<8x5x8xf32>, vector<8x5x5xf32> -> vector<8x5x5xf32>
    "tpu.trace_stop"() : () -> ()
    %cst_53 = arith.constant 0.353553385 : f32
    %143 = vector.broadcast %cst_53 : f32 to vector<8x5x5xf32>
    %144 = arith.mulf %142, %143 : vector<8x5x5xf32>
    %cst_54 = arith.constant dense<0xFF800000> : vector<8x5xf32>
    %145 = vector.multi_reduction <maximumf>, %144, %cst_54 [2] : vector<8x5x5xf32> to vector<8x5xf32>
    %146 = vector.shape_cast %145 : vector<8x5xf32> to vector<8x5x1xf32>
    %147 = vector.broadcast %146 : vector<8x5x1xf32> to vector<8x5x5xf32>
    %148 = arith.subf %144, %147 : vector<8x5x5xf32>
    %149 = math.exp %148 : vector<8x5x5xf32>
    %cst_55 = arith.constant dense<0.000000e+00> : vector<8x5xf32>
    %150 = vector.multi_reduction <add>, %149, %cst_55 [2] : vector<8x5x5xf32> to vector<8x5xf32>
    %151 = vector.shape_cast %150 : vector<8x5xf32> to vector<8x5x1xf32>
    %152 = tpu.reciprocal %151 {approx = true} : vector<8x5x1xf32> -> vector<8x5x1xf32>
    %153 = vector.broadcast %152 : vector<8x5x1xf32> to vector<8x5x5xf32>
    %154 = arith.mulf %149, %153 : vector<8x5x5xf32>
    "tpu.trace_start"() <{level = 10 : i32, message = "nts,nsd->ntd"}> : () -> ()
    %cst_56 = arith.constant dense<0.000000e+00> : vector<8x5x8xf32>
    %155 = tpu.matmul %154, %141, %cst_56 {dimension_numbers = #tpu.dot_dimension_numbers<[2], [1], [1], [2], [0, 0, 0, 1, 1, 2], [0], [0]>} : vector<8x5x5xf32>, vector<8x5x8xf32>, vector<8x5x8xf32> -> vector<8x5x8xf32>
    "tpu.trace_stop"() : () -> ()
    %156 = vector.extract_strided_slice %155 {offsets = [0, 0, 0], sizes = [1, 5, 8], strides = [1, 1, 1]} : vector<8x5x8xf32> to vector<1x5x8xf32>
    %157 = vector.shape_cast %156 : vector<1x5x8xf32> to vector<5x8xf32>
    %158 = vector.extract_strided_slice %155 {offsets = [1, 0, 0], sizes = [1, 5, 8], strides = [1, 1, 1]} : vector<8x5x8xf32> to vector<1x5x8xf32>
    %159 = vector.shape_cast %158 : vector<1x5x8xf32> to vector<5x8xf32>
    %160 = vector.extract_strided_slice %155 {offsets = [2, 0, 0], sizes = [1, 5, 8], strides = [1, 1, 1]} : vector<8x5x8xf32> to vector<1x5x8xf32>
    %161 = vector.shape_cast %160 : vector<1x5x8xf32> to vector<5x8xf32>
    %162 = vector.extract_strided_slice %155 {offsets = [3, 0, 0], sizes = [1, 5, 8], strides = [1, 1, 1]} : vector<8x5x8xf32> to vector<1x5x8xf32>
    %163 = vector.shape_cast %162 : vector<1x5x8xf32> to vector<5x8xf32>
    %164 = tpu.concatenate %157, %159, %161, %163 in 1 : vector<5x8xf32>, vector<5x8xf32>, vector<5x8xf32>, vector<5x8xf32> -> vector<5x32xf32>
    %165 = vector.extract_strided_slice %155 {offsets = [4, 0, 0], sizes = [1, 5, 8], strides = [1, 1, 1]} : vector<8x5x8xf32> to vector<1x5x8xf32>
    %166 = vector.shape_cast %165 : vector<1x5x8xf32> to vector<5x8xf32>
    %167 = vector.extract_strided_slice %155 {offsets = [5, 0, 0], sizes = [1, 5, 8], strides = [1, 1, 1]} : vector<8x5x8xf32> to vector<1x5x8xf32>
    %168 = vector.shape_cast %167 : vector<1x5x8xf32> to vector<5x8xf32>
    %169 = vector.extract_strided_slice %155 {offsets = [6, 0, 0], sizes = [1, 5, 8], strides = [1, 1, 1]} : vector<8x5x8xf32> to vector<1x5x8xf32>
    %170 = vector.shape_cast %169 : vector<1x5x8xf32> to vector<5x8xf32>
    %171 = vector.extract_strided_slice %155 {offsets = [7, 0, 0], sizes = [1, 5, 8], strides = [1, 1, 1]} : vector<8x5x8xf32> to vector<1x5x8xf32>
    %172 = vector.shape_cast %171 : vector<1x5x8xf32> to vector<5x8xf32>
    %173 = tpu.concatenate %166, %168, %170, %172 in 1 : vector<5x8xf32>, vector<5x8xf32>, vector<5x8xf32>, vector<5x8xf32> -> vector<5x32xf32>
    %174 = tpu.concatenate %164, %173 in 0 : vector<5x32xf32>, vector<5x32xf32> -> vector<10x32xf32>
    %c0_57 = arith.constant 0 : index
    %c0_58 = arith.constant 0 : index
    %c0_59 = arith.constant 0 : index
    %175 = vector.load %arg14[%c0_57, %c0_58, %c0_59] : memref<2x32x32xf32, #tpu.memory_space<vmem>>, vector<1x32x32xf32>
    %176 = vector.shape_cast %175 : vector<1x32x32xf32> to vector<32x32xf32>
    %cst_60 = arith.constant dense<0.000000e+00> : vector<10x32xf32>
    %177 = tpu.matmul %174, %176, %cst_60 {dimension_numbers = #tpu.dot_dimension_numbers<[1], [0], [0], [1], [0, 0, 1, 1], [], []>} : vector<10x32xf32>, vector<32x32xf32>, vector<10x32xf32> -> vector<10x32xf32>
    %c0_61 = arith.constant 0 : index
    %c0_62 = arith.constant 0 : index
    %c0_63 = arith.constant 0 : index
    %178 = vector.load %arg15[%c0_61, %c0_62, %c0_63] : memref<2x1x32xf32, #tpu.memory_space<vmem>>, vector<1x1x32xf32>
    %179 = vector.shape_cast %178 : vector<1x1x32xf32> to vector<1x32xf32>
    %180 = vector.broadcast %179 : vector<1x32xf32> to vector<10x32xf32>
    %181 = arith.addf %177, %180 : vector<10x32xf32>
    %182 = arith.addf %37, %181 : vector<10x32xf32>
    %c0_64 = arith.constant 0 : index
    %c0_65 = arith.constant 0 : index
    %c0_66 = arith.constant 0 : index
    %183 = vector.load %arg16[%c0_64, %c0_65, %c0_66] : memref<2x1x32xf32, #tpu.memory_space<vmem>>, vector<1x1x32xf32>
    %184 = vector.shape_cast %183 : vector<1x1x32xf32> to vector<1x32xf32>
    %c0_67 = arith.constant 0 : index
    %c0_68 = arith.constant 0 : index
    %c0_69 = arith.constant 0 : index
    %185 = vector.load %arg17[%c0_67, %c0_68, %c0_69] : memref<2x1x32xf32, #tpu.memory_space<vmem>>, vector<1x1x32xf32>
    %186 = vector.shape_cast %185 : vector<1x1x32xf32> to vector<1x32xf32>
    %cst_70 = arith.constant dense<0.000000e+00> : vector<10xf32>
    %187 = vector.multi_reduction <add>, %182, %cst_70 [1] : vector<10x32xf32> to vector<10xf32>
    %188 = vector.shape_cast %187 : vector<10xf32> to vector<10x1xf32>
    %cst_71 = arith.constant 3.200000e+01 : f32
    %189 = vector.broadcast %cst_71 : f32 to vector<10x1xf32>
    %190 = arith.divf %188, %189 : vector<10x1xf32>
    %191 = vector.broadcast %190 : vector<10x1xf32> to vector<10x32xf32>
    %192 = arith.subf %182, %191 : vector<10x32xf32>
    %193 = arith.mulf %192, %192 : vector<10x32xf32>
    %cst_72 = arith.constant dense<0.000000e+00> : vector<10xf32>
    %194 = vector.multi_reduction <add>, %193, %cst_72 [1] : vector<10x32xf32> to vector<10xf32>
    %195 = vector.shape_cast %194 : vector<10xf32> to vector<10x1xf32>
    %cst_73 = arith.constant 3.200000e+01 : f32
    %196 = vector.broadcast %cst_73 : f32 to vector<10x1xf32>
    %197 = arith.divf %195, %196 : vector<10x1xf32>
    %198 = vector.broadcast %190 : vector<10x1xf32> to vector<10x32xf32>
    %199 = arith.subf %182, %198 : vector<10x32xf32>
    %cst_74 = arith.constant 9.99999974E-6 : f32
    %200 = vector.broadcast %cst_74 : f32 to vector<10x1xf32>
    %201 = arith.addf %197, %200 : vector<10x1xf32>
    %202 = math.rsqrt %201 : vector<10x1xf32>
    %203 = vector.broadcast %202 : vector<10x1xf32> to vector<10x32xf32>
    %204 = arith.mulf %199, %203 : vector<10x32xf32>
    %205 = vector.broadcast %184 : vector<1x32xf32> to vector<10x32xf32>
    %206 = arith.mulf %204, %205 : vector<10x32xf32>
    %207 = vector.broadcast %186 : vector<1x32xf32> to vector<10x32xf32>
    %208 = arith.addf %206, %207 : vector<10x32xf32>
    %c0_75 = arith.constant 0 : index
    %c0_76 = arith.constant 0 : index
    %c0_77 = arith.constant 0 : index
    %209 = vector.load %arg18[%c0_75, %c0_76, %c0_77] : memref<2x32x128xf32, #tpu.memory_space<vmem>>, vector<1x32x128xf32>
    %210 = vector.shape_cast %209 : vector<1x32x128xf32> to vector<32x128xf32>
    %cst_78 = arith.constant dense<0.000000e+00> : vector<10x128xf32>
    %211 = tpu.matmul %208, %210, %cst_78 {dimension_numbers = #tpu.dot_dimension_numbers<[1], [0], [0], [1], [0, 0, 1, 1], [], []>} : vector<10x32xf32>, vector<32x128xf32>, vector<10x128xf32> -> vector<10x128xf32>
    %c0_79 = arith.constant 0 : index
    %c0_80 = arith.constant 0 : index
    %c0_81 = arith.constant 0 : index
    %212 = vector.load %arg19[%c0_79, %c0_80, %c0_81] : memref<2x1x128xf32, #tpu.memory_space<vmem>>, vector<1x1x128xf32>
    %213 = vector.shape_cast %212 : vector<1x1x128xf32> to vector<1x128xf32>
    %214 = vector.broadcast %213 : vector<1x128xf32> to vector<10x128xf32>
    %215 = arith.addf %211, %214 : vector<10x128xf32>
    %cst_82 = arith.constant 1.702000e+00 : f32
    %216 = vector.broadcast %cst_82 : f32 to vector<10x128xf32>
    %217 = arith.mulf %216, %215 : vector<10x128xf32>
    %218 = arith.negf %217 : vector<10x128xf32>
    %219 = math.exp %218 : vector<10x128xf32>
    %cst_83 = arith.constant 1.000000e+00 : f32
    %220 = vector.broadcast %cst_83 : f32 to vector<10x128xf32>
    %221 = arith.addf %220, %219 : vector<10x128xf32>
    %222 = arith.divf %220, %221 : vector<10x128xf32>
    %223 = arith.mulf %215, %222 : vector<10x128xf32>
    %c0_84 = arith.constant 0 : index
    %c0_85 = arith.constant 0 : index
    %c0_86 = arith.constant 0 : index
    %224 = vector.load %arg20[%c0_84, %c0_85, %c0_86] : memref<2x128x32xf32, #tpu.memory_space<vmem>>, vector<1x128x32xf32>
    %225 = vector.shape_cast %224 : vector<1x128x32xf32> to vector<128x32xf32>
    %cst_87 = arith.constant dense<0.000000e+00> : vector<10x32xf32>
    %226 = tpu.matmul %223, %225, %cst_87 {dimension_numbers = #tpu.dot_dimension_numbers<[1], [0], [0], [1], [0, 0, 1, 1], [], []>} : vector<10x128xf32>, vector<128x32xf32>, vector<10x32xf32> -> vector<10x32xf32>
    %c0_88 = arith.constant 0 : index
    %c0_89 = arith.constant 0 : index
    %c0_90 = arith.constant 0 : index
    %227 = vector.load %arg21[%c0_88, %c0_89, %c0_90] : memref<2x1x32xf32, #tpu.memory_space<vmem>>, vector<1x1x32xf32>
    %228 = vector.shape_cast %227 : vector<1x1x32xf32> to vector<1x32xf32>
    %229 = vector.broadcast %228 : vector<1x32xf32> to vector<10x32xf32>
    %230 = arith.addf %226, %229 : vector<10x32xf32>
    %231 = arith.addf %182, %230 : vector<10x32xf32>
    %c1 = arith.constant 1 : index
    %c0_91 = arith.constant 0 : index
    %c0_92 = arith.constant 0 : index
    %232 = vector.load %arg6[%c1, %c0_91, %c0_92] : memref<2x1x32xf32, #tpu.memory_space<vmem>>, vector<1x1x32xf32>
    %233 = vector.shape_cast %232 : vector<1x1x32xf32> to vector<1x32xf32>
    %c1_93 = arith.constant 1 : index
    %c0_94 = arith.constant 0 : index
    %c0_95 = arith.constant 0 : index
    %234 = vector.load %arg7[%c1_93, %c0_94, %c0_95] : memref<2x1x32xf32, #tpu.memory_space<vmem>>, vector<1x1x32xf32>
    %235 = vector.shape_cast %234 : vector<1x1x32xf32> to vector<1x32xf32>
    %cst_96 = arith.constant dense<0.000000e+00> : vector<10xf32>
    %236 = vector.multi_reduction <add>, %231, %cst_96 [1] : vector<10x32xf32> to vector<10xf32>
    %237 = vector.shape_cast %236 : vector<10xf32> to vector<10x1xf32>
    %cst_97 = arith.constant 3.200000e+01 : f32
    %238 = vector.broadcast %cst_97 : f32 to vector<10x1xf32>
    %239 = arith.divf %237, %238 : vector<10x1xf32>
    %240 = vector.broadcast %239 : vector<10x1xf32> to vector<10x32xf32>
    %241 = arith.subf %231, %240 : vector<10x32xf32>
    %242 = arith.mulf %241, %241 : vector<10x32xf32>
    %cst_98 = arith.constant dense<0.000000e+00> : vector<10xf32>
    %243 = vector.multi_reduction <add>, %242, %cst_98 [1] : vector<10x32xf32> to vector<10xf32>
    %244 = vector.shape_cast %243 : vector<10xf32> to vector<10x1xf32>
    %cst_99 = arith.constant 3.200000e+01 : f32
    %245 = vector.broadcast %cst_99 : f32 to vector<10x1xf32>
    %246 = arith.divf %244, %245 : vector<10x1xf32>
    %247 = vector.broadcast %239 : vector<10x1xf32> to vector<10x32xf32>
    %248 = arith.subf %231, %247 : vector<10x32xf32>
    %cst_100 = arith.constant 9.99999974E-6 : f32
    %249 = vector.broadcast %cst_100 : f32 to vector<10x1xf32>
    %250 = arith.addf %246, %249 : vector<10x1xf32>
    %251 = math.rsqrt %250 : vector<10x1xf32>
    %252 = vector.broadcast %251 : vector<10x1xf32> to vector<10x32xf32>
    %253 = arith.mulf %248, %252 : vector<10x32xf32>
    %254 = vector.broadcast %233 : vector<1x32xf32> to vector<10x32xf32>
    %255 = arith.mulf %253, %254 : vector<10x32xf32>
    %256 = vector.broadcast %235 : vector<1x32xf32> to vector<10x32xf32>
    %257 = arith.addf %255, %256 : vector<10x32xf32>
    %c1_101 = arith.constant 1 : index
    %c0_102 = arith.constant 0 : index
    %c0_103 = arith.constant 0 : index
    %258 = vector.load %arg8[%c1_101, %c0_102, %c0_103] : memref<2x32x32xf32, #tpu.memory_space<vmem>>, vector<1x32x32xf32>
    %259 = vector.shape_cast %258 : vector<1x32x32xf32> to vector<32x32xf32>
    %cst_104 = arith.constant dense<0.000000e+00> : vector<10x32xf32>
    %260 = tpu.matmul %257, %259, %cst_104 {dimension_numbers = #tpu.dot_dimension_numbers<[1], [0], [0], [1], [0, 0, 1, 1], [], []>} : vector<10x32xf32>, vector<32x32xf32>, vector<10x32xf32> -> vector<10x32xf32>
    %c1_105 = arith.constant 1 : index
    %c0_106 = arith.constant 0 : index
    %c0_107 = arith.constant 0 : index
    %261 = vector.load %arg9[%c1_105, %c0_106, %c0_107] : memref<2x1x32xf32, #tpu.memory_space<vmem>>, vector<1x1x32xf32>
    %262 = vector.shape_cast %261 : vector<1x1x32xf32> to vector<1x32xf32>
    %263 = vector.broadcast %262 : vector<1x32xf32> to vector<10x32xf32>
    %264 = arith.addf %260, %263 : vector<10x32xf32>
    %c1_108 = arith.constant 1 : index
    %c0_109 = arith.constant 0 : index
    %c0_110 = arith.constant 0 : index
    %265 = vector.load %arg10[%c1_108, %c0_109, %c0_110] : memref<2x32x32xf32, #tpu.memory_space<vmem>>, vector<1x32x32xf32>
    %266 = vector.shape_cast %265 : vector<1x32x32xf32> to vector<32x32xf32>
    %cst_111 = arith.constant dense<0.000000e+00> : vector<10x32xf32>
    %267 = tpu.matmul %257, %266, %cst_111 {dimension_numbers = #tpu.dot_dimension_numbers<[1], [0], [0], [1], [0, 0, 1, 1], [], []>} : vector<10x32xf32>, vector<32x32xf32>, vector<10x32xf32> -> vector<10x32xf32>
    %c1_112 = arith.constant 1 : index
    %c0_113 = arith.constant 0 : index
    %c0_114 = arith.constant 0 : index
    %268 = vector.load %arg11[%c1_112, %c0_113, %c0_114] : memref<2x1x32xf32, #tpu.memory_space<vmem>>, vector<1x1x32xf32>
    %269 = vector.shape_cast %268 : vector<1x1x32xf32> to vector<1x32xf32>
    %270 = vector.broadcast %269 : vector<1x32xf32> to vector<10x32xf32>
    %271 = arith.addf %267, %270 : vector<10x32xf32>
    %c1_115 = arith.constant 1 : index
    %c0_116 = arith.constant 0 : index
    %c0_117 = arith.constant 0 : index
    %272 = vector.load %arg12[%c1_115, %c0_116, %c0_117] : memref<2x32x32xf32, #tpu.memory_space<vmem>>, vector<1x32x32xf32>
    %273 = vector.shape_cast %272 : vector<1x32x32xf32> to vector<32x32xf32>
    %cst_118 = arith.constant dense<0.000000e+00> : vector<10x32xf32>
    %274 = tpu.matmul %257, %273, %cst_118 {dimension_numbers = #tpu.dot_dimension_numbers<[1], [0], [0], [1], [0, 0, 1, 1], [], []>} : vector<10x32xf32>, vector<32x32xf32>, vector<10x32xf32> -> vector<10x32xf32>
    %c1_119 = arith.constant 1 : index
    %c0_120 = arith.constant 0 : index
    %c0_121 = arith.constant 0 : index
    %275 = vector.load %arg13[%c1_119, %c0_120, %c0_121] : memref<2x1x32xf32, #tpu.memory_space<vmem>>, vector<1x1x32xf32>
    %276 = vector.shape_cast %275 : vector<1x1x32xf32> to vector<1x32xf32>
    %277 = vector.broadcast %276 : vector<1x32xf32> to vector<10x32xf32>
    %278 = arith.addf %274, %277 : vector<10x32xf32>
    %279 = vector.extract_strided_slice %264 {offsets = [0, 0], sizes = [5, 32], strides = [1, 1]} : vector<10x32xf32> to vector<5x32xf32>
    %280 = vector.extract_strided_slice %279 {offsets = [0, 0], sizes = [5, 8], strides = [1, 1]} : vector<5x32xf32> to vector<5x8xf32>
    %281 = vector.extract_strided_slice %279 {offsets = [0, 8], sizes = [5, 8], strides = [1, 1]} : vector<5x32xf32> to vector<5x8xf32>
    %282 = vector.extract_strided_slice %279 {offsets = [0, 16], sizes = [5, 8], strides = [1, 1]} : vector<5x32xf32> to vector<5x8xf32>
    %283 = vector.extract_strided_slice %279 {offsets = [0, 24], sizes = [5, 8], strides = [1, 1]} : vector<5x32xf32> to vector<5x8xf32>
    %284 = vector.extract_strided_slice %264 {offsets = [5, 0], sizes = [5, 32], strides = [1, 1]} : vector<10x32xf32> to vector<5x32xf32>
    %285 = vector.extract_strided_slice %284 {offsets = [0, 0], sizes = [5, 8], strides = [1, 1]} : vector<5x32xf32> to vector<5x8xf32>
    %286 = vector.extract_strided_slice %284 {offsets = [0, 8], sizes = [5, 8], strides = [1, 1]} : vector<5x32xf32> to vector<5x8xf32>
    %287 = vector.extract_strided_slice %284 {offsets = [0, 16], sizes = [5, 8], strides = [1, 1]} : vector<5x32xf32> to vector<5x8xf32>
    %288 = vector.extract_strided_slice %284 {offsets = [0, 24], sizes = [5, 8], strides = [1, 1]} : vector<5x32xf32> to vector<5x8xf32>
    %289 = vector.shape_cast %280 : vector<5x8xf32> to vector<1x5x8xf32>
    %290 = vector.shape_cast %281 : vector<5x8xf32> to vector<1x5x8xf32>
    %291 = vector.shape_cast %282 : vector<5x8xf32> to vector<1x5x8xf32>
    %292 = vector.shape_cast %283 : vector<5x8xf32> to vector<1x5x8xf32>
    %293 = vector.shape_cast %285 : vector<5x8xf32> to vector<1x5x8xf32>
    %294 = vector.shape_cast %286 : vector<5x8xf32> to vector<1x5x8xf32>
    %295 = vector.shape_cast %287 : vector<5x8xf32> to vector<1x5x8xf32>
    %296 = vector.shape_cast %288 : vector<5x8xf32> to vector<1x5x8xf32>
    %297 = tpu.concatenate %289, %290, %291, %292, %293, %294, %295, %296 in 0 : vector<1x5x8xf32>, vector<1x5x8xf32>, vector<1x5x8xf32>, vector<1x5x8xf32>, vector<1x5x8xf32>, vector<1x5x8xf32>, vector<1x5x8xf32>, vector<1x5x8xf32> -> vector<8x5x8xf32>
    %298 = vector.extract_strided_slice %271 {offsets = [0, 0], sizes = [5, 32], strides = [1, 1]} : vector<10x32xf32> to vector<5x32xf32>
    %299 = vector.extract_strided_slice %298 {offsets = [0, 0], sizes = [5, 8], strides = [1, 1]} : vector<5x32xf32> to vector<5x8xf32>
    %300 = vector.extract_strided_slice %298 {offsets = [0, 8], sizes = [5, 8], strides = [1, 1]} : vector<5x32xf32> to vector<5x8xf32>
    %301 = vector.extract_strided_slice %298 {offsets = [0, 16], sizes = [5, 8], strides = [1, 1]} : vector<5x32xf32> to vector<5x8xf32>
    %302 = vector.extract_strided_slice %298 {offsets = [0, 24], sizes = [5, 8], strides = [1, 1]} : vector<5x32xf32> to vector<5x8xf32>
    %303 = vector.extract_strided_slice %271 {offsets = [5, 0], sizes = [5, 32], strides = [1, 1]} : vector<10x32xf32> to vector<5x32xf32>
    %304 = vector.extract_strided_slice %303 {offsets = [0, 0], sizes = [5, 8], strides = [1, 1]} : vector<5x32xf32> to vector<5x8xf32>
    %305 = vector.extract_strided_slice %303 {offsets = [0, 8], sizes = [5, 8], strides = [1, 1]} : vector<5x32xf32> to vector<5x8xf32>
    %306 = vector.extract_strided_slice %303 {offsets = [0, 16], sizes = [5, 8], strides = [1, 1]} : vector<5x32xf32> to vector<5x8xf32>
    %307 = vector.extract_strided_slice %303 {offsets = [0, 24], sizes = [5, 8], strides = [1, 1]} : vector<5x32xf32> to vector<5x8xf32>
    %308 = vector.shape_cast %299 : vector<5x8xf32> to vector<1x5x8xf32>
    %309 = vector.shape_cast %300 : vector<5x8xf32> to vector<1x5x8xf32>
    %310 = vector.shape_cast %301 : vector<5x8xf32> to vector<1x5x8xf32>
    %311 = vector.shape_cast %302 : vector<5x8xf32> to vector<1x5x8xf32>
    %312 = vector.shape_cast %304 : vector<5x8xf32> to vector<1x5x8xf32>
    %313 = vector.shape_cast %305 : vector<5x8xf32> to vector<1x5x8xf32>
    %314 = vector.shape_cast %306 : vector<5x8xf32> to vector<1x5x8xf32>
    %315 = vector.shape_cast %307 : vector<5x8xf32> to vector<1x5x8xf32>
    %316 = tpu.concatenate %308, %309, %310, %311, %312, %313, %314, %315 in 0 : vector<1x5x8xf32>, vector<1x5x8xf32>, vector<1x5x8xf32>, vector<1x5x8xf32>, vector<1x5x8xf32>, vector<1x5x8xf32>, vector<1x5x8xf32>, vector<1x5x8xf32> -> vector<8x5x8xf32>
    %317 = vector.extract_strided_slice %278 {offsets = [0, 0], sizes = [5, 32], strides = [1, 1]} : vector<10x32xf32> to vector<5x32xf32>
    %318 = vector.extract_strided_slice %317 {offsets = [0, 0], sizes = [5, 8], strides = [1, 1]} : vector<5x32xf32> to vector<5x8xf32>
    %319 = vector.extract_strided_slice %317 {offsets = [0, 8], sizes = [5, 8], strides = [1, 1]} : vector<5x32xf32> to vector<5x8xf32>
    %320 = vector.extract_strided_slice %317 {offsets = [0, 16], sizes = [5, 8], strides = [1, 1]} : vector<5x32xf32> to vector<5x8xf32>
    %321 = vector.extract_strided_slice %317 {offsets = [0, 24], sizes = [5, 8], strides = [1, 1]} : vector<5x32xf32> to vector<5x8xf32>
    %322 = vector.extract_strided_slice %278 {offsets = [5, 0], sizes = [5, 32], strides = [1, 1]} : vector<10x32xf32> to vector<5x32xf32>
    %323 = vector.extract_strided_slice %322 {offsets = [0, 0], sizes = [5, 8], strides = [1, 1]} : vector<5x32xf32> to vector<5x8xf32>
    %324 = vector.extract_strided_slice %322 {offsets = [0, 8], sizes = [5, 8], strides = [1, 1]} : vector<5x32xf32> to vector<5x8xf32>
    %325 = vector.extract_strided_slice %322 {offsets = [0, 16], sizes = [5, 8], strides = [1, 1]} : vector<5x32xf32> to vector<5x8xf32>
    %326 = vector.extract_strided_slice %322 {offsets = [0, 24], sizes = [5, 8], strides = [1, 1]} : vector<5x32xf32> to vector<5x8xf32>
    %327 = vector.shape_cast %318 : vector<5x8xf32> to vector<1x5x8xf32>
    %328 = vector.shape_cast %319 : vector<5x8xf32> to vector<1x5x8xf32>
    %329 = vector.shape_cast %320 : vector<5x8xf32> to vector<1x5x8xf32>
    %330 = vector.shape_cast %321 : vector<5x8xf32> to vector<1x5x8xf32>
    %331 = vector.shape_cast %323 : vector<5x8xf32> to vector<1x5x8xf32>
    %332 = vector.shape_cast %324 : vector<5x8xf32> to vector<1x5x8xf32>
    %333 = vector.shape_cast %325 : vector<5x8xf32> to vector<1x5x8xf32>
    %334 = vector.shape_cast %326 : vector<5x8xf32> to vector<1x5x8xf32>
    %335 = tpu.concatenate %327, %328, %329, %330, %331, %332, %333, %334 in 0 : vector<1x5x8xf32>, vector<1x5x8xf32>, vector<1x5x8xf32>, vector<1x5x8xf32>, vector<1x5x8xf32>, vector<1x5x8xf32>, vector<1x5x8xf32>, vector<1x5x8xf32> -> vector<8x5x8xf32>
    "tpu.trace_start"() <{level = 10 : i32, message = "ntd,nsd->nts"}> : () -> ()
    %cst_122 = arith.constant dense<0.000000e+00> : vector<8x5x5xf32>
    %336 = tpu.matmul %297, %316, %cst_122 {dimension_numbers = #tpu.dot_dimension_numbers<[2], [2], [1], [1], [0, 0, 0, 1, 1, 1], [0], [0]>} : vector<8x5x8xf32>, vector<8x5x8xf32>, vector<8x5x5xf32> -> vector<8x5x5xf32>
    "tpu.trace_stop"() : () -> ()
    %cst_123 = arith.constant 0.353553385 : f32
    %337 = vector.broadcast %cst_123 : f32 to vector<8x5x5xf32>
    %338 = arith.mulf %336, %337 : vector<8x5x5xf32>
    %cst_124 = arith.constant dense<0xFF800000> : vector<8x5xf32>
    %339 = vector.multi_reduction <maximumf>, %338, %cst_124 [2] : vector<8x5x5xf32> to vector<8x5xf32>
    %340 = vector.shape_cast %339 : vector<8x5xf32> to vector<8x5x1xf32>
    %341 = vector.broadcast %340 : vector<8x5x1xf32> to vector<8x5x5xf32>
    %342 = arith.subf %338, %341 : vector<8x5x5xf32>
    %343 = math.exp %342 : vector<8x5x5xf32>
    %cst_125 = arith.constant dense<0.000000e+00> : vector<8x5xf32>
    %344 = vector.multi_reduction <add>, %343, %cst_125 [2] : vector<8x5x5xf32> to vector<8x5xf32>
    %345 = vector.shape_cast %344 : vector<8x5xf32> to vector<8x5x1xf32>
    %346 = tpu.reciprocal %345 {approx = true} : vector<8x5x1xf32> -> vector<8x5x1xf32>
    %347 = vector.broadcast %346 : vector<8x5x1xf32> to vector<8x5x5xf32>
    %348 = arith.mulf %343, %347 : vector<8x5x5xf32>
    "tpu.trace_start"() <{level = 10 : i32, message = "nts,nsd->ntd"}> : () -> ()
    %cst_126 = arith.constant dense<0.000000e+00> : vector<8x5x8xf32>
    %349 = tpu.matmul %348, %335, %cst_126 {dimension_numbers = #tpu.dot_dimension_numbers<[2], [1], [1], [2], [0, 0, 0, 1, 1, 2], [0], [0]>} : vector<8x5x5xf32>, vector<8x5x8xf32>, vector<8x5x8xf32> -> vector<8x5x8xf32>
    "tpu.trace_stop"() : () -> ()
    %350 = vector.extract_strided_slice %349 {offsets = [0, 0, 0], sizes = [1, 5, 8], strides = [1, 1, 1]} : vector<8x5x8xf32> to vector<1x5x8xf32>
    %351 = vector.shape_cast %350 : vector<1x5x8xf32> to vector<5x8xf32>
    %352 = vector.extract_strided_slice %349 {offsets = [1, 0, 0], sizes = [1, 5, 8], strides = [1, 1, 1]} : vector<8x5x8xf32> to vector<1x5x8xf32>
    %353 = vector.shape_cast %352 : vector<1x5x8xf32> to vector<5x8xf32>
    %354 = vector.extract_strided_slice %349 {offsets = [2, 0, 0], sizes = [1, 5, 8], strides = [1, 1, 1]} : vector<8x5x8xf32> to vector<1x5x8xf32>
    %355 = vector.shape_cast %354 : vector<1x5x8xf32> to vector<5x8xf32>
    %356 = vector.extract_strided_slice %349 {offsets = [3, 0, 0], sizes = [1, 5, 8], strides = [1, 1, 1]} : vector<8x5x8xf32> to vector<1x5x8xf32>
    %357 = vector.shape_cast %356 : vector<1x5x8xf32> to vector<5x8xf32>
    %358 = tpu.concatenate %351, %353, %355, %357 in 1 : vector<5x8xf32>, vector<5x8xf32>, vector<5x8xf32>, vector<5x8xf32> -> vector<5x32xf32>
    %359 = vector.extract_strided_slice %349 {offsets = [4, 0, 0], sizes = [1, 5, 8], strides = [1, 1, 1]} : vector<8x5x8xf32> to vector<1x5x8xf32>
    %360 = vector.shape_cast %359 : vector<1x5x8xf32> to vector<5x8xf32>
    %361 = vector.extract_strided_slice %349 {offsets = [5, 0, 0], sizes = [1, 5, 8], strides = [1, 1, 1]} : vector<8x5x8xf32> to vector<1x5x8xf32>
    %362 = vector.shape_cast %361 : vector<1x5x8xf32> to vector<5x8xf32>
    %363 = vector.extract_strided_slice %349 {offsets = [6, 0, 0], sizes = [1, 5, 8], strides = [1, 1, 1]} : vector<8x5x8xf32> to vector<1x5x8xf32>
    %364 = vector.shape_cast %363 : vector<1x5x8xf32> to vector<5x8xf32>
    %365 = vector.extract_strided_slice %349 {offsets = [7, 0, 0], sizes = [1, 5, 8], strides = [1, 1, 1]} : vector<8x5x8xf32> to vector<1x5x8xf32>
    %366 = vector.shape_cast %365 : vector<1x5x8xf32> to vector<5x8xf32>
    %367 = tpu.concatenate %360, %362, %364, %366 in 1 : vector<5x8xf32>, vector<5x8xf32>, vector<5x8xf32>, vector<5x8xf32> -> vector<5x32xf32>
    %368 = tpu.concatenate %358, %367 in 0 : vector<5x32xf32>, vector<5x32xf32> -> vector<10x32xf32>
    %c1_127 = arith.constant 1 : index
    %c0_128 = arith.constant 0 : index
    %c0_129 = arith.constant 0 : index
    %369 = vector.load %arg14[%c1_127, %c0_128, %c0_129] : memref<2x32x32xf32, #tpu.memory_space<vmem>>, vector<1x32x32xf32>
    %370 = vector.shape_cast %369 : vector<1x32x32xf32> to vector<32x32xf32>
    %cst_130 = arith.constant dense<0.000000e+00> : vector<10x32xf32>
    %371 = tpu.matmul %368, %370, %cst_130 {dimension_numbers = #tpu.dot_dimension_numbers<[1], [0], [0], [1], [0, 0, 1, 1], [], []>} : vector<10x32xf32>, vector<32x32xf32>, vector<10x32xf32> -> vector<10x32xf32>
    %c1_131 = arith.constant 1 : index
    %c0_132 = arith.constant 0 : index
    %c0_133 = arith.constant 0 : index
    %372 = vector.load %arg15[%c1_131, %c0_132, %c0_133] : memref<2x1x32xf32, #tpu.memory_space<vmem>>, vector<1x1x32xf32>
    %373 = vector.shape_cast %372 : vector<1x1x32xf32> to vector<1x32xf32>
    %374 = vector.broadcast %373 : vector<1x32xf32> to vector<10x32xf32>
    %375 = arith.addf %371, %374 : vector<10x32xf32>
    %376 = arith.addf %231, %375 : vector<10x32xf32>
    %c1_134 = arith.constant 1 : index
    %c0_135 = arith.constant 0 : index
    %c0_136 = arith.constant 0 : index
    %377 = vector.load %arg16[%c1_134, %c0_135, %c0_136] : memref<2x1x32xf32, #tpu.memory_space<vmem>>, vector<1x1x32xf32>
    %378 = vector.shape_cast %377 : vector<1x1x32xf32> to vector<1x32xf32>
    %c1_137 = arith.constant 1 : index
    %c0_138 = arith.constant 0 : index
    %c0_139 = arith.constant 0 : index
    %379 = vector.load %arg17[%c1_137, %c0_138, %c0_139] : memref<2x1x32xf32, #tpu.memory_space<vmem>>, vector<1x1x32xf32>
    %380 = vector.shape_cast %379 : vector<1x1x32xf32> to vector<1x32xf32>
    %cst_140 = arith.constant dense<0.000000e+00> : vector<10xf32>
    %381 = vector.multi_reduction <add>, %376, %cst_140 [1] : vector<10x32xf32> to vector<10xf32>
    %382 = vector.shape_cast %381 : vector<10xf32> to vector<10x1xf32>
    %cst_141 = arith.constant 3.200000e+01 : f32
    %383 = vector.broadcast %cst_141 : f32 to vector<10x1xf32>
    %384 = arith.divf %382, %383 : vector<10x1xf32>
    %385 = vector.broadcast %384 : vector<10x1xf32> to vector<10x32xf32>
    %386 = arith.subf %376, %385 : vector<10x32xf32>
    %387 = arith.mulf %386, %386 : vector<10x32xf32>
    %cst_142 = arith.constant dense<0.000000e+00> : vector<10xf32>
    %388 = vector.multi_reduction <add>, %387, %cst_142 [1] : vector<10x32xf32> to vector<10xf32>
    %389 = vector.shape_cast %388 : vector<10xf32> to vector<10x1xf32>
    %cst_143 = arith.constant 3.200000e+01 : f32
    %390 = vector.broadcast %cst_143 : f32 to vector<10x1xf32>
    %391 = arith.divf %389, %390 : vector<10x1xf32>
    %392 = vector.broadcast %384 : vector<10x1xf32> to vector<10x32xf32>
    %393 = arith.subf %376, %392 : vector<10x32xf32>
    %cst_144 = arith.constant 9.99999974E-6 : f32
    %394 = vector.broadcast %cst_144 : f32 to vector<10x1xf32>
    %395 = arith.addf %391, %394 : vector<10x1xf32>
    %396 = math.rsqrt %395 : vector<10x1xf32>
    %397 = vector.broadcast %396 : vector<10x1xf32> to vector<10x32xf32>
    %398 = arith.mulf %393, %397 : vector<10x32xf32>
    %399 = vector.broadcast %378 : vector<1x32xf32> to vector<10x32xf32>
    %400 = arith.mulf %398, %399 : vector<10x32xf32>
    %401 = vector.broadcast %380 : vector<1x32xf32> to vector<10x32xf32>
    %402 = arith.addf %400, %401 : vector<10x32xf32>
    %c1_145 = arith.constant 1 : index
    %c0_146 = arith.constant 0 : index
    %c0_147 = arith.constant 0 : index
    %403 = vector.load %arg18[%c1_145, %c0_146, %c0_147] : memref<2x32x128xf32, #tpu.memory_space<vmem>>, vector<1x32x128xf32>
    %404 = vector.shape_cast %403 : vector<1x32x128xf32> to vector<32x128xf32>
    %cst_148 = arith.constant dense<0.000000e+00> : vector<10x128xf32>
    %405 = tpu.matmul %402, %404, %cst_148 {dimension_numbers = #tpu.dot_dimension_numbers<[1], [0], [0], [1], [0, 0, 1, 1], [], []>} : vector<10x32xf32>, vector<32x128xf32>, vector<10x128xf32> -> vector<10x128xf32>
    %c1_149 = arith.constant 1 : index
    %c0_150 = arith.constant 0 : index
    %c0_151 = arith.constant 0 : index
    %406 = vector.load %arg19[%c1_149, %c0_150, %c0_151] : memref<2x1x128xf32, #tpu.memory_space<vmem>>, vector<1x1x128xf32>
    %407 = vector.shape_cast %406 : vector<1x1x128xf32> to vector<1x128xf32>
    %408 = vector.broadcast %407 : vector<1x128xf32> to vector<10x128xf32>
    %409 = arith.addf %405, %408 : vector<10x128xf32>
    %cst_152 = arith.constant 1.702000e+00 : f32
    %410 = vector.broadcast %cst_152 : f32 to vector<10x128xf32>
    %411 = arith.mulf %410, %409 : vector<10x128xf32>
    %412 = arith.negf %411 : vector<10x128xf32>
    %413 = math.exp %412 : vector<10x128xf32>
    %cst_153 = arith.constant 1.000000e+00 : f32
    %414 = vector.broadcast %cst_153 : f32 to vector<10x128xf32>
    %415 = arith.addf %414, %413 : vector<10x128xf32>
    %416 = arith.divf %414, %415 : vector<10x128xf32>
    %417 = arith.mulf %409, %416 : vector<10x128xf32>
    %c1_154 = arith.constant 1 : index
    %c0_155 = arith.constant 0 : index
    %c0_156 = arith.constant 0 : index
    %418 = vector.load %arg20[%c1_154, %c0_155, %c0_156] : memref<2x128x32xf32, #tpu.memory_space<vmem>>, vector<1x128x32xf32>
    %419 = vector.shape_cast %418 : vector<1x128x32xf32> to vector<128x32xf32>
    %cst_157 = arith.constant dense<0.000000e+00> : vector<10x32xf32>
    %420 = tpu.matmul %417, %419, %cst_157 {dimension_numbers = #tpu.dot_dimension_numbers<[1], [0], [0], [1], [0, 0, 1, 1], [], []>} : vector<10x128xf32>, vector<128x32xf32>, vector<10x32xf32> -> vector<10x32xf32>
    %c1_158 = arith.constant 1 : index
    %c0_159 = arith.constant 0 : index
    %c0_160 = arith.constant 0 : index
    %421 = vector.load %arg21[%c1_158, %c0_159, %c0_160] : memref<2x1x32xf32, #tpu.memory_space<vmem>>, vector<1x1x32xf32>
    %422 = vector.shape_cast %421 : vector<1x1x32xf32> to vector<1x32xf32>
    %423 = vector.broadcast %422 : vector<1x32xf32> to vector<10x32xf32>
    %424 = arith.addf %420, %423 : vector<10x32xf32>
    %425 = arith.addf %376, %424 : vector<10x32xf32>
    %426 = vector.extract_strided_slice %425 {offsets = [0, 0], sizes = [1, 32], strides = [1, 1]} : vector<10x32xf32> to vector<1x32xf32>
    %427 = vector.extract_strided_slice %425 {offsets = [5, 0], sizes = [1, 32], strides = [1, 1]} : vector<10x32xf32> to vector<1x32xf32>
    %428 = tpu.concatenate %426, %427 in 0 : vector<1x32xf32>, vector<1x32xf32> -> vector<2x32xf32>
    %c0_161 = arith.constant 0 : index
    %c0_162 = arith.constant 0 : index
    %429 = vector.load %arg22[%c0_161, %c0_162] : memref<32x16xf32, #tpu.memory_space<vmem>>, vector<32x16xf32>
    %cst_163 = arith.constant dense<0.000000e+00> : vector<2x16xf32>
    %430 = tpu.matmul %428, %429, %cst_163 {dimension_numbers = #tpu.dot_dimension_numbers<[1], [0], [0], [1], [0, 0, 1, 1], [], []>} : vector<2x32xf32>, vector<32x16xf32>, vector<2x16xf32> -> vector<2x16xf32>
    %c0_164 = arith.constant 0 : index
    %c0_165 = arith.constant 0 : index
    %431 = vector.load %arg23[%c0_164, %c0_165] : memref<1x16xf32, #tpu.memory_space<vmem>>, vector<1x16xf32>
    %432 = vector.broadcast %431 : vector<1x16xf32> to vector<2x16xf32>
    %433 = arith.addf %430, %432 : vector<2x16xf32>
    %c0_166 = arith.constant 0 : index
    %c0_167 = arith.constant 0 : index
    %434 = vector.load %arg24[%c0_166, %c0_167] : memref<2x16xf32, #tpu.memory_space<vmem>>, vector<2x16xf32>
    tpu.vector_store %arg24[%c0_166, %c0_167], %433 {strides = array<i32>} : memref<2x16xf32, #tpu.memory_space<vmem>>, vector<2x16xf32>,
    return
  }
}

</mosaic_0001>

<llo_original>
// kernel: image_prefix_captioner_forward.1
$region0: #{image_prefix_captioner_forward.1}
  #allocation0 [shape = 'u32[]', space=smem, size = 0x4, offset = 0x4, fixed_abs, tag = 'smem constant byte address 0x4 - core index']
  #allocation1 [shape = 'u32[144,128]{1,0:T(1,128)}', space=vmem, size = 0x12000, scoped, tag = 'internal scratch']
  %s0 = inlined_call_operand.vmem [shape: f32[8,192], index: 0, kind: input, shape index: {}]
  %s1 = inlined_call_operand.vmem [shape: f32[192,32], index: 1, kind: input, shape index: {}]
  %s2 = inlined_call_operand.vmem [shape: f32[1,32], index: 2, kind: input, shape index: {}]
  %s3 = inlined_call_operand.vmem [shape: f32[5,32], index: 3, kind: input, shape index: {}]
  %s4 = inlined_call_operand.vmem [shape: f32[1,32], index: 4, kind: input, shape index: {}]
  %s5 = inlined_call_operand.vmem [shape: f32[1,32], index: 5, kind: input, shape index: {}]
  %s6 = inlined_call_operand.vmem [shape: f32[2,1,32], index: 6, kind: input, shape index: {}]
  %s7 = inlined_call_operand.vmem [shape: f32[2,1,32], index: 7, kind: input, shape index: {}]
  %s8 = inlined_call_operand.vmem [shape: f32[2,32,32], index: 8, kind: input, shape index: {}]
  %s9 = inlined_call_operand.vmem [shape: f32[2,1,32], index: 9, kind: input, shape index: {}]
  %s10 = inlined_call_operand.vmem [shape: f32[2,32,32], index: 10, kind: input, shape index: {}]
  %s11 = inlined_call_operand.vmem [shape: f32[2,1,32], index: 11, kind: input, shape index: {}]
  %s12 = inlined_call_operand.vmem [shape: f32[2,32,32], index: 12, kind: input, shape index: {}]
  %s13 = inlined_call_operand.vmem [shape: f32[2,1,32], index: 13, kind: input, shape index: {}]
  %s14 = inlined_call_operand.vmem [shape: f32[2,32,32], index: 14, kind: input, shape index: {}]
  %s15 = inlined_call_operand.vmem [shape: f32[2,1,32], index: 15, kind: input, shape index: {}]
  %s16 = inlined_call_operand.vmem [shape: f32[2,1,32], index: 16, kind: input, shape index: {}]
  %s17 = inlined_call_operand.vmem [shape: f32[2,1,32], index: 17, kind: input, shape index: {}]
  %s18 = inlined_call_operand.vmem [shape: f32[2,32,128], index: 18, kind: input, shape index: {}]
  %s19 = inlined_call_operand.vmem [shape: f32[2,1,128], index: 19, kind: input, shape index: {}]
  %s20 = inlined_call_operand.vmem [shape: f32[2,128,32], index: 20, kind: input, shape index: {}]
  %s21 = inlined_call_operand.vmem [shape: f32[2,1,32], index: 21, kind: input, shape index: {}]
  %s22 = inlined_call_operand.vmem [shape: f32[32,16], index: 22, kind: input, shape index: {}]
  %s23 = inlined_call_operand.vmem [shape: f32[1,16], index: 23, kind: input, shape index: {}]
  %s24 = inlined_call_operand.hbm [shape: f32[2,16], index: 24, kind: output, shape index: {}]
  %s25 = sld [smem:[#allocation0]]
  $region106: #{image_prefix_captioner_forward.1} parent=0
    _
  %s27 = ssub.s32 1, %s25
  %s28 = scalar_select 0, %s27, %s25
  $region1: #{image_prefix_captioner_forward.1} parent=0
    #allocation2 [shape = 'u8[1024]{0}', space=vmem, size = 0x400, scoped, tag = 'output window, operand 0, single buffered']
    #allocation3 [shape = 's32[1]{0}', space=sflag, size = 0x4, scoped, tag = 'scoped memory for image_prefix_captioner_forward.1']
    %29 = vsyncpa [#allocation3], 0
    // Predicated region
    $region2: #{image_prefix_captioner_forward.1} parent=1 // pred_check
      _
    $region3: #{image_prefix_captioner_forward.1} parent=1 // pred_check_branch
      %31 = sbr.rel (0) target = $region5
    $region4: #{image_prefix_captioner_forward.1} parent=1 // pred_region
      _
    $region5: #{image_prefix_captioner_forward.1} parent=1 // pred_fallthru
      _
    // Predicated region
    $region6: #{image_prefix_captioner_forward.1} parent=1 // pred_check
      _
    $region7: #{image_prefix_captioner_forward.1} parent=1 // pred_check_branch
      %33 = sbr.rel (0) target = $region9
    $region8: #{image_prefix_captioner_forward.1} parent=1 // pred_region
      _
    $region9: #{image_prefix_captioner_forward.1} parent=1 // pred_fallthru
      _
    // Predicated region
    $region10: #{image_prefix_captioner_forward.1} parent=1 // pred_check
      _
    $region11: #{image_prefix_captioner_forward.1} parent=1 // pred_check_branch
      %35 = sbr.rel (0) target = $region13
    $region12: #{image_prefix_captioner_forward.1} parent=1 // pred_region
      _
    $region13: #{image_prefix_captioner_forward.1} parent=1 // pred_fallthru
      _
    // Predicated region
    $region14: #{image_prefix_captioner_forward.1} parent=1 // pred_check
      _
    $region15: #{image_prefix_captioner_forward.1} parent=1 // pred_check_branch
      %37 = sbr.rel (0) target = $region17
    $region16: #{image_prefix_captioner_forward.1} parent=1 // pred_region
      _
    $region17: #{image_prefix_captioner_forward.1} parent=1 // pred_fallthru
      _
    // Predicated region
    $region18: #{image_prefix_captioner_forward.1} parent=1 // pred_check
      _
    $region19: #{image_prefix_captioner_forward.1} parent=1 // pred_check_branch
      %39 = sbr.rel (0) target = $region21
    $region20: #{image_prefix_captioner_forward.1} parent=1 // pred_region
      _
    $region21: #{image_prefix_captioner_forward.1} parent=1 // pred_fallthru
      _
    // Predicated region
    $region22: #{image_prefix_captioner_forward.1} parent=1 // pred_check
      _
    $region23: #{image_prefix_captioner_forward.1} parent=1 // pred_check_branch
      %41 = sbr.rel (0) target = $region25
    $region24: #{image_prefix_captioner_forward.1} parent=1 // pred_region
      _
    $region25: #{image_prefix_captioner_forward.1} parent=1 // pred_fallthru
      _
    // Predicated region
    $region26: #{image_prefix_captioner_forward.1} parent=1 // pred_check
      _
    $region27: #{image_prefix_captioner_forward.1} parent=1 // pred_check_branch
      %43 = sbr.rel (0) target = $region29
    $region28: #{image_prefix_captioner_forward.1} parent=1 // pred_region
      _
    $region29: #{image_prefix_captioner_forward.1} parent=1 // pred_fallthru
      _
    // Predicated region
    $region30: #{image_prefix_captioner_forward.1} parent=1 // pred_check
      _
    $region31: #{image_prefix_captioner_forward.1} parent=1 // pred_check_branch
      %45 = sbr.rel (0) target = $region33
    $region32: #{image_prefix_captioner_forward.1} parent=1 // pred_region
      _
    $region33: #{image_prefix_captioner_forward.1} parent=1 // pred_fallthru
      _
    // Predicated region
    $region34: #{image_prefix_captioner_forward.1} parent=1 // pred_check
      _
    $region35: #{image_prefix_captioner_forward.1} parent=1 // pred_check_branch
      %47 = sbr.rel (0) target = $region37
    $region36: #{image_prefix_captioner_forward.1} parent=1 // pred_region
      _
    $region37: #{image_prefix_captioner_forward.1} parent=1 // pred_fallthru
      _
    // Predicated region
    $region38: #{image_prefix_captioner_forward.1} parent=1 // pred_check
      _
    $region39: #{image_prefix_captioner_forward.1} parent=1 // pred_check_branch
      %49 = sbr.rel (0) target = $region41
    $region40: #{image_prefix_captioner_forward.1} parent=1 // pred_region
      _
    $region41: #{image_prefix_captioner_forward.1} parent=1 // pred_fallthru
      _
    // Predicated region
    $region42: #{image_prefix_captioner_forward.1} parent=1 // pred_check
      _
    $region43: #{image_prefix_captioner_forward.1} parent=1 // pred_check_branch
      %51 = sbr.rel (0) target = $region45
    $region44: #{image_prefix_captioner_forward.1} parent=1 // pred_region
      _
    $region45: #{image_prefix_captioner_forward.1} parent=1 // pred_fallthru
      _
    // Predicated region
    $region46: #{image_prefix_captioner_forward.1} parent=1 // pred_check
      _
    $region47: #{image_prefix_captioner_forward.1} parent=1 // pred_check_branch
      %53 = sbr.rel (0) target = $region49
    $region48: #{image_prefix_captioner_forward.1} parent=1 // pred_region
      _
    $region49: #{image_prefix_captioner_forward.1} parent=1 // pred_fallthru
      _
    // Predicated region
    $region50: #{image_prefix_captioner_forward.1} parent=1 // pred_check
      _
    $region51: #{image_prefix_captioner_forward.1} parent=1 // pred_check_branch
      %55 = sbr.rel (0) target = $region53
    $region52: #{image_prefix_captioner_forward.1} parent=1 // pred_region
      _
    $region53: #{image_prefix_captioner_forward.1} parent=1 // pred_fallthru
      _
    // Predicated region
    $region54: #{image_prefix_captioner_forward.1} parent=1 // pred_check
      _
    $region55: #{image_prefix_captioner_forward.1} parent=1 // pred_check_branch
      %57 = sbr.rel (0) target = $region57
    $region56: #{image_prefix_captioner_forward.1} parent=1 // pred_region
      _
    $region57: #{image_prefix_captioner_forward.1} parent=1 // pred_fallthru
      _
    // Predicated region
    $region58: #{image_prefix_captioner_forward.1} parent=1 // pred_check
      _
    $region59: #{image_prefix_captioner_forward.1} parent=1 // pred_check_branch
      %59 = sbr.rel (0) target = $region61
    $region60: #{image_prefix_captioner_forward.1} parent=1 // pred_region
      _
    $region61: #{image_prefix_captioner_forward.1} parent=1 // pred_fallthru
      _
    // Predicated region
    $region62: #{image_prefix_captioner_forward.1} parent=1 // pred_check
      _
    $region63: #{image_prefix_captioner_forward.1} parent=1 // pred_check_branch
      %61 = sbr.rel (0) target = $region65
    $region64: #{image_prefix_captioner_forward.1} parent=1 // pred_region
      _
    $region65: #{image_prefix_captioner_forward.1} parent=1 // pred_fallthru
      _
    // Predicated region
    $region66: #{image_prefix_captioner_forward.1} parent=1 // pred_check
      _
    $region67: #{image_prefix_captioner_forward.1} parent=1 // pred_check_branch
      %63 = sbr.rel (0) target = $region69
    $region68: #{image_prefix_captioner_forward.1} parent=1 // pred_region
      _
    $region69: #{image_prefix_captioner_forward.1} parent=1 // pred_fallthru
      _
    // Predicated region
    $region70: #{image_prefix_captioner_forward.1} parent=1 // pred_check
      _
    $region71: #{image_prefix_captioner_forward.1} parent=1 // pred_check_branch
      %65 = sbr.rel (0) target = $region73
    $region72: #{image_prefix_captioner_forward.1} parent=1 // pred_region
      _
    $region73: #{image_prefix_captioner_forward.1} parent=1 // pred_fallthru
      _
    // Predicated region
    $region74: #{image_prefix_captioner_forward.1} parent=1 // pred_check
      _
    $region75: #{image_prefix_captioner_forward.1} parent=1 // pred_check_branch
      %67 = sbr.rel (0) target = $region77
    $region76: #{image_prefix_captioner_forward.1} parent=1 // pred_region
      _
    $region77: #{image_prefix_captioner_forward.1} parent=1 // pred_fallthru
      _
    // Predicated region
    $region78: #{image_prefix_captioner_forward.1} parent=1 // pred_check
      _
    $region79: #{image_prefix_captioner_forward.1} parent=1 // pred_check_branch
      %69 = sbr.rel (0) target = $region81
    $region80: #{image_prefix_captioner_forward.1} parent=1 // pred_region
      _
    $region81: #{image_prefix_captioner_forward.1} parent=1 // pred_fallthru
      _
    // Predicated region
    $region82: #{image_prefix_captioner_forward.1} parent=1 // pred_check
      _
    $region83: #{image_prefix_captioner_forward.1} parent=1 // pred_check_branch
      %71 = sbr.rel (0) target = $region85
    $region84: #{image_prefix_captioner_forward.1} parent=1 // pred_region
      _
    $region85: #{image_prefix_captioner_forward.1} parent=1 // pred_fallthru
      _
    // Predicated region
    $region86: #{image_prefix_captioner_forward.1} parent=1 // pred_check
      _
    $region87: #{image_prefix_captioner_forward.1} parent=1 // pred_check_branch
      %73 = sbr.rel (0) target = $region89
    $region88: #{image_prefix_captioner_forward.1} parent=1 // pred_region
      _
    $region89: #{image_prefix_captioner_forward.1} parent=1 // pred_fallthru
      _
    // Predicated region
    $region90: #{image_prefix_captioner_forward.1} parent=1 // pred_check
      _
    $region91: #{image_prefix_captioner_forward.1} parent=1 // pred_check_branch
      %75 = sbr.rel (0) target = $region93
    $region92: #{image_prefix_captioner_forward.1} parent=1 // pred_region
      _
    $region93: #{image_prefix_captioner_forward.1} parent=1 // pred_fallthru
      _
    // Predicated region
    $region94: #{image_prefix_captioner_forward.1} parent=1 // pred_check
      _
    $region95: #{image_prefix_captioner_forward.1} parent=1 // pred_check_branch
      %77 = sbr.rel (0) target = $region97
    $region96: #{image_prefix_captioner_forward.1} parent=1 // pred_region
      _
    $region97: #{image_prefix_captioner_forward.1} parent=1 // pred_fallthru
      _
    %v78 = vld [vmem:[%s0] sm:$0xff]
    %v79 = vld [vmem:[%s0 + $0x8] sm:$0xff]
    %v80 = vld [vmem:[%s1] sm:$0xff]
    %v81 = vld [vmem:[%s1 + $0x8] sm:$0xff]
    %v82 = vld [vmem:[%s1 + $0x10] sm:$0xff]
    %v83 = vld [vmem:[%s1 + $0x18] sm:$0xff]
    %v84 = vld [vmem:[%s1 + $0x20] sm:$0xff]
    %v85 = vld [vmem:[%s1 + $0x28] sm:$0xff]
    %v86 = vld [vmem:[%s1 + $0x30] sm:$0xff]
    %v87 = vld [vmem:[%s1 + $0x38] sm:$0xff]
    %v88 = vld [vmem:[%s1 + $0x40] sm:$0xff]
    %v89 = vld [vmem:[%s1 + $0x48] sm:$0xff]
    %v90 = vld [vmem:[%s1 + $0x50] sm:$0xff]
    %v91 = vld [vmem:[%s1 + $0x58] sm:$0xff]
    %v92 = vld [vmem:[%s1 + $0x60] sm:$0xff]
    %v93 = vld [vmem:[%s1 + $0x68] sm:$0xff]
    %v94 = vld [vmem:[%s1 + $0x70] sm:$0xff]
    %v95 = vld [vmem:[%s1 + $0x78] sm:$0xff]
    %v96 = vld [vmem:[%s1 + $0x80] sm:$0xff]
    %v97 = vld [vmem:[%s1 + $0x88] sm:$0xff]
    %v98 = vld [vmem:[%s1 + $0x90] sm:$0xff]
    %v99 = vld [vmem:[%s1 + $0x98] sm:$0xff]
    %v100 = vld [vmem:[%s1 + $0xa0] sm:$0xff]
    %v101 = vld [vmem:[%s1 + $0xa8] sm:$0xff]
    %v102 = vld [vmem:[%s1 + $0xb0] sm:$0xff]
    %v103 = vld [vmem:[%s1 + $0xb8] sm:$0xff]
    %vm104 = vcmask 523264
    %v106 = vsel %vm104, %v79, 0
    %108 = vmatprep.subr.mxu0 0.0
    %109 = vmatpush1.msra.mxu0 %v80
    %110 = vmatprep.subr.mxu0 0.0
    %111 = vmatpush1.msra.mxu0 %v81
    %112 = vmatprep.subr.mxu0 0.0
    %113 = vmatpush1.msra.mxu0 %v82
    %114 = vmatprep.subr.mxu0 0.0
    %115 = vmatpush1.msra.mxu0 %v83
    %116 = vmatprep.subr.mxu0 0.0
    %117 = vmatpush1.msra.mxu0 %v84
    %118 = vmatprep.subr.mxu0 0.0
    %119 = vmatpush1.msra.mxu0 %v85
    %120 = vmatprep.subr.mxu0 0.0
    %121 = vmatpush1.msra.mxu0 %v86
    %122 = vmatprep.subr.mxu0 0.0
    %123 = vmatpush1.msra.mxu0 %v87
    %124 = vmatprep.subr.mxu0 0.0
    %125 = vmatpush1.msra.mxu0 %v88
    %126 = vmatprep.subr.mxu0 0.0
    %127 = vmatpush1.msra.mxu0 %v89
    %128 = vmatprep.subr.mxu0 0.0
    %129 = vmatpush1.msra.mxu0 %v90
    %130 = vmatprep.subr.mxu0 0.0
    %131 = vmatpush1.msra.mxu0 %v91
    %132 = vmatprep.subr.mxu0 0.0
    %133 = vmatpush1.msra.mxu0 %v92
    %134 = vmatprep.subr.mxu0 0.0
    %135 = vmatpush1.msra.mxu0 %v93
    %136 = vmatprep.subr.mxu0 0.0
    %137 = vmatpush1.msra.mxu0 %v94
    %138 = vmatprep.subr.mxu0 0.0
    %139 = vmatpush1.msra.mxu0 %v95
    %140 = vmatprep.subr.mxu0 0.0
    %141 = vmatpush1.msra.mxu0 %v96
    %142 = vmatprep.subr.mxu0 0.0
    %143 = vmatpush1.msra.mxu0 %v97
    %144 = vmatprep.subr.mxu0 0.0
    %145 = vmatpush1.msra.mxu0 %v98
    %146 = vmatprep.subr.mxu0 0.0
    %147 = vmatpush1.msra.mxu0 %v99
    %148 = vmatprep.subr.mxu0 0.0
    %149 = vmatpush1.msra.mxu0 %v100
    %150 = vmatprep.subr.mxu0 0.0
    %151 = vmatpush1.msra.mxu0 %v101
    %152 = vmatprep.subr.mxu0 0.0
    %153 = vmatpush1.msra.mxu0 %v102
    %154 = vmatprep.subr.mxu0 0.0
    %155 = vmatpush1.msra.mxu0 %v103
    %156 = vmatprep.subr.mxu0 0.0
    %157 = vmatpush1.msra.mxu0 0.0
    %158 = vmatprep.subr.mxu0 0.0
    %159 = vmatpush1.msra.mxu0 0.0
    %160 = vmatprep.subr.mxu0 0.0
    %161 = vmatpush1.msra.mxu0 0.0
    %162 = vmatprep.subr.mxu0 0.0
    %163 = vmatpush1.msra.mxu0 0.0
    %164 = vmatprep.subr.mxu0 0.0
    %165 = vmatpush1.msra.mxu0 0.0
    %166 = vmatprep.subr.mxu0 0.0
    %167 = vmatpush1.msra.mxu0 0.0
    %168 = vmatprep.subr.mxu0 0.0
    %169 = vmatpush1.msra.mxu0 0.0
    %170 = vmatprep.subr.mxu0 0.0
    %171 = vmatpush1.msra.mxu0 0.0
    %172 = vmatprep.mubr.f32.mxu0 %v106
    %173 = vmatmul.mubr.f32.gmra.mrb[0].mxu0 %v78
    %v174 = vpop.f32.mrb[0].mxu0
    %v175 = vadd.f32 0.0, %v174
    %v176 = vpop.f32.mrb[0].mxu0
    %177 = vdwg.mxu0
    %v178 = vld [vmem:[%s2] sm:$0x1]
    %v180 = vrot.slane %v175, 7
    %vm182 = vcmask 1040384
    %v183 = vsel %vm182, %v178, %v180
    %v184 = vld [vmem:[%s3] sm:$0x1f]
    %v185 = vadd.f32 %v183, %v184
    %v186 = vrot.slane %v175, 3
    %v188 = vsel %vm182, %v178, %v186
    %v189 = vadd.f32 %v188, %v184
    %v191 = vrot.slane %v189, 3
    %vm193 = vcmask 1044480
    %v194 = vsel %vm193, %v185, %v191
    %v195 = vld [vmem:[%s4] sm:$0x1]
    %v196 = vld [vmem:[%s5] sm:$0x1]
    %vm197 = vcmask 261120
    %v198 = vsel %vm197, %v194, 0.0
    %199 = vadd.xlane.f32.xlu0 %v198
    %v200 = vpop.xlane.xlu0 %199
    %vm201 = vcmask 254976
    %v202 = vsel %vm201, %v191, 0.0
    %203 = vadd.xlane.f32.xlu0 %v202
    %v204 = vpop.xlane.xlu0 %203
    %v205 = vrcp.pop 32.0
    %v206 = vmul.f32 %v200, %v205
    %v207 = vmul.f32 %v204, %v205
    %v208 = vsub.f32 %v194, %v206
    %v209 = vsub.f32 %v191, %v207
    %v210 = vmul.f32 %v208, %v208
    %v211 = vmul.f32 %v209, %v209
    %v212 = vsel %vm197, %v210, 0.0
    %213 = vadd.xlane.f32.xlu0 %v212
    %v214 = vpop.xlane.xlu0 %213
    %v215 = vsel %vm201, %v211, 0.0
    %216 = vadd.xlane.f32.xlu0 %v215
    %v217 = vpop.xlane.xlu0 %216
    %v218 = vmul.f32 %v214, %v205
    %v219 = vmul.f32 %v217, %v205
    %v220 = vadd.f32 %v218, 1e-05
    %v221 = vadd.f32 %v219, 1e-05
    %v222 = vrsqrt.pop %v220
    %v223 = vrsqrt.pop %v221
    %v224 = vmul.f32 %v208, %v222
    %v225 = vmul.f32 %v209, %v223
    %v227 = vlaneseq
    %v228 = vshrl.u32 %v227, 7
    %v229 = vsub.s32 0, %v228
    %v230 = vrot.slane %v195, %v229
    %v232 = vmul.f32 %v224, %v230
    %v233 = vmul.f32 %v225, %v230
    %v235 = vlaneseq
    %v236 = vshrl.u32 %v235, 7
    %v237 = vsub.s32 0, %v236
    %v238 = vrot.slane %v196, %v237
    %v240 = vadd.f32 %v232, %v238
    %v241 = vadd.f32 %v233, %v238
    %v242 = vld [vmem:[%s6] sm:$0x1]
    %v243 = vld [vmem:[%s7] sm:$0x1]
    %v244 = vsel %vm197, %v240, 0.0
    %245 = vadd.xlane.f32.xlu0 %v244
    %v246 = vpop.xlane.xlu0 %245
    %v247 = vsel %vm201, %v241, 0.0
    %248 = vadd.xlane.f32.xlu0 %v247
    %v249 = vpop.xlane.xlu0 %248
    %v250 = vmul.f32 %v246, %v205
    %v251 = vmul.f32 %v249, %v205
    %v252 = vsub.f32 %v240, %v250
    %v253 = vsub.f32 %v241, %v251
    %v254 = vmul.f32 %v252, %v252
    %v255 = vmul.f32 %v253, %v253
    %v256 = vsel %vm197, %v254, 0.0
    %257 = vadd.xlane.f32.xlu0 %v256
    %v258 = vpop.xlane.xlu0 %257
    %v259 = vsel %vm201, %v255, 0.0
    %260 = vadd.xlane.f32.xlu0 %v259
    %v261 = vpop.xlane.xlu0 %260
    %v262 = vmul.f32 %v258, %v205
    %v263 = vmul.f32 %v261, %v205
    %v264 = vadd.f32 %v262, 1e-05
    %v265 = vadd.f32 %v263, 1e-05
    %v266 = vrsqrt.pop %v264
    %v267 = vrsqrt.pop %v265
    %v268 = vmul.f32 %v252, %v266
    %v269 = vmul.f32 %v253, %v267
    %v271 = vlaneseq
    %v272 = vshrl.u32 %v271, 7
    %v273 = vsub.s32 0, %v272
    %v274 = vrot.slane %v242, %v273
    %v276 = vmul.f32 %v268, %v274
    %v277 = vmul.f32 %v269, %v274
    %v279 = vlaneseq
    %v280 = vshrl.u32 %v279, 7
    %v281 = vsub.s32 0, %v280
    %v282 = vrot.slane %v243, %v281
    %v284 = vadd.f32 %v276, %v282
    %v285 = vadd.f32 %v277, %v282
    %v286 = vld [vmem:[%s8] sm:$0xff]
    %v287 = vld [vmem:[%s8 + $0x8] sm:$0xff]
    %v288 = vld [vmem:[%s8 + $0x10] sm:$0xff]
    %v289 = vld [vmem:[%s8 + $0x18] sm:$0xff]
    %v290 = vld [vmem:[%s9] sm:$0x1]
    %v292 = vlaneseq
    %v293 = vshrl.u32 %v292, 7
    %v294 = vsub.s32 0, %v293
    %v295 = vrot.slane %v290, %v294
    %v298 = vsel %vm197, %v284, 0
    %v301 = vsel %vm197, %v285, 0
    %303 = vmatprep.subr.mxu0 0.0
    %304 = vmatpush1.msra.mxu0 %v286
    %305 = vmatprep.subr.mxu0 0.0
    %306 = vmatpush1.msra.mxu0 %v287
    %307 = vmatprep.subr.mxu0 0.0
    %308 = vmatpush1.msra.mxu0 %v288
    %309 = vmatprep.subr.mxu0 0.0
    %310 = vmatpush1.msra.mxu0 %v289
    %311 = vmatprep.subr.mxu0 0.0
    %312 = vmatpush1.msra.mxu0 0.0
    %313 = vmatprep.subr.mxu0 0.0
    %314 = vmatpush1.msra.mxu0 0.0
    %315 = vmatprep.subr.mxu0 0.0
    %316 = vmatpush1.msra.mxu0 0.0
    %317 = vmatprep.subr.mxu0 0.0
    %318 = vmatpush1.msra.mxu0 0.0
    %319 = vmatprep.subr.mxu0 0.0
    %320 = vmatpush1.msra.mxu0 0.0
    %321 = vmatprep.subr.mxu0 0.0
    %322 = vmatpush1.msra.mxu0 0.0
    %323 = vmatprep.subr.mxu0 0.0
    %324 = vmatpush1.msra.mxu0 0.0
    %325 = vmatprep.subr.mxu0 0.0
    %326 = vmatpush1.msra.mxu0 0.0
    %327 = vmatprep.subr.mxu0 0.0
    %328 = vmatpush1.msra.mxu0 0.0
    %329 = vmatprep.subr.mxu0 0.0
    %330 = vmatpush1.msra.mxu0 0.0
    %331 = vmatprep.subr.mxu0 0.0
    %332 = vmatpush1.msra.mxu0 0.0
    %333 = vmatprep.subr.mxu0 0.0
    %334 = vmatpush1.msra.mxu0 0.0
    %335 = vmatprep.subr.mxu0 0.0
    %336 = vmatpush1.msra.mxu0 0.0
    %337 = vmatprep.subr.mxu0 0.0
    %338 = vmatpush1.msra.mxu0 0.0
    %339 = vmatprep.subr.mxu0 0.0
    %340 = vmatpush1.msra.mxu0 0.0
    %341 = vmatprep.subr.mxu0 0.0
    %342 = vmatpush1.msra.mxu0 0.0
    %343 = vmatprep.subr.mxu0 0.0
    %344 = vmatpush1.msra.mxu0 0.0
    %345 = vmatprep.subr.mxu0 0.0
    %346 = vmatpush1.msra.mxu0 0.0
    %347 = vmatprep.subr.mxu0 0.0
    %348 = vmatpush1.msra.mxu0 0.0
    %349 = vmatprep.subr.mxu0 0.0
    %350 = vmatpush1.msra.mxu0 0.0
    %351 = vmatprep.subr.mxu0 0.0
    %352 = vmatpush1.msra.mxu0 0.0
    %353 = vmatprep.subr.mxu0 0.0
    %354 = vmatpush1.msra.mxu0 0.0
    %355 = vmatprep.subr.mxu0 0.0
    %356 = vmatpush1.msra.mxu0 0.0
    %357 = vmatprep.subr.mxu0 0.0
    %358 = vmatpush1.msra.mxu0 0.0
    %359 = vmatprep.subr.mxu0 0.0
    %360 = vmatpush1.msra.mxu0 0.0
    %361 = vmatprep.subr.mxu0 0.0
    %362 = vmatpush1.msra.mxu0 0.0
    %363 = vmatprep.subr.mxu0 0.0
    %364 = vmatpush1.msra.mxu0 0.0
    %365 = vmatprep.subr.mxu0 0.0
    %366 = vmatpush1.msra.mxu0 0.0
    %367 = vmatprep.mubr.f32.mxu0 0.0
    %368 = vmatmul.mubr.f32.gmra.mrb[0].mxu0 %v298
    %v369 = vpop.f32.mrb[0].mxu0
    %v370 = vadd.f32 %v295, %v369
    %v371 = vpop.f32.mrb[0].mxu0
    %372 = vmatprep.mubr.f32.mxu0 0.0
    %373 = vmatmul.mubr.f32.gmra.mrb[0].mxu0 %v301
    %v374 = vpop.f32.mrb[0].mxu0
    %v375 = vadd.f32 %v295, %v374
    %v376 = vpop.f32.mrb[0].mxu0
    %377 = vdwg.mxu0
    %v378 = vld [vmem:[%s10] sm:$0xff]
    %v379 = vld [vmem:[%s10 + $0x8] sm:$0xff]
    %v380 = vld [vmem:[%s10 + $0x10] sm:$0xff]
    %v381 = vld [vmem:[%s10 + $0x18] sm:$0xff]
    %v382 = vld [vmem:[%s11] sm:$0x1]
    %v384 = vlaneseq
    %v385 = vshrl.u32 %v384, 7
    %v386 = vsub.s32 0, %v385
    %v387 = vrot.slane %v382, %v386
    %389 = vmatprep.subr.mxu0 0.0
    %390 = vmatpush1.msra.mxu0 %v378
    %391 = vmatprep.subr.mxu0 0.0
    %392 = vmatpush1.msra.mxu0 %v379
    %393 = vmatprep.subr.mxu0 0.0
    %394 = vmatpush1.msra.mxu0 %v380
    %395 = vmatprep.subr.mxu0 0.0
    %396 = vmatpush1.msra.mxu0 %v381
    %397 = vmatprep.subr.mxu0 0.0
    %398 = vmatpush1.msra.mxu0 0.0
    %399 = vmatprep.subr.mxu0 0.0
    %400 = vmatpush1.msra.mxu0 0.0
    %401 = vmatprep.subr.mxu0 0.0
    %402 = vmatpush1.msra.mxu0 0.0
    %403 = vmatprep.subr.mxu0 0.0
    %404 = vmatpush1.msra.mxu0 0.0
    %405 = vmatprep.subr.mxu0 0.0
    %406 = vmatpush1.msra.mxu0 0.0
    %407 = vmatprep.subr.mxu0 0.0
    %408 = vmatpush1.msra.mxu0 0.0
    %409 = vmatprep.subr.mxu0 0.0
    %410 = vmatpush1.msra.mxu0 0.0
    %411 = vmatprep.subr.mxu0 0.0
    %412 = vmatpush1.msra.mxu0 0.0
    %413 = vmatprep.subr.mxu0 0.0
    %414 = vmatpush1.msra.mxu0 0.0
    %415 = vmatprep.subr.mxu0 0.0
    %416 = vmatpush1.msra.mxu0 0.0
    %417 = vmatprep.subr.mxu0 0.0
    %418 = vmatpush1.msra.mxu0 0.0
    %419 = vmatprep.subr.mxu0 0.0
    %420 = vmatpush1.msra.mxu0 0.0
    %421 = vmatprep.subr.mxu0 0.0
    %422 = vmatpush1.msra.mxu0 0.0
    %423 = vmatprep.subr.mxu0 0.0
    %424 = vmatpush1.msra.mxu0 0.0
    %425 = vmatprep.subr.mxu0 0.0
    %426 = vmatpush1.msra.mxu0 0.0
    %427 = vmatprep.subr.mxu0 0.0
    %428 = vmatpush1.msra.mxu0 0.0
    %429 = vmatprep.subr.mxu0 0.0
    %430 = vmatpush1.msra.mxu0 0.0
    %431 = vmatprep.subr.mxu0 0.0
    %432 = vmatpush1.msra.mxu0 0.0
    %433 = vmatprep.subr.mxu0 0.0
    %434 = vmatpush1.msra.mxu0 0.0
    %435 = vmatprep.subr.mxu0 0.0
    %436 = vmatpush1.msra.mxu0 0.0
    %437 = vmatprep.subr.mxu0 0.0
    %438 = vmatpush1.msra.mxu0 0.0
    %439 = vmatprep.subr.mxu0 0.0
    %440 = vmatpush1.msra.mxu0 0.0
    %441 = vmatprep.subr.mxu0 0.0
    %442 = vmatpush1.msra.mxu0 0.0
    %443 = vmatprep.subr.mxu0 0.0
    %444 = vmatpush1.msra.mxu0 0.0
    %445 = vmatprep.subr.mxu0 0.0
    %446 = vmatpush1.msra.mxu0 0.0
    %447 = vmatprep.subr.mxu0 0.0
    %448 = vmatpush1.msra.mxu0 0.0
    %449 = vmatprep.subr.mxu0 0.0
    %450 = vmatpush1.msra.mxu0 0.0
    %451 = vmatprep.subr.mxu0 0.0
    %452 = vmatpush1.msra.mxu0 0.0
    %453 = vmatprep.mubr.f32.mxu0 0.0
    %454 = vmatmul.mubr.f32.gmra.mrb[0].mxu0 %v298
    %v455 = vpop.f32.mrb[0].mxu0
    %v456 = vadd.f32 %v387, %v455
    %v457 = vpop.f32.mrb[0].mxu0
    %458 = vmatprep.mubr.f32.mxu0 0.0
    %459 = vmatmul.mubr.f32.gmra.mrb[0].mxu0 %v301
    %v460 = vpop.f32.mrb[0].mxu0
    %v461 = vadd.f32 %v387, %v460
    %v462 = vpop.f32.mrb[0].mxu0
    %463 = vdwg.mxu0
    %v464 = vld [vmem:[%s12] sm:$0xff]
    %v465 = vld [vmem:[%s12 + $0x8] sm:$0xff]
    %v466 = vld [vmem:[%s12 + $0x10] sm:$0xff]
    %v467 = vld [vmem:[%s12 + $0x18] sm:$0xff]
    %v468 = vld [vmem:[%s13] sm:$0x1]
    %v470 = vlaneseq
    %v471 = vshrl.u32 %v470, 7
    %v472 = vsub.s32 0, %v471
    %v473 = vrot.slane %v468, %v472
    %475 = vmatprep.subr.mxu0 0.0
    %476 = vmatpush1.msra.mxu0 %v464
    %477 = vmatprep.subr.mxu0 0.0
    %478 = vmatpush1.msra.mxu0 %v465
    %479 = vmatprep.subr.mxu0 0.0
    %480 = vmatpush1.msra.mxu0 %v466
    %481 = vmatprep.subr.mxu0 0.0
    %482 = vmatpush1.msra.mxu0 %v467
    %483 = vmatprep.subr.mxu0 0.0
    %484 = vmatpush1.msra.mxu0 0.0
    %485 = vmatprep.subr.mxu0 0.0
    %486 = vmatpush1.msra.mxu0 0.0
    %487 = vmatprep.subr.mxu0 0.0
    %488 = vmatpush1.msra.mxu0 0.0
    %489 = vmatprep.subr.mxu0 0.0
    %490 = vmatpush1.msra.mxu0 0.0
    %491 = vmatprep.subr.mxu0 0.0
    %492 = vmatpush1.msra.mxu0 0.0
    %493 = vmatprep.subr.mxu0 0.0
    %494 = vmatpush1.msra.mxu0 0.0
    %495 = vmatprep.subr.mxu0 0.0
    %496 = vmatpush1.msra.mxu0 0.0
    %497 = vmatprep.subr.mxu0 0.0
    %498 = vmatpush1.msra.mxu0 0.0
    %499 = vmatprep.subr.mxu0 0.0
    %500 = vmatpush1.msra.mxu0 0.0
    %501 = vmatprep.subr.mxu0 0.0
    %502 = vmatpush1.msra.mxu0 0.0
    %503 = vmatprep.subr.mxu0 0.0
    %504 = vmatpush1.msra.mxu0 0.0
    %505 = vmatprep.subr.mxu0 0.0
    %506 = vmatpush1.msra.mxu0 0.0
    %507 = vmatprep.subr.mxu0 0.0
    %508 = vmatpush1.msra.mxu0 0.0
    %509 = vmatprep.subr.mxu0 0.0
    %510 = vmatpush1.msra.mxu0 0.0
    %511 = vmatprep.subr.mxu0 0.0
    %512 = vmatpush1.msra.mxu0 0.0
    %513 = vmatprep.subr.mxu0 0.0
    %514 = vmatpush1.msra.mxu0 0.0
    %515 = vmatprep.subr.mxu0 0.0
    %516 = vmatpush1.msra.mxu0 0.0
    %517 = vmatprep.subr.mxu0 0.0
    %518 = vmatpush1.msra.mxu0 0.0
    %519 = vmatprep.subr.mxu0 0.0
    %520 = vmatpush1.msra.mxu0 0.0
    %521 = vmatprep.subr.mxu0 0.0
    %522 = vmatpush1.msra.mxu0 0.0
    %523 = vmatprep.subr.mxu0 0.0
    %524 = vmatpush1.msra.mxu0 0.0
    %525 = vmatprep.subr.mxu0 0.0
    %526 = vmatpush1.msra.mxu0 0.0
    %527 = vmatprep.subr.mxu0 0.0
    %528 = vmatpush1.msra.mxu0 0.0
    %529 = vmatprep.subr.mxu0 0.0
    %530 = vmatpush1.msra.mxu0 0.0
    %531 = vmatprep.subr.mxu0 0.0
    %532 = vmatpush1.msra.mxu0 0.0
    %533 = vmatprep.subr.mxu0 0.0
    %534 = vmatpush1.msra.mxu0 0.0
    %535 = vmatprep.subr.mxu0 0.0
    %536 = vmatpush1.msra.mxu0 0.0
    %537 = vmatprep.subr.mxu0 0.0
    %538 = vmatpush1.msra.mxu0 0.0
    %539 = vmatprep.mubr.f32.mxu0 0.0
    %540 = vmatmul.mubr.f32.gmra.mrb[0].mxu0 %v298
    %v541 = vpop.f32.mrb[0].mxu0
    %v542 = vadd.f32 %v473, %v541
    %v543 = vpop.f32.mrb[0].mxu0
    %544 = vmatprep.mubr.f32.mxu0 0.0
    %545 = vmatmul.mubr.f32.gmra.mrb[0].mxu0 %v301
    %v546 = vpop.f32.mrb[0].mxu0
    %v547 = vadd.f32 %v473, %v546
    %v548 = vpop.f32.mrb[0].mxu0
    %549 = vdwg.mxu0
    %551 = vrot.lane.b32.xlu0 %v370, 120
    %v552 = vpop.permute.xlu0 %551
    %553 = vrot.lane.b32.xlu0 %v370, 112
    %v554 = vpop.permute.xlu0 %553
    %555 = vrot.lane.b32.xlu0 %v370, 104
    %v556 = vpop.permute.xlu0 %555
    %vm558 = vcmask 1042432
    %v559 = vrot.slane %v370, 5
    %v560 = vrot.slane %v375, 5
    %v561 = vsel %vm558, %v559, %v560
    %562 = vrot.lane.b32.xlu0 %v561, 120
    %v563 = vpop.permute.xlu0 %562
    %564 = vrot.lane.b32.xlu0 %v561, 112
    %v565 = vpop.permute.xlu0 %564
    %566 = vrot.lane.b32.xlu0 %v561, 104
    %v567 = vpop.permute.xlu0 %566
    %569 = vrot.lane.b32.xlu0 %v456, 120
    %v570 = vpop.permute.xlu0 %569
    %571 = vrot.lane.b32.xlu0 %v456, 112
    %v572 = vpop.permute.xlu0 %571
    %573 = vrot.lane.b32.xlu0 %v456, 104
    %v574 = vpop.permute.xlu0 %573
    %v576 = vrot.slane %v456, 5
    %v577 = vrot.slane %v461, 5
    %v578 = vsel %vm558, %v576, %v577
    %579 = vrot.lane.b32.xlu0 %v578, 120
    %v580 = vpop.permute.xlu0 %579
    %581 = vrot.lane.b32.xlu0 %v578, 112
    %v582 = vpop.permute.xlu0 %581
    %583 = vrot.lane.b32.xlu0 %v578, 104
    %v584 = vpop.permute.xlu0 %583
    %586 = vrot.lane.b32.xlu0 %v542, 120
    %v587 = vpop.permute.xlu0 %586
    %588 = vrot.lane.b32.xlu0 %v542, 112
    %v589 = vpop.permute.xlu0 %588
    %590 = vrot.lane.b32.xlu0 %v542, 104
    %v591 = vpop.permute.xlu0 %590
    %v593 = vrot.slane %v542, 5
    %v594 = vrot.slane %v547, 5
    %v595 = vsel %vm558, %v593, %v594
    %596 = vrot.lane.b32.xlu0 %v595, 120
    %v597 = vpop.permute.xlu0 %596
    %598 = vrot.lane.b32.xlu0 %v595, 112
    %v599 = vpop.permute.xlu0 %598
    %600 = vrot.lane.b32.xlu0 %v595, 104
    %v601 = vpop.permute.xlu0 %600
    %vm602 = vcmask 64512
    %v603 = vsel %vm602, %v370, 0
    %v605 = vsel %vm602, %v456, 0
    %607 = vmatprep.subr.mxu0 0.0
    %608 = vmatpush1.xpose.msra.mxu0 %v605
    %609 = vmatprep.subr.mxu0 0.0
    %610 = vmatpush1.xpose.msra.mxu0 0.0
    %611 = vmatprep.subr.mxu0 0.0
    %612 = vmatpush1.xpose.msra.mxu0 0.0
    %613 = vmatprep.subr.mxu0 0.0
    %614 = vmatpush1.xpose.msra.mxu0 0.0
    %615 = vmatprep.subr.mxu0 0.0
    %616 = vmatpush1.xpose.msra.mxu0 0.0
    %617 = vmatprep.subr.mxu0 0.0
    %618 = vmatpush1.xpose.msra.mxu0 0.0
    %619 = vmatprep.subr.mxu0 0.0
    %620 = vmatpush1.xpose.msra.mxu0 0.0
    %621 = vmatprep.subr.mxu0 0.0
    %622 = vmatpush1.xpose.msra.mxu0 0.0
    %623 = vmatprep.subr.mxu0 0.0
    %624 = vmatpush1.xpose.msra.mxu0 0.0
    %625 = vmatprep.subr.mxu0 0.0
    %626 = vmatpush1.xpose.msra.mxu0 0.0
    %627 = vmatprep.subr.mxu0 0.0
    %628 = vmatpush1.xpose.msra.mxu0 0.0
    %629 = vmatprep.subr.mxu0 0.0
    %630 = vmatpush1.xpose.msra.mxu0 0.0
    %631 = vmatprep.subr.mxu0 0.0
    %632 = vmatpush1.xpose.msra.mxu0 0.0
    %633 = vmatprep.subr.mxu0 0.0
    %634 = vmatpush1.xpose.msra.mxu0 0.0
    %635 = vmatprep.subr.mxu0 0.0
    %636 = vmatpush1.xpose.msra.mxu0 0.0
    %637 = vmatprep.subr.mxu0 0.0
    %638 = vmatpush1.xpose.msra.mxu0 0.0
    %639 = vmatprep.subr.mxu0 0.0
    %640 = vmatpush1.xpose.msra.mxu0 0.0
    %641 = vmatprep.subr.mxu0 0.0
    %642 = vmatpush1.xpose.msra.mxu0 0.0
    %643 = vmatprep.subr.mxu0 0.0
    %644 = vmatpush1.xpose.msra.mxu0 0.0
    %645 = vmatprep.subr.mxu0 0.0
    %646 = vmatpush1.xpose.msra.mxu0 0.0
    %647 = vmatprep.subr.mxu0 0.0
    %648 = vmatpush1.xpose.msra.mxu0 0.0
    %649 = vmatprep.subr.mxu0 0.0
    %650 = vmatpush1.xpose.msra.mxu0 0.0
    %651 = vmatprep.subr.mxu0 0.0
    %652 = vmatpush1.xpose.msra.mxu0 0.0
    %653 = vmatprep.subr.mxu0 0.0
    %654 = vmatpush1.xpose.msra.mxu0 0.0
    %655 = vmatprep.subr.mxu0 0.0
    %656 = vmatpush1.xpose.msra.mxu0 0.0
    %657 = vmatprep.subr.mxu0 0.0
    %658 = vmatpush1.xpose.msra.mxu0 0.0
    %659 = vmatprep.subr.mxu0 0.0
    %660 = vmatpush1.xpose.msra.mxu0 0.0
    %661 = vmatprep.subr.mxu0 0.0
    %662 = vmatpush1.xpose.msra.mxu0 0.0
    %663 = vmatprep.subr.mxu0 0.0
    %664 = vmatpush1.xpose.msra.mxu0 0.0
    %665 = vmatprep.subr.mxu0 0.0
    %666 = vmatpush1.xpose.msra.mxu0 0.0
    %667 = vmatprep.subr.mxu0 0.0
    %668 = vmatpush1.xpose.msra.mxu0 0.0
    %669 = vmatprep.subr.mxu0 0.0
    %670 = vmatpush1.xpose.msra.mxu0 0.0
    %671 = vmatprep.mubr.f32.mxu0 0.0
    %672 = vmatmul.mubr.f32.gmra.mrb[0].mxu0 %v603
    %v673 = vpop.f32.mrb[0].mxu0
    %v674 = vadd.f32 0.0, %v673
    %v675 = vpop.f32.mrb[0].mxu0
    %676 = vdwg.mxu0
    %v677 = vsel %vm602, %v552, 0
    %v679 = vsel %vm602, %v570, 0
    %681 = vmatprep.subr.mxu0 0.0
    %682 = vmatpush1.xpose.msra.mxu0 %v679
    %683 = vmatprep.subr.mxu0 0.0
    %684 = vmatpush1.xpose.msra.mxu0 0.0
    %685 = vmatprep.subr.mxu0 0.0
    %686 = vmatpush1.xpose.msra.mxu0 0.0
    %687 = vmatprep.subr.mxu0 0.0
    %688 = vmatpush1.xpose.msra.mxu0 0.0
    %689 = vmatprep.subr.mxu0 0.0
    %690 = vmatpush1.xpose.msra.mxu0 0.0
    %691 = vmatprep.subr.mxu0 0.0
    %692 = vmatpush1.xpose.msra.mxu0 0.0
    %693 = vmatprep.subr.mxu0 0.0
    %694 = vmatpush1.xpose.msra.mxu0 0.0
    %695 = vmatprep.subr.mxu0 0.0
    %696 = vmatpush1.xpose.msra.mxu0 0.0
    %697 = vmatprep.subr.mxu0 0.0
    %698 = vmatpush1.xpose.msra.mxu0 0.0
    %699 = vmatprep.subr.mxu0 0.0
    %700 = vmatpush1.xpose.msra.mxu0 0.0
    %701 = vmatprep.subr.mxu0 0.0
    %702 = vmatpush1.xpose.msra.mxu0 0.0
    %703 = vmatprep.subr.mxu0 0.0
    %704 = vmatpush1.xpose.msra.mxu0 0.0
    %705 = vmatprep.subr.mxu0 0.0
    %706 = vmatpush1.xpose.msra.mxu0 0.0
    %707 = vmatprep.subr.mxu0 0.0
    %708 = vmatpush1.xpose.msra.mxu0 0.0
    %709 = vmatprep.subr.mxu0 0.0
    %710 = vmatpush1.xpose.msra.mxu0 0.0
    %711 = vmatprep.subr.mxu0 0.0
    %712 = vmatpush1.xpose.msra.mxu0 0.0
    %713 = vmatprep.subr.mxu0 0.0
    %714 = vmatpush1.xpose.msra.mxu0 0.0
    %715 = vmatprep.subr.mxu0 0.0
    %716 = vmatpush1.xpose.msra.mxu0 0.0
    %717 = vmatprep.subr.mxu0 0.0
    %718 = vmatpush1.xpose.msra.mxu0 0.0
    %719 = vmatprep.subr.mxu0 0.0
    %720 = vmatpush1.xpose.msra.mxu0 0.0
    %721 = vmatprep.subr.mxu0 0.0
    %722 = vmatpush1.xpose.msra.mxu0 0.0
    %723 = vmatprep.subr.mxu0 0.0
    %724 = vmatpush1.xpose.msra.mxu0 0.0
    %725 = vmatprep.subr.mxu0 0.0
    %726 = vmatpush1.xpose.msra.mxu0 0.0
    %727 = vmatprep.subr.mxu0 0.0
    %728 = vmatpush1.xpose.msra.mxu0 0.0
    %729 = vmatprep.subr.mxu0 0.0
    %730 = vmatpush1.xpose.msra.mxu0 0.0
    %731 = vmatprep.subr.mxu0 0.0
    %732 = vmatpush1.xpose.msra.mxu0 0.0
    %733 = vmatprep.subr.mxu0 0.0
    %734 = vmatpush1.xpose.msra.mxu0 0.0
    %735 = vmatprep.subr.mxu0 0.0
    %736 = vmatpush1.xpose.msra.mxu0 0.0
    %737 = vmatprep.subr.mxu0 0.0
    %738 = vmatpush1.xpose.msra.mxu0 0.0
    %739 = vmatprep.subr.mxu0 0.0
    %740 = vmatpush1.xpose.msra.mxu0 0.0
    %741 = vmatprep.subr.mxu0 0.0
    %742 = vmatpush1.xpose.msra.mxu0 0.0
    %743 = vmatprep.subr.mxu0 0.0
    %744 = vmatpush1.xpose.msra.mxu0 0.0
    %745 = vmatprep.mubr.f32.mxu0 0.0
    %746 = vmatmul.mubr.f32.gmra.mrb[0].mxu0 %v677
    %v747 = vpop.f32.mrb[0].mxu0
    %v748 = vadd.f32 0.0, %v747
    %v749 = vpop.f32.mrb[0].mxu0
    %750 = vdwg.mxu0
    %v751 = vsel %vm602, %v554, 0
    %v753 = vsel %vm602, %v572, 0
    %755 = vmatprep.subr.mxu0 0.0
    %756 = vmatpush1.xpose.msra.mxu0 %v753
    %757 = vmatprep.subr.mxu0 0.0
    %758 = vmatpush1.xpose.msra.mxu0 0.0
    %759 = vmatprep.subr.mxu0 0.0
    %760 = vmatpush1.xpose.msra.mxu0 0.0
    %761 = vmatprep.subr.mxu0 0.0
    %762 = vmatpush1.xpose.msra.mxu0 0.0
    %763 = vmatprep.subr.mxu0 0.0
    %764 = vmatpush1.xpose.msra.mxu0 0.0
    %765 = vmatprep.subr.mxu0 0.0
    %766 = vmatpush1.xpose.msra.mxu0 0.0
    %767 = vmatprep.subr.mxu0 0.0
    %768 = vmatpush1.xpose.msra.mxu0 0.0
    %769 = vmatprep.subr.mxu0 0.0
    %770 = vmatpush1.xpose.msra.mxu0 0.0
    %771 = vmatprep.subr.mxu0 0.0
    %772 = vmatpush1.xpose.msra.mxu0 0.0
    %773 = vmatprep.subr.mxu0 0.0
    %774 = vmatpush1.xpose.msra.mxu0 0.0
    %775 = vmatprep.subr.mxu0 0.0
    %776 = vmatpush1.xpose.msra.mxu0 0.0
    %777 = vmatprep.subr.mxu0 0.0
    %778 = vmatpush1.xpose.msra.mxu0 0.0
    %779 = vmatprep.subr.mxu0 0.0
    %780 = vmatpush1.xpose.msra.mxu0 0.0
    %781 = vmatprep.subr.mxu0 0.0
    %782 = vmatpush1.xpose.msra.mxu0 0.0
    %783 = vmatprep.subr.mxu0 0.0
    %784 = vmatpush1.xpose.msra.mxu0 0.0
    %785 = vmatprep.subr.mxu0 0.0
    %786 = vmatpush1.xpose.msra.mxu0 0.0
    %787 = vmatprep.subr.mxu0 0.0
    %788 = vmatpush1.xpose.msra.mxu0 0.0
    %789 = vmatprep.subr.mxu0 0.0
    %790 = vmatpush1.xpose.msra.mxu0 0.0
    %791 = vmatprep.subr.mxu0 0.0
    %792 = vmatpush1.xpose.msra.mxu0 0.0
    %793 = vmatprep.subr.mxu0 0.0
    %794 = vmatpush1.xpose.msra.mxu0 0.0
    %795 = vmatprep.subr.mxu0 0.0
    %796 = vmatpush1.xpose.msra.mxu0 0.0
    %797 = vmatprep.subr.mxu0 0.0
    %798 = vmatpush1.xpose.msra.mxu0 0.0
    %799 = vmatprep.subr.mxu0 0.0
    %800 = vmatpush1.xpose.msra.mxu0 0.0
    %801 = vmatprep.subr.mxu0 0.0
    %802 = vmatpush1.xpose.msra.mxu0 0.0
    %803 = vmatprep.subr.mxu0 0.0
    %804 = vmatpush1.xpose.msra.mxu0 0.0
    %805 = vmatprep.subr.mxu0 0.0
    %806 = vmatpush1.xpose.msra.mxu0 0.0
    %807 = vmatprep.subr.mxu0 0.0
    %808 = vmatpush1.xpose.msra.mxu0 0.0
    %809 = vmatprep.subr.mxu0 0.0
    %810 = vmatpush1.xpose.msra.mxu0 0.0
    %811 = vmatprep.subr.mxu0 0.0
    %812 = vmatpush1.xpose.msra.mxu0 0.0
    %813 = vmatprep.subr.mxu0 0.0
    %814 = vmatpush1.xpose.msra.mxu0 0.0
    %815 = vmatprep.subr.mxu0 0.0
    %816 = vmatpush1.xpose.msra.mxu0 0.0
    %817 = vmatprep.subr.mxu0 0.0
    %818 = vmatpush1.xpose.msra.mxu0 0.0
    %819 = vmatprep.mubr.f32.mxu0 0.0
    %820 = vmatmul.mubr.f32.gmra.mrb[0].mxu0 %v751
    %v821 = vpop.f32.mrb[0].mxu0
    %v822 = vadd.f32 0.0, %v821
    %v823 = vpop.f32.mrb[0].mxu0
    %824 = vdwg.mxu0
    %v825 = vsel %vm602, %v556, 0
    %v827 = vsel %vm602, %v574, 0
    %829 = vmatprep.subr.mxu0 0.0
    %830 = vmatpush1.xpose.msra.mxu0 %v827
    %831 = vmatprep.subr.mxu0 0.0
    %832 = vmatpush1.xpose.msra.mxu0 0.0
    %833 = vmatprep.subr.mxu0 0.0
    %834 = vmatpush1.xpose.msra.mxu0 0.0
    %835 = vmatprep.subr.mxu0 0.0
    %836 = vmatpush1.xpose.msra.mxu0 0.0
    %837 = vmatprep.subr.mxu0 0.0
    %838 = vmatpush1.xpose.msra.mxu0 0.0
    %839 = vmatprep.subr.mxu0 0.0
    %840 = vmatpush1.xpose.msra.mxu0 0.0
    %841 = vmatprep.subr.mxu0 0.0
    %842 = vmatpush1.xpose.msra.mxu0 0.0
    %843 = vmatprep.subr.mxu0 0.0
    %844 = vmatpush1.xpose.msra.mxu0 0.0
    %845 = vmatprep.subr.mxu0 0.0
    %846 = vmatpush1.xpose.msra.mxu0 0.0
    %847 = vmatprep.subr.mxu0 0.0
    %848 = vmatpush1.xpose.msra.mxu0 0.0
    %849 = vmatprep.subr.mxu0 0.0
    %850 = vmatpush1.xpose.msra.mxu0 0.0
    %851 = vmatprep.subr.mxu0 0.0
    %852 = vmatpush1.xpose.msra.mxu0 0.0
    %853 = vmatprep.subr.mxu0 0.0
    %854 = vmatpush1.xpose.msra.mxu0 0.0
    %855 = vmatprep.subr.mxu0 0.0
    %856 = vmatpush1.xpose.msra.mxu0 0.0
    %857 = vmatprep.subr.mxu0 0.0
    %858 = vmatpush1.xpose.msra.mxu0 0.0
    %859 = vmatprep.subr.mxu0 0.0
    %860 = vmatpush1.xpose.msra.mxu0 0.0
    %861 = vmatprep.subr.mxu0 0.0
    %862 = vmatpush1.xpose.msra.mxu0 0.0
    %863 = vmatprep.subr.mxu0 0.0
    %864 = vmatpush1.xpose.msra.mxu0 0.0
    %865 = vmatprep.subr.mxu0 0.0
    %866 = vmatpush1.xpose.msra.mxu0 0.0
    %867 = vmatprep.subr.mxu0 0.0
    %868 = vmatpush1.xpose.msra.mxu0 0.0
    %869 = vmatprep.subr.mxu0 0.0
    %870 = vmatpush1.xpose.msra.mxu0 0.0
    %871 = vmatprep.subr.mxu0 0.0
    %872 = vmatpush1.xpose.msra.mxu0 0.0
    %873 = vmatprep.subr.mxu0 0.0
    %874 = vmatpush1.xpose.msra.mxu0 0.0
    %875 = vmatprep.subr.mxu0 0.0
    %876 = vmatpush1.xpose.msra.mxu0 0.0
    %877 = vmatprep.subr.mxu0 0.0
    %878 = vmatpush1.xpose.msra.mxu0 0.0
    %879 = vmatprep.subr.mxu0 0.0
    %880 = vmatpush1.xpose.msra.mxu0 0.0
    %881 = vmatprep.subr.mxu0 0.0
    %882 = vmatpush1.xpose.msra.mxu0 0.0
    %883 = vmatprep.subr.mxu0 0.0
    %884 = vmatpush1.xpose.msra.mxu0 0.0
    %885 = vmatprep.subr.mxu0 0.0
    %886 = vmatpush1.xpose.msra.mxu0 0.0
    %887 = vmatprep.subr.mxu0 0.0
    %888 = vmatpush1.xpose.msra.mxu0 0.0
    %889 = vmatprep.subr.mxu0 0.0
    %890 = vmatpush1.xpose.msra.mxu0 0.0
    %891 = vmatprep.subr.mxu0 0.0
    %892 = vmatpush1.xpose.msra.mxu0 0.0
    %893 = vmatprep.mubr.f32.mxu0 0.0
    %894 = vmatmul.mubr.f32.gmra.mrb[0].mxu0 %v825
    %v895 = vpop.f32.mrb[0].mxu0
    %v896 = vadd.f32 0.0, %v895
    %v897 = vpop.f32.mrb[0].mxu0
    %898 = vdwg.mxu0
    %v899 = vsel %vm602, %v561, 0
    %v901 = vsel %vm602, %v578, 0
    %903 = vmatprep.subr.mxu0 0.0
    %904 = vmatpush1.xpose.msra.mxu0 %v901
    %905 = vmatprep.subr.mxu0 0.0
    %906 = vmatpush1.xpose.msra.mxu0 0.0
    %907 = vmatprep.subr.mxu0 0.0
    %908 = vmatpush1.xpose.msra.mxu0 0.0
    %909 = vmatprep.subr.mxu0 0.0
    %910 = vmatpush1.xpose.msra.mxu0 0.0
    %911 = vmatprep.subr.mxu0 0.0
    %912 = vmatpush1.xpose.msra.mxu0 0.0
    %913 = vmatprep.subr.mxu0 0.0
    %914 = vmatpush1.xpose.msra.mxu0 0.0
    %915 = vmatprep.subr.mxu0 0.0
    %916 = vmatpush1.xpose.msra.mxu0 0.0
    %917 = vmatprep.subr.mxu0 0.0
    %918 = vmatpush1.xpose.msra.mxu0 0.0
    %919 = vmatprep.subr.mxu0 0.0
    %920 = vmatpush1.xpose.msra.mxu0 0.0
    %921 = vmatprep.subr.mxu0 0.0
    %922 = vmatpush1.xpose.msra.mxu0 0.0
    %923 = vmatprep.subr.mxu0 0.0
    %924 = vmatpush1.xpose.msra.mxu0 0.0
    %925 = vmatprep.subr.mxu0 0.0
    %926 = vmatpush1.xpose.msra.mxu0 0.0
    %927 = vmatprep.subr.mxu0 0.0
    %928 = vmatpush1.xpose.msra.mxu0 0.0
    %929 = vmatprep.subr.mxu0 0.0
    %930 = vmatpush1.xpose.msra.mxu0 0.0
    %931 = vmatprep.subr.mxu0 0.0
    %932 = vmatpush1.xpose.msra.mxu0 0.0
    %933 = vmatprep.subr.mxu0 0.0
    %934 = vmatpush1.xpose.msra.mxu0 0.0
    %935 = vmatprep.subr.mxu0 0.0
    %936 = vmatpush1.xpose.msra.mxu0 0.0
    %937 = vmatprep.subr.mxu0 0.0
    %938 = vmatpush1.xpose.msra.mxu0 0.0
    %939 = vmatprep.subr.mxu0 0.0
    %940 = vmatpush1.xpose.msra.mxu0 0.0
    %941 = vmatprep.subr.mxu0 0.0
    %942 = vmatpush1.xpose.msra.mxu0 0.0
    %943 = vmatprep.subr.mxu0 0.0
    %944 = vmatpush1.xpose.msra.mxu0 0.0
    %945 = vmatprep.subr.mxu0 0.0
    %946 = vmatpush1.xpose.msra.mxu0 0.0
    %947 = vmatprep.subr.mxu0 0.0
    %948 = vmatpush1.xpose.msra.mxu0 0.0
    %949 = vmatprep.subr.mxu0 0.0
    %950 = vmatpush1.xpose.msra.mxu0 0.0
    %951 = vmatprep.subr.mxu0 0.0
    %952 = vmatpush1.xpose.msra.mxu0 0.0
    %953 = vmatprep.subr.mxu0 0.0
    %954 = vmatpush1.xpose.msra.mxu0 0.0
    %955 = vmatprep.subr.mxu0 0.0
    %956 = vmatpush1.xpose.msra.mxu0 0.0
    %957 = vmatprep.subr.mxu0 0.0
    %958 = vmatpush1.xpose.msra.mxu0 0.0
    %959 = vmatprep.subr.mxu0 0.0
    %960 = vmatpush1.xpose.msra.mxu0 0.0
    %961 = vmatprep.subr.mxu0 0.0
    %962 = vmatpush1.xpose.msra.mxu0 0.0
    %963 = vmatprep.subr.mxu0 0.0
    %964 = vmatpush1.xpose.msra.mxu0 0.0
    %965 = vmatprep.subr.mxu0 0.0
    %966 = vmatpush1.xpose.msra.mxu0 0.0
    %967 = vmatprep.mubr.f32.mxu0 0.0
    %968 = vmatmul.mubr.f32.gmra.mrb[0].mxu0 %v899
    %v969 = vpop.f32.mrb[0].mxu0
    %v970 = vadd.f32 0.0, %v969
    %v971 = vpop.f32.mrb[0].mxu0
    %972 = vdwg.mxu0
    %v973 = vsel %vm602, %v563, 0
    %v975 = vsel %vm602, %v580, 0
    %977 = vmatprep.subr.mxu0 0.0
    %978 = vmatpush1.xpose.msra.mxu0 %v975
    %979 = vmatprep.subr.mxu0 0.0
    %980 = vmatpush1.xpose.msra.mxu0 0.0
    %981 = vmatprep.subr.mxu0 0.0
    %982 = vmatpush1.xpose.msra.mxu0 0.0
    %983 = vmatprep.subr.mxu0 0.0
    %984 = vmatpush1.xpose.msra.mxu0 0.0
    %985 = vmatprep.subr.mxu0 0.0
    %986 = vmatpush1.xpose.msra.mxu0 0.0
    %987 = vmatprep.subr.mxu0 0.0
    %988 = vmatpush1.xpose.msra.mxu0 0.0
    %989 = vmatprep.subr.mxu0 0.0
    %990 = vmatpush1.xpose.msra.mxu0 0.0
    %991 = vmatprep.subr.mxu0 0.0
    %992 = vmatpush1.xpose.msra.mxu0 0.0
    %993 = vmatprep.subr.mxu0 0.0
    %994 = vmatpush1.xpose.msra.mxu0 0.0
    %995 = vmatprep.subr.mxu0 0.0
    %996 = vmatpush1.xpose.msra.mxu0 0.0
    %997 = vmatprep.subr.mxu0 0.0
    %998 = vmatpush1.xpose.msra.mxu0 0.0
    %999 = vmatprep.subr.mxu0 0.0
    %1000 = vmatpush1.xpose.msra.mxu0 0.0
    %1001 = vmatprep.subr.mxu0 0.0
    %1002 = vmatpush1.xpose.msra.mxu0 0.0
    %1003 = vmatprep.subr.mxu0 0.0
    %1004 = vmatpush1.xpose.msra.mxu0 0.0
    %1005 = vmatprep.subr.mxu0 0.0
    %1006 = vmatpush1.xpose.msra.mxu0 0.0
    %1007 = vmatprep.subr.mxu0 0.0
    %1008 = vmatpush1.xpose.msra.mxu0 0.0
    %1009 = vmatprep.subr.mxu0 0.0
    %1010 = vmatpush1.xpose.msra.mxu0 0.0
    %1011 = vmatprep.subr.mxu0 0.0
    %1012 = vmatpush1.xpose.msra.mxu0 0.0
    %1013 = vmatprep.subr.mxu0 0.0
    %1014 = vmatpush1.xpose.msra.mxu0 0.0
    %1015 = vmatprep.subr.mxu0 0.0
    %1016 = vmatpush1.xpose.msra.mxu0 0.0
    %1017 = vmatprep.subr.mxu0 0.0
    %1018 = vmatpush1.xpose.msra.mxu0 0.0
    %1019 = vmatprep.subr.mxu0 0.0
    %1020 = vmatpush1.xpose.msra.mxu0 0.0
    %1021 = vmatprep.subr.mxu0 0.0
    %1022 = vmatpush1.xpose.msra.mxu0 0.0
    %1023 = vmatprep.subr.mxu0 0.0
    %1024 = vmatpush1.xpose.msra.mxu0 0.0
    %1025 = vmatprep.subr.mxu0 0.0
    %1026 = vmatpush1.xpose.msra.mxu0 0.0
    %1027 = vmatprep.subr.mxu0 0.0
    %1028 = vmatpush1.xpose.msra.mxu0 0.0
    %1029 = vmatprep.subr.mxu0 0.0
    %1030 = vmatpush1.xpose.msra.mxu0 0.0
    %1031 = vmatprep.subr.mxu0 0.0
    %1032 = vmatpush1.xpose.msra.mxu0 0.0
    %1033 = vmatprep.subr.mxu0 0.0
    %1034 = vmatpush1.xpose.msra.mxu0 0.0
    %1035 = vmatprep.subr.mxu0 0.0
    %1036 = vmatpush1.xpose.msra.mxu0 0.0
    %1037 = vmatprep.subr.mxu0 0.0
    %1038 = vmatpush1.xpose.msra.mxu0 0.0
    %1039 = vmatprep.subr.mxu0 0.0
    %1040 = vmatpush1.xpose.msra.mxu0 0.0
    %1041 = vmatprep.mubr.f32.mxu0 0.0
    %1042 = vmatmul.mubr.f32.gmra.mrb[0].mxu0 %v973
    %v1043 = vpop.f32.mrb[0].mxu0
    %v1044 = vadd.f32 0.0, %v1043
    %v1045 = vpop.f32.mrb[0].mxu0
    %1046 = vdwg.mxu0
    %v1047 = vsel %vm602, %v565, 0
    %v1049 = vsel %vm602, %v582, 0
    %1051 = vmatprep.subr.mxu0 0.0
    %1052 = vmatpush1.xpose.msra.mxu0 %v1049
    %1053 = vmatprep.subr.mxu0 0.0
    %1054 = vmatpush1.xpose.msra.mxu0 0.0
    %1055 = vmatprep.subr.mxu0 0.0
    %1056 = vmatpush1.xpose.msra.mxu0 0.0
    %1057 = vmatprep.subr.mxu0 0.0
    %1058 = vmatpush1.xpose.msra.mxu0 0.0
    %1059 = vmatprep.subr.mxu0 0.0
    %1060 = vmatpush1.xpose.msra.mxu0 0.0
    %1061 = vmatprep.subr.mxu0 0.0
    %1062 = vmatpush1.xpose.msra.mxu0 0.0
    %1063 = vmatprep.subr.mxu0 0.0
    %1064 = vmatpush1.xpose.msra.mxu0 0.0
    %1065 = vmatprep.subr.mxu0 0.0
    %1066 = vmatpush1.xpose.msra.mxu0 0.0
    %1067 = vmatprep.subr.mxu0 0.0
    %1068 = vmatpush1.xpose.msra.mxu0 0.0
    %1069 = vmatprep.subr.mxu0 0.0
    %1070 = vmatpush1.xpose.msra.mxu0 0.0
    %1071 = vmatprep.subr.mxu0 0.0
    %1072 = vmatpush1.xpose.msra.mxu0 0.0
    %1073 = vmatprep.subr.mxu0 0.0
    %1074 = vmatpush1.xpose.msra.mxu0 0.0
    %1075 = vmatprep.subr.mxu0 0.0
    %1076 = vmatpush1.xpose.msra.mxu0 0.0
    %1077 = vmatprep.subr.mxu0 0.0
    %1078 = vmatpush1.xpose.msra.mxu0 0.0
    %1079 = vmatprep.subr.mxu0 0.0
    %1080 = vmatpush1.xpose.msra.mxu0 0.0
    %1081 = vmatprep.subr.mxu0 0.0
    %1082 = vmatpush1.xpose.msra.mxu0 0.0
    %1083 = vmatprep.subr.mxu0 0.0
    %1084 = vmatpush1.xpose.msra.mxu0 0.0
    %1085 = vmatprep.subr.mxu0 0.0
    %1086 = vmatpush1.xpose.msra.mxu0 0.0
    %1087 = vmatprep.subr.mxu0 0.0
    %1088 = vmatpush1.xpose.msra.mxu0 0.0
    %1089 = vmatprep.subr.mxu0 0.0
    %1090 = vmatpush1.xpose.msra.mxu0 0.0
    %1091 = vmatprep.subr.mxu0 0.0
    %1092 = vmatpush1.xpose.msra.mxu0 0.0
    %1093 = vmatprep.subr.mxu0 0.0
    %1094 = vmatpush1.xpose.msra.mxu0 0.0
    %1095 = vmatprep.subr.mxu0 0.0
    %1096 = vmatpush1.xpose.msra.mxu0 0.0
    %1097 = vmatprep.subr.mxu0 0.0
    %1098 = vmatpush1.xpose.msra.mxu0 0.0
    %1099 = vmatprep.subr.mxu0 0.0
    %1100 = vmatpush1.xpose.msra.mxu0 0.0
    %1101 = vmatprep.subr.mxu0 0.0
    %1102 = vmatpush1.xpose.msra.mxu0 0.0
    %1103 = vmatprep.subr.mxu0 0.0
    %1104 = vmatpush1.xpose.msra.mxu0 0.0
    %1105 = vmatprep.subr.mxu0 0.0
    %1106 = vmatpush1.xpose.msra.mxu0 0.0
    %1107 = vmatprep.subr.mxu0 0.0
    %1108 = vmatpush1.xpose.msra.mxu0 0.0
    %1109 = vmatprep.subr.mxu0 0.0
    %1110 = vmatpush1.xpose.msra.mxu0 0.0
    %1111 = vmatprep.subr.mxu0 0.0
    %1112 = vmatpush1.xpose.msra.mxu0 0.0
    %1113 = vmatprep.subr.mxu0 0.0
    %1114 = vmatpush1.xpose.msra.mxu0 0.0
    %1115 = vmatprep.mubr.f32.mxu0 0.0
    %1116 = vmatmul.mubr.f32.gmra.mrb[0].mxu0 %v1047
    %v1117 = vpop.f32.mrb[0].mxu0
    %v1118 = vadd.f32 0.0, %v1117
    %v1119 = vpop.f32.mrb[0].mxu0
    %1120 = vdwg.mxu0
    %v1121 = vsel %vm602, %v567, 0
    %v1123 = vsel %vm602, %v584, 0
    %1125 = vmatprep.subr.mxu0 0.0
    %1126 = vmatpush1.xpose.msra.mxu0 %v1123
    %1127 = vmatprep.subr.mxu0 0.0
    %1128 = vmatpush1.xpose.msra.mxu0 0.0
    %1129 = vmatprep.subr.mxu0 0.0
    %1130 = vmatpush1.xpose.msra.mxu0 0.0
    %1131 = vmatprep.subr.mxu0 0.0
    %1132 = vmatpush1.xpose.msra.mxu0 0.0
    %1133 = vmatprep.subr.mxu0 0.0
    %1134 = vmatpush1.xpose.msra.mxu0 0.0
    %1135 = vmatprep.subr.mxu0 0.0
    %1136 = vmatpush1.xpose.msra.mxu0 0.0
    %1137 = vmatprep.subr.mxu0 0.0
    %1138 = vmatpush1.xpose.msra.mxu0 0.0
    %1139 = vmatprep.subr.mxu0 0.0
    %1140 = vmatpush1.xpose.msra.mxu0 0.0
    %1141 = vmatprep.subr.mxu0 0.0
    %1142 = vmatpush1.xpose.msra.mxu0 0.0
    %1143 = vmatprep.subr.mxu0 0.0
    %1144 = vmatpush1.xpose.msra.mxu0 0.0
    %1145 = vmatprep.subr.mxu0 0.0
    %1146 = vmatpush1.xpose.msra.mxu0 0.0
    %1147 = vmatprep.subr.mxu0 0.0
    %1148 = vmatpush1.xpose.msra.mxu0 0.0
    %1149 = vmatprep.subr.mxu0 0.0
    %1150 = vmatpush1.xpose.msra.mxu0 0.0
    %1151 = vmatprep.subr.mxu0 0.0
    %1152 = vmatpush1.xpose.msra.mxu0 0.0
    %1153 = vmatprep.subr.mxu0 0.0
    %1154 = vmatpush1.xpose.msra.mxu0 0.0
    %1155 = vmatprep.subr.mxu0 0.0
    %1156 = vmatpush1.xpose.msra.mxu0 0.0
    %1157 = vmatprep.subr.mxu0 0.0
    %1158 = vmatpush1.xpose.msra.mxu0 0.0
    %1159 = vmatprep.subr.mxu0 0.0
    %1160 = vmatpush1.xpose.msra.mxu0 0.0
    %1161 = vmatprep.subr.mxu0 0.0
    %1162 = vmatpush1.xpose.msra.mxu0 0.0
    %1163 = vmatprep.subr.mxu0 0.0
    %1164 = vmatpush1.xpose.msra.mxu0 0.0
    %1165 = vmatprep.subr.mxu0 0.0
    %1166 = vmatpush1.xpose.msra.mxu0 0.0
    %1167 = vmatprep.subr.mxu0 0.0
    %1168 = vmatpush1.xpose.msra.mxu0 0.0
    %1169 = vmatprep.subr.mxu0 0.0
    %1170 = vmatpush1.xpose.msra.mxu0 0.0
    %1171 = vmatprep.subr.mxu0 0.0
    %1172 = vmatpush1.xpose.msra.mxu0 0.0
    %1173 = vmatprep.subr.mxu0 0.0
    %1174 = vmatpush1.xpose.msra.mxu0 0.0
    %1175 = vmatprep.subr.mxu0 0.0
    %1176 = vmatpush1.xpose.msra.mxu0 0.0
    %1177 = vmatprep.subr.mxu0 0.0
    %1178 = vmatpush1.xpose.msra.mxu0 0.0
    %1179 = vmatprep.subr.mxu0 0.0
    %1180 = vmatpush1.xpose.msra.mxu0 0.0
    %1181 = vmatprep.subr.mxu0 0.0
    %1182 = vmatpush1.xpose.msra.mxu0 0.0
    %1183 = vmatprep.subr.mxu0 0.0
    %1184 = vmatpush1.xpose.msra.mxu0 0.0
    %1185 = vmatprep.subr.mxu0 0.0
    %1186 = vmatpush1.xpose.msra.mxu0 0.0
    %1187 = vmatprep.subr.mxu0 0.0
    %1188 = vmatpush1.xpose.msra.mxu0 0.0
    %1189 = vmatprep.mubr.f32.mxu0 0.0
    %1190 = vmatmul.mubr.f32.gmra.mrb[0].mxu0 %v1121
    %v1191 = vpop.f32.mrb[0].mxu0
    %v1192 = vadd.f32 0.0, %v1191
    %v1193 = vpop.f32.mrb[0].mxu0
    %1194 = vdwg.mxu0
    %v1195 = vmul.f32 %v674, 0.35355338
    %v1196 = vmul.f32 %v748, 0.35355338
    %v1197 = vmul.f32 %v822, 0.35355338
    %v1198 = vmul.f32 %v896, 0.35355338
    %v1199 = vmul.f32 %v970, 0.35355338
    %v1200 = vmul.f32 %v1044, 0.35355338
    %v1201 = vmul.f32 %v1118, 0.35355338
    %v1202 = vmul.f32 %v1192, 0.35355338
    %vm1203 = vcmask 36864
    %v1204 = vsel %vm1203, %v1195, -inf
    %1205 = vmax.xlane.f32.xlu0 %v1204
    %v1206 = vpop.xlane.xlu0 %1205
    %v1207 = vsel %vm1203, %v1196, -inf
    %1208 = vmax.xlane.f32.xlu0 %v1207
    %v1209 = vpop.xlane.xlu0 %1208
    %v1210 = vsel %vm1203, %v1197, -inf
    %1211 = vmax.xlane.f32.xlu0 %v1210
    %v1212 = vpop.xlane.xlu0 %1211
    %v1213 = vsel %vm1203, %v1198, -inf
    %1214 = vmax.xlane.f32.xlu0 %v1213
    %v1215 = vpop.xlane.xlu0 %1214
    %v1216 = vsel %vm1203, %v1199, -inf
    %1217 = vmax.xlane.f32.xlu0 %v1216
    %v1218 = vpop.xlane.xlu0 %1217
    %v1219 = vsel %vm1203, %v1200, -inf
    %1220 = vmax.xlane.f32.xlu0 %v1219
    %v1221 = vpop.xlane.xlu0 %1220
    %v1222 = vsel %vm1203, %v1201, -inf
    %1223 = vmax.xlane.f32.xlu0 %v1222
    %v1224 = vpop.xlane.xlu0 %1223
    %v1225 = vsel %vm1203, %v1202, -inf
    %1226 = vmax.xlane.f32.xlu0 %v1225
    %v1227 = vpop.xlane.xlu0 %1226
    %v1228 = vsub.f32 %v1195, %v1206
    %v1229 = vsub.f32 %v1196, %v1209
    %v1230 = vsub.f32 %v1197, %v1212
    %v1231 = vsub.f32 %v1198, %v1215
    %v1232 = vsub.f32 %v1199, %v1218
    %v1233 = vsub.f32 %v1200, %v1221
    %v1234 = vsub.f32 %v1201, %v1224
    %v1235 = vsub.f32 %v1202, %v1227
    %v1236 = vmul.f32 %v1228, 1.442695
    %v1237 = vpow.pop %v1236
    %v1238 = vmul.f32 %v1229, 1.442695
    %v1239 = vpow.pop %v1238
    %v1240 = vmul.f32 %v1230, 1.442695
    %v1241 = vpow.pop %v1240
    %v1242 = vmul.f32 %v1231, 1.442695
    %v1243 = vpow.pop %v1242
    %v1244 = vmul.f32 %v1232, 1.442695
    %v1245 = vpow.pop %v1244
    %v1246 = vmul.f32 %v1233, 1.442695
    %v1247 = vpow.pop %v1246
    %v1248 = vmul.f32 %v1234, 1.442695
    %v1249 = vpow.pop %v1248
    %v1250 = vmul.f32 %v1235, 1.442695
    %v1251 = vpow.pop %v1250
    %v1252 = vsel %vm1203, %v1237, 0.0
    %1253 = vadd.xlane.f32.xlu0 %v1252
    %v1254 = vpop.xlane.xlu0 %1253
    %v1255 = vsel %vm1203, %v1239, 0.0
    %1256 = vadd.xlane.f32.xlu0 %v1255
    %v1257 = vpop.xlane.xlu0 %1256
    %v1258 = vsel %vm1203, %v1241, 0.0
    %1259 = vadd.xlane.f32.xlu0 %v1258
    %v1260 = vpop.xlane.xlu0 %1259
    %v1261 = vsel %vm1203, %v1243, 0.0
    %1262 = vadd.xlane.f32.xlu0 %v1261
    %v1263 = vpop.xlane.xlu0 %1262
    %v1264 = vsel %vm1203, %v1245, 0.0
    %1265 = vadd.xlane.f32.xlu0 %v1264
    %v1266 = vpop.xlane.xlu0 %1265
    %v1267 = vsel %vm1203, %v1247, 0.0
    %1268 = vadd.xlane.f32.xlu0 %v1267
    %v1269 = vpop.xlane.xlu0 %1268
    %v1270 = vsel %vm1203, %v1249, 0.0
    %1271 = vadd.xlane.f32.xlu0 %v1270
    %v1272 = vpop.xlane.xlu0 %1271
    %v1273 = vsel %vm1203, %v1251, 0.0
    %1274 = vadd.xlane.f32.xlu0 %v1273
    %v1275 = vpop.xlane.xlu0 %1274
    %v1276 = vrcp.pop %v1254
    %v1277 = vrcp.pop %v1257
    %v1278 = vrcp.pop %v1260
    %v1279 = vrcp.pop %v1263
    %v1280 = vrcp.pop %v1266
    %v1281 = vrcp.pop %v1269
    %v1282 = vrcp.pop %v1272
    %v1283 = vrcp.pop %v1275
    %v1284 = vmul.f32 %v1237, %v1276
    %v1285 = vmul.f32 %v1239, %v1277
    %v1286 = vmul.f32 %v1241, %v1278
    %v1287 = vmul.f32 %v1243, %v1279
    %v1288 = vmul.f32 %v1245, %v1280
    %v1289 = vmul.f32 %v1247, %v1281
    %v1290 = vmul.f32 %v1249, %v1282
    %v1291 = vmul.f32 %v1251, %v1283
    %vm1292 = vcmask 39936
    %v1294 = vsel %vm1292, %v1284, 0
    %v1296 = vsel %vm193, %v542, 0
    %1298 = vmatprep.subr.mxu0 0.0
    %1299 = vmatpush1.msra.mxu0 %v1296
    %1300 = vmatprep.subr.mxu0 0.0
    %1301 = vmatpush1.msra.mxu0 0.0
    %1302 = vmatprep.subr.mxu0 0.0
    %1303 = vmatpush1.msra.mxu0 0.0
    %1304 = vmatprep.subr.mxu0 0.0
    %1305 = vmatpush1.msra.mxu0 0.0
    %1306 = vmatprep.subr.mxu0 0.0
    %1307 = vmatpush1.msra.mxu0 0.0
    %1308 = vmatprep.subr.mxu0 0.0
    %1309 = vmatpush1.msra.mxu0 0.0
    %1310 = vmatprep.subr.mxu0 0.0
    %1311 = vmatpush1.msra.mxu0 0.0
    %1312 = vmatprep.subr.mxu0 0.0
    %1313 = vmatpush1.msra.mxu0 0.0
    %1314 = vmatprep.subr.mxu0 0.0
    %1315 = vmatpush1.msra.mxu0 0.0
    %1316 = vmatprep.subr.mxu0 0.0
    %1317 = vmatpush1.msra.mxu0 0.0
    %1318 = vmatprep.subr.mxu0 0.0
    %1319 = vmatpush1.msra.mxu0 0.0
    %1320 = vmatprep.subr.mxu0 0.0
    %1321 = vmatpush1.msra.mxu0 0.0
    %1322 = vmatprep.subr.mxu0 0.0
    %1323 = vmatpush1.msra.mxu0 0.0
    %1324 = vmatprep.subr.mxu0 0.0
    %1325 = vmatpush1.msra.mxu0 0.0
    %1326 = vmatprep.subr.mxu0 0.0
    %1327 = vmatpush1.msra.mxu0 0.0
    %1328 = vmatprep.subr.mxu0 0.0
    %1329 = vmatpush1.msra.mxu0 0.0
    %1330 = vmatprep.subr.mxu0 0.0
    %1331 = vmatpush1.msra.mxu0 0.0
    %1332 = vmatprep.subr.mxu0 0.0
    %1333 = vmatpush1.msra.mxu0 0.0
    %1334 = vmatprep.subr.mxu0 0.0
    %1335 = vmatpush1.msra.mxu0 0.0
    %1336 = vmatprep.subr.mxu0 0.0
    %1337 = vmatpush1.msra.mxu0 0.0
    %1338 = vmatprep.subr.mxu0 0.0
    %1339 = vmatpush1.msra.mxu0 0.0
    %1340 = vmatprep.subr.mxu0 0.0
    %1341 = vmatpush1.msra.mxu0 0.0
    %1342 = vmatprep.subr.mxu0 0.0
    %1343 = vmatpush1.msra.mxu0 0.0
    %1344 = vmatprep.subr.mxu0 0.0
    %1345 = vmatpush1.msra.mxu0 0.0
    %1346 = vmatprep.subr.mxu0 0.0
    %1347 = vmatpush1.msra.mxu0 0.0
    %1348 = vmatprep.subr.mxu0 0.0
    %1349 = vmatpush1.msra.mxu0 0.0
    %1350 = vmatprep.subr.mxu0 0.0
    %1351 = vmatpush1.msra.mxu0 0.0
    %1352 = vmatprep.subr.mxu0 0.0
    %1353 = vmatpush1.msra.mxu0 0.0
    %1354 = vmatprep.subr.mxu0 0.0
    %1355 = vmatpush1.msra.mxu0 0.0
    %1356 = vmatprep.subr.mxu0 0.0
    %1357 = vmatpush1.msra.mxu0 0.0
    %1358 = vmatprep.subr.mxu0 0.0
    %1359 = vmatpush1.msra.mxu0 0.0
    %1360 = vmatprep.subr.mxu0 0.0
    %1361 = vmatpush1.msra.mxu0 0.0
    %1362 = vmatprep.mubr.f32.mxu0 0.0
    %1363 = vmatmul.mubr.f32.gmra.mrb[0].mxu0 %v1294
    %v1364 = vpop.f32.mrb[0].mxu0
    %v1365 = vadd.f32 0.0, %v1364
    %v1366 = vpop.f32.mrb[0].mxu0
    %1367 = vdwg.mxu0
    %v1369 = vsel %vm1292, %v1285, 0
    %v1371 = vsel %vm193, %v587, 0
    %1373 = vmatprep.subr.mxu0 0.0
    %1374 = vmatpush1.msra.mxu0 %v1371
    %1375 = vmatprep.subr.mxu0 0.0
    %1376 = vmatpush1.msra.mxu0 0.0
    %1377 = vmatprep.subr.mxu0 0.0
    %1378 = vmatpush1.msra.mxu0 0.0
    %1379 = vmatprep.subr.mxu0 0.0
    %1380 = vmatpush1.msra.mxu0 0.0
    %1381 = vmatprep.subr.mxu0 0.0
    %1382 = vmatpush1.msra.mxu0 0.0
    %1383 = vmatprep.subr.mxu0 0.0
    %1384 = vmatpush1.msra.mxu0 0.0
    %1385 = vmatprep.subr.mxu0 0.0
    %1386 = vmatpush1.msra.mxu0 0.0
    %1387 = vmatprep.subr.mxu0 0.0
    %1388 = vmatpush1.msra.mxu0 0.0
    %1389 = vmatprep.subr.mxu0 0.0
    %1390 = vmatpush1.msra.mxu0 0.0
    %1391 = vmatprep.subr.mxu0 0.0
    %1392 = vmatpush1.msra.mxu0 0.0
    %1393 = vmatprep.subr.mxu0 0.0
    %1394 = vmatpush1.msra.mxu0 0.0
    %1395 = vmatprep.subr.mxu0 0.0
    %1396 = vmatpush1.msra.mxu0 0.0
    %1397 = vmatprep.subr.mxu0 0.0
    %1398 = vmatpush1.msra.mxu0 0.0
    %1399 = vmatprep.subr.mxu0 0.0
    %1400 = vmatpush1.msra.mxu0 0.0
    %1401 = vmatprep.subr.mxu0 0.0
    %1402 = vmatpush1.msra.mxu0 0.0
    %1403 = vmatprep.subr.mxu0 0.0
    %1404 = vmatpush1.msra.mxu0 0.0
    %1405 = vmatprep.subr.mxu0 0.0
    %1406 = vmatpush1.msra.mxu0 0.0
    %1407 = vmatprep.subr.mxu0 0.0
    %1408 = vmatpush1.msra.mxu0 0.0
    %1409 = vmatprep.subr.mxu0 0.0
    %1410 = vmatpush1.msra.mxu0 0.0
    %1411 = vmatprep.subr.mxu0 0.0
    %1412 = vmatpush1.msra.mxu0 0.0
    %1413 = vmatprep.subr.mxu0 0.0
    %1414 = vmatpush1.msra.mxu0 0.0
    %1415 = vmatprep.subr.mxu0 0.0
    %1416 = vmatpush1.msra.mxu0 0.0
    %1417 = vmatprep.subr.mxu0 0.0
    %1418 = vmatpush1.msra.mxu0 0.0
    %1419 = vmatprep.subr.mxu0 0.0
    %1420 = vmatpush1.msra.mxu0 0.0
    %1421 = vmatprep.subr.mxu0 0.0
    %1422 = vmatpush1.msra.mxu0 0.0
    %1423 = vmatprep.subr.mxu0 0.0
    %1424 = vmatpush1.msra.mxu0 0.0
    %1425 = vmatprep.subr.mxu0 0.0
    %1426 = vmatpush1.msra.mxu0 0.0
    %1427 = vmatprep.subr.mxu0 0.0
    %1428 = vmatpush1.msra.mxu0 0.0
    %1429 = vmatprep.subr.mxu0 0.0
    %1430 = vmatpush1.msra.mxu0 0.0
    %1431 = vmatprep.subr.mxu0 0.0
    %1432 = vmatpush1.msra.mxu0 0.0
    %1433 = vmatprep.subr.mxu0 0.0
    %1434 = vmatpush1.msra.mxu0 0.0
    %1435 = vmatprep.subr.mxu0 0.0
    %1436 = vmatpush1.msra.mxu0 0.0
    %1437 = vmatprep.mubr.f32.mxu0 0.0
    %1438 = vmatmul.mubr.f32.gmra.mrb[0].mxu0 %v1369
    %v1439 = vpop.f32.mrb[0].mxu0
    %v1440 = vadd.f32 0.0, %v1439
    %v1441 = vpop.f32.mrb[0].mxu0
    %1442 = vdwg.mxu0
    %v1444 = vsel %vm1292, %v1286, 0
    %v1446 = vsel %vm193, %v589, 0
    %1448 = vmatprep.subr.mxu0 0.0
    %1449 = vmatpush1.msra.mxu0 %v1446
    %1450 = vmatprep.subr.mxu0 0.0
    %1451 = vmatpush1.msra.mxu0 0.0
    %1452 = vmatprep.subr.mxu0 0.0
    %1453 = vmatpush1.msra.mxu0 0.0
    %1454 = vmatprep.subr.mxu0 0.0
    %1455 = vmatpush1.msra.mxu0 0.0
    %1456 = vmatprep.subr.mxu0 0.0
    %1457 = vmatpush1.msra.mxu0 0.0
    %1458 = vmatprep.subr.mxu0 0.0
    %1459 = vmatpush1.msra.mxu0 0.0
    %1460 = vmatprep.subr.mxu0 0.0
    %1461 = vmatpush1.msra.mxu0 0.0
    %1462 = vmatprep.subr.mxu0 0.0
    %1463 = vmatpush1.msra.mxu0 0.0
    %1464 = vmatprep.subr.mxu0 0.0
    %1465 = vmatpush1.msra.mxu0 0.0
    %1466 = vmatprep.subr.mxu0 0.0
    %1467 = vmatpush1.msra.mxu0 0.0
    %1468 = vmatprep.subr.mxu0 0.0
    %1469 = vmatpush1.msra.mxu0 0.0
    %1470 = vmatprep.subr.mxu0 0.0
    %1471 = vmatpush1.msra.mxu0 0.0
    %1472 = vmatprep.subr.mxu0 0.0
    %1473 = vmatpush1.msra.mxu0 0.0
    %1474 = vmatprep.subr.mxu0 0.0
    %1475 = vmatpush1.msra.mxu0 0.0
    %1476 = vmatprep.subr.mxu0 0.0
    %1477 = vmatpush1.msra.mxu0 0.0
    %1478 = vmatprep.subr.mxu0 0.0
    %1479 = vmatpush1.msra.mxu0 0.0
    %1480 = vmatprep.subr.mxu0 0.0
    %1481 = vmatpush1.msra.mxu0 0.0
    %1482 = vmatprep.subr.mxu0 0.0
    %1483 = vmatpush1.msra.mxu0 0.0
    %1484 = vmatprep.subr.mxu0 0.0
    %1485 = vmatpush1.msra.mxu0 0.0
    %1486 = vmatprep.subr.mxu0 0.0
    %1487 = vmatpush1.msra.mxu0 0.0
    %1488 = vmatprep.subr.mxu0 0.0
    %1489 = vmatpush1.msra.mxu0 0.0
    %1490 = vmatprep.subr.mxu0 0.0
    %1491 = vmatpush1.msra.mxu0 0.0
    %1492 = vmatprep.subr.mxu0 0.0
    %1493 = vmatpush1.msra.mxu0 0.0
    %1494 = vmatprep.subr.mxu0 0.0
    %1495 = vmatpush1.msra.mxu0 0.0
    %1496 = vmatprep.subr.mxu0 0.0
    %1497 = vmatpush1.msra.mxu0 0.0
    %1498 = vmatprep.subr.mxu0 0.0
    %1499 = vmatpush1.msra.mxu0 0.0
    %1500 = vmatprep.subr.mxu0 0.0
    %1501 = vmatpush1.msra.mxu0 0.0
    %1502 = vmatprep.subr.mxu0 0.0
    %1503 = vmatpush1.msra.mxu0 0.0
    %1504 = vmatprep.subr.mxu0 0.0
    %1505 = vmatpush1.msra.mxu0 0.0
    %1506 = vmatprep.subr.mxu0 0.0
    %1507 = vmatpush1.msra.mxu0 0.0
    %1508 = vmatprep.subr.mxu0 0.0
    %1509 = vmatpush1.msra.mxu0 0.0
    %1510 = vmatprep.subr.mxu0 0.0
    %1511 = vmatpush1.msra.mxu0 0.0
    %1512 = vmatprep.mubr.f32.mxu0 0.0
    %1513 = vmatmul.mubr.f32.gmra.mrb[0].mxu0 %v1444
    %v1514 = vpop.f32.mrb[0].mxu0
    %v1515 = vadd.f32 0.0, %v1514
    %v1516 = vpop.f32.mrb[0].mxu0
    %1517 = vdwg.mxu0
    %v1519 = vsel %vm1292, %v1287, 0
    %v1521 = vsel %vm193, %v591, 0
    %1523 = vmatprep.subr.mxu0 0.0
    %1524 = vmatpush1.msra.mxu0 %v1521
    %1525 = vmatprep.subr.mxu0 0.0
    %1526 = vmatpush1.msra.mxu0 0.0
    %1527 = vmatprep.subr.mxu0 0.0
    %1528 = vmatpush1.msra.mxu0 0.0
    %1529 = vmatprep.subr.mxu0 0.0
    %1530 = vmatpush1.msra.mxu0 0.0
    %1531 = vmatprep.subr.mxu0 0.0
    %1532 = vmatpush1.msra.mxu0 0.0
    %1533 = vmatprep.subr.mxu0 0.0
    %1534 = vmatpush1.msra.mxu0 0.0
    %1535 = vmatprep.subr.mxu0 0.0
    %1536 = vmatpush1.msra.mxu0 0.0
    %1537 = vmatprep.subr.mxu0 0.0
    %1538 = vmatpush1.msra.mxu0 0.0
    %1539 = vmatprep.subr.mxu0 0.0
    %1540 = vmatpush1.msra.mxu0 0.0
    %1541 = vmatprep.subr.mxu0 0.0
    %1542 = vmatpush1.msra.mxu0 0.0
    %1543 = vmatprep.subr.mxu0 0.0
    %1544 = vmatpush1.msra.mxu0 0.0
    %1545 = vmatprep.subr.mxu0 0.0
    %1546 = vmatpush1.msra.mxu0 0.0
    %1547 = vmatprep.subr.mxu0 0.0
    %1548 = vmatpush1.msra.mxu0 0.0
    %1549 = vmatprep.subr.mxu0 0.0
    %1550 = vmatpush1.msra.mxu0 0.0
    %1551 = vmatprep.subr.mxu0 0.0
    %1552 = vmatpush1.msra.mxu0 0.0
    %1553 = vmatprep.subr.mxu0 0.0
    %1554 = vmatpush1.msra.mxu0 0.0
    %1555 = vmatprep.subr.mxu0 0.0
    %1556 = vmatpush1.msra.mxu0 0.0
    %1557 = vmatprep.subr.mxu0 0.0
    %1558 = vmatpush1.msra.mxu0 0.0
    %1559 = vmatprep.subr.mxu0 0.0
    %1560 = vmatpush1.msra.mxu0 0.0
    %1561 = vmatprep.subr.mxu0 0.0
    %1562 = vmatpush1.msra.mxu0 0.0
    %1563 = vmatprep.subr.mxu0 0.0
    %1564 = vmatpush1.msra.mxu0 0.0
    %1565 = vmatprep.subr.mxu0 0.0
    %1566 = vmatpush1.msra.mxu0 0.0
    %1567 = vmatprep.subr.mxu0 0.0
    %1568 = vmatpush1.msra.mxu0 0.0
    %1569 = vmatprep.subr.mxu0 0.0
    %1570 = vmatpush1.msra.mxu0 0.0
    %1571 = vmatprep.subr.mxu0 0.0
    %1572 = vmatpush1.msra.mxu0 0.0
    %1573 = vmatprep.subr.mxu0 0.0
    %1574 = vmatpush1.msra.mxu0 0.0
    %1575 = vmatprep.subr.mxu0 0.0
    %1576 = vmatpush1.msra.mxu0 0.0
    %1577 = vmatprep.subr.mxu0 0.0
    %1578 = vmatpush1.msra.mxu0 0.0
    %1579 = vmatprep.subr.mxu0 0.0
    %1580 = vmatpush1.msra.mxu0 0.0
    %1581 = vmatprep.subr.mxu0 0.0
    %1582 = vmatpush1.msra.mxu0 0.0
    %1583 = vmatprep.subr.mxu0 0.0
    %1584 = vmatpush1.msra.mxu0 0.0
    %1585 = vmatprep.subr.mxu0 0.0
    %1586 = vmatpush1.msra.mxu0 0.0
    %1587 = vmatprep.mubr.f32.mxu0 0.0
    %1588 = vmatmul.mubr.f32.gmra.mrb[0].mxu0 %v1519
    %v1589 = vpop.f32.mrb[0].mxu0
    %v1590 = vadd.f32 0.0, %v1589
    %v1591 = vpop.f32.mrb[0].mxu0
    %1592 = vdwg.mxu0
    %v1594 = vsel %vm1292, %v1288, 0
    %v1596 = vsel %vm193, %v595, 0
    %1598 = vmatprep.subr.mxu0 0.0
    %1599 = vmatpush1.msra.mxu0 %v1596
    %1600 = vmatprep.subr.mxu0 0.0
    %1601 = vmatpush1.msra.mxu0 0.0
    %1602 = vmatprep.subr.mxu0 0.0
    %1603 = vmatpush1.msra.mxu0 0.0
    %1604 = vmatprep.subr.mxu0 0.0
    %1605 = vmatpush1.msra.mxu0 0.0
    %1606 = vmatprep.subr.mxu0 0.0
    %1607 = vmatpush1.msra.mxu0 0.0
    %1608 = vmatprep.subr.mxu0 0.0
    %1609 = vmatpush1.msra.mxu0 0.0
    %1610 = vmatprep.subr.mxu0 0.0
    %1611 = vmatpush1.msra.mxu0 0.0
    %1612 = vmatprep.subr.mxu0 0.0
    %1613 = vmatpush1.msra.mxu0 0.0
    %1614 = vmatprep.subr.mxu0 0.0
    %1615 = vmatpush1.msra.mxu0 0.0
    %1616 = vmatprep.subr.mxu0 0.0
    %1617 = vmatpush1.msra.mxu0 0.0
    %1618 = vmatprep.subr.mxu0 0.0
    %1619 = vmatpush1.msra.mxu0 0.0
    %1620 = vmatprep.subr.mxu0 0.0
    %1621 = vmatpush1.msra.mxu0 0.0
    %1622 = vmatprep.subr.mxu0 0.0
    %1623 = vmatpush1.msra.mxu0 0.0
    %1624 = vmatprep.subr.mxu0 0.0
    %1625 = vmatpush1.msra.mxu0 0.0
    %1626 = vmatprep.subr.mxu0 0.0
    %1627 = vmatpush1.msra.mxu0 0.0
    %1628 = vmatprep.subr.mxu0 0.0
    %1629 = vmatpush1.msra.mxu0 0.0
    %1630 = vmatprep.subr.mxu0 0.0
    %1631 = vmatpush1.msra.mxu0 0.0
    %1632 = vmatprep.subr.mxu0 0.0
    %1633 = vmatpush1.msra.mxu0 0.0
    %1634 = vmatprep.subr.mxu0 0.0
    %1635 = vmatpush1.msra.mxu0 0.0
    %1636 = vmatprep.subr.mxu0 0.0
    %1637 = vmatpush1.msra.mxu0 0.0
    %1638 = vmatprep.subr.mxu0 0.0
    %1639 = vmatpush1.msra.mxu0 0.0
    %1640 = vmatprep.subr.mxu0 0.0
    %1641 = vmatpush1.msra.mxu0 0.0
    %1642 = vmatprep.subr.mxu0 0.0
    %1643 = vmatpush1.msra.mxu0 0.0
    %1644 = vmatprep.subr.mxu0 0.0
    %1645 = vmatpush1.msra.mxu0 0.0
    %1646 = vmatprep.subr.mxu0 0.0
    %1647 = vmatpush1.msra.mxu0 0.0
    %1648 = vmatprep.subr.mxu0 0.0
    %1649 = vmatpush1.msra.mxu0 0.0
    %1650 = vmatprep.subr.mxu0 0.0
    %1651 = vmatpush1.msra.mxu0 0.0
    %1652 = vmatprep.subr.mxu0 0.0
    %1653 = vmatpush1.msra.mxu0 0.0
    %1654 = vmatprep.subr.mxu0 0.0
    %1655 = vmatpush1.msra.mxu0 0.0
    %1656 = vmatprep.subr.mxu0 0.0
    %1657 = vmatpush1.msra.mxu0 0.0
    %1658 = vmatprep.subr.mxu0 0.0
    %1659 = vmatpush1.msra.mxu0 0.0
    %1660 = vmatprep.subr.mxu0 0.0
    %1661 = vmatpush1.msra.mxu0 0.0
    %1662 = vmatprep.mubr.f32.mxu0 0.0
    %1663 = vmatmul.mubr.f32.gmra.mrb[0].mxu0 %v1594
    %v1664 = vpop.f32.mrb[0].mxu0
    %v1665 = vadd.f32 0.0, %v1664
    %v1666 = vpop.f32.mrb[0].mxu0
    %1667 = vdwg.mxu0
    %v1669 = vsel %vm1292, %v1289, 0
    %v1671 = vsel %vm193, %v597, 0
    %1673 = vmatprep.subr.mxu0 0.0
    %1674 = vmatpush1.msra.mxu0 %v1671
    %1675 = vmatprep.subr.mxu0 0.0
    %1676 = vmatpush1.msra.mxu0 0.0
    %1677 = vmatprep.subr.mxu0 0.0
    %1678 = vmatpush1.msra.mxu0 0.0
    %1679 = vmatprep.subr.mxu0 0.0
    %1680 = vmatpush1.msra.mxu0 0.0
    %1681 = vmatprep.subr.mxu0 0.0
    %1682 = vmatpush1.msra.mxu0 0.0
    %1683 = vmatprep.subr.mxu0 0.0
    %1684 = vmatpush1.msra.mxu0 0.0
    %1685 = vmatprep.subr.mxu0 0.0
    %1686 = vmatpush1.msra.mxu0 0.0
    %1687 = vmatprep.subr.mxu0 0.0
    %1688 = vmatpush1.msra.mxu0 0.0
    %1689 = vmatprep.subr.mxu0 0.0
    %1690 = vmatpush1.msra.mxu0 0.0
    %1691 = vmatprep.subr.mxu0 0.0
    %1692 = vmatpush1.msra.mxu0 0.0
    %1693 = vmatprep.subr.mxu0 0.0
    %1694 = vmatpush1.msra.mxu0 0.0
    %1695 = vmatprep.subr.mxu0 0.0
    %1696 = vmatpush1.msra.mxu0 0.0
    %1697 = vmatprep.subr.mxu0 0.0
    %1698 = vmatpush1.msra.mxu0 0.0
    %1699 = vmatprep.subr.mxu0 0.0
    %1700 = vmatpush1.msra.mxu0 0.0
    %1701 = vmatprep.subr.mxu0 0.0
    %1702 = vmatpush1.msra.mxu0 0.0
    %1703 = vmatprep.subr.mxu0 0.0
    %1704 = vmatpush1.msra.mxu0 0.0
    %1705 = vmatprep.subr.mxu0 0.0
    %1706 = vmatpush1.msra.mxu0 0.0
    %1707 = vmatprep.subr.mxu0 0.0
    %1708 = vmatpush1.msra.mxu0 0.0
    %1709 = vmatprep.subr.mxu0 0.0
    %1710 = vmatpush1.msra.mxu0 0.0
    %1711 = vmatprep.subr.mxu0 0.0
    %1712 = vmatpush1.msra.mxu0 0.0
    %1713 = vmatprep.subr.mxu0 0.0
    %1714 = vmatpush1.msra.mxu0 0.0
    %1715 = vmatprep.subr.mxu0 0.0
    %1716 = vmatpush1.msra.mxu0 0.0
    %1717 = vmatprep.subr.mxu0 0.0
    %1718 = vmatpush1.msra.mxu0 0.0
    %1719 = vmatprep.subr.mxu0 0.0
    %1720 = vmatpush1.msra.mxu0 0.0
    %1721 = vmatprep.subr.mxu0 0.0
    %1722 = vmatpush1.msra.mxu0 0.0
    %1723 = vmatprep.subr.mxu0 0.0
    %1724 = vmatpush1.msra.mxu0 0.0
    %1725 = vmatprep.subr.mxu0 0.0
    %1726 = vmatpush1.msra.mxu0 0.0
    %1727 = vmatprep.subr.mxu0 0.0
    %1728 = vmatpush1.msra.mxu0 0.0
    %1729 = vmatprep.subr.mxu0 0.0
    %1730 = vmatpush1.msra.mxu0 0.0
    %1731 = vmatprep.subr.mxu0 0.0
    %1732 = vmatpush1.msra.mxu0 0.0
    %1733 = vmatprep.subr.mxu0 0.0
    %1734 = vmatpush1.msra.mxu0 0.0
    %1735 = vmatprep.subr.mxu0 0.0
    %1736 = vmatpush1.msra.mxu0 0.0
    %1737 = vmatprep.mubr.f32.mxu0 0.0
    %1738 = vmatmul.mubr.f32.gmra.mrb[0].mxu0 %v1669
    %v1739 = vpop.f32.mrb[0].mxu0
    %v1740 = vadd.f32 0.0, %v1739
    %v1741 = vpop.f32.mrb[0].mxu0
    %1742 = vdwg.mxu0
    %v1744 = vsel %vm1292, %v1290, 0
    %v1746 = vsel %vm193, %v599, 0
    %1748 = vmatprep.subr.mxu0 0.0
    %1749 = vmatpush1.msra.mxu0 %v1746
    %1750 = vmatprep.subr.mxu0 0.0
    %1751 = vmatpush1.msra.mxu0 0.0
    %1752 = vmatprep.subr.mxu0 0.0
    %1753 = vmatpush1.msra.mxu0 0.0
    %1754 = vmatprep.subr.mxu0 0.0
    %1755 = vmatpush1.msra.mxu0 0.0
    %1756 = vmatprep.subr.mxu0 0.0
    %1757 = vmatpush1.msra.mxu0 0.0
    %1758 = vmatprep.subr.mxu0 0.0
    %1759 = vmatpush1.msra.mxu0 0.0
    %1760 = vmatprep.subr.mxu0 0.0
    %1761 = vmatpush1.msra.mxu0 0.0
    %1762 = vmatprep.subr.mxu0 0.0
    %1763 = vmatpush1.msra.mxu0 0.0
    %1764 = vmatprep.subr.mxu0 0.0
    %1765 = vmatpush1.msra.mxu0 0.0
    %1766 = vmatprep.subr.mxu0 0.0
    %1767 = vmatpush1.msra.mxu0 0.0
    %1768 = vmatprep.subr.mxu0 0.0
    %1769 = vmatpush1.msra.mxu0 0.0
    %1770 = vmatprep.subr.mxu0 0.0
    %1771 = vmatpush1.msra.mxu0 0.0
    %1772 = vmatprep.subr.mxu0 0.0
    %1773 = vmatpush1.msra.mxu0 0.0
    %1774 = vmatprep.subr.mxu0 0.0
    %1775 = vmatpush1.msra.mxu0 0.0
    %1776 = vmatprep.subr.mxu0 0.0
    %1777 = vmatpush1.msra.mxu0 0.0
    %1778 = vmatprep.subr.mxu0 0.0
    %1779 = vmatpush1.msra.mxu0 0.0
    %1780 = vmatprep.subr.mxu0 0.0
    %1781 = vmatpush1.msra.mxu0 0.0
    %1782 = vmatprep.subr.mxu0 0.0
    %1783 = vmatpush1.msra.mxu0 0.0
    %1784 = vmatprep.subr.mxu0 0.0
    %1785 = vmatpush1.msra.mxu0 0.0
    %1786 = vmatprep.subr.mxu0 0.0
    %1787 = vmatpush1.msra.mxu0 0.0
    %1788 = vmatprep.subr.mxu0 0.0
    %1789 = vmatpush1.msra.mxu0 0.0
    %1790 = vmatprep.subr.mxu0 0.0
    %1791 = vmatpush1.msra.mxu0 0.0
    %1792 = vmatprep.subr.mxu0 0.0
    %1793 = vmatpush1.msra.mxu0 0.0
    %1794 = vmatprep.subr.mxu0 0.0
    %1795 = vmatpush1.msra.mxu0 0.0
    %1796 = vmatprep.subr.mxu0 0.0
    %1797 = vmatpush1.msra.mxu0 0.0
    %1798 = vmatprep.subr.mxu0 0.0
    %1799 = vmatpush1.msra.mxu0 0.0
    %1800 = vmatprep.subr.mxu0 0.0
    %1801 = vmatpush1.msra.mxu0 0.0
    %1802 = vmatprep.subr.mxu0 0.0
    %1803 = vmatpush1.msra.mxu0 0.0
    %1804 = vmatprep.subr.mxu0 0.0
    %1805 = vmatpush1.msra.mxu0 0.0
    %1806 = vmatprep.subr.mxu0 0.0
    %1807 = vmatpush1.msra.mxu0 0.0
    %1808 = vmatprep.subr.mxu0 0.0
    %1809 = vmatpush1.msra.mxu0 0.0
    %1810 = vmatprep.subr.mxu0 0.0
    %1811 = vmatpush1.msra.mxu0 0.0
    %1812 = vmatprep.mubr.f32.mxu0 0.0
    %1813 = vmatmul.mubr.f32.gmra.mrb[0].mxu0 %v1744
    %v1814 = vpop.f32.mrb[0].mxu0
    %v1815 = vadd.f32 0.0, %v1814
    %v1816 = vpop.f32.mrb[0].mxu0
    %1817 = vdwg.mxu0
    %v1819 = vsel %vm1292, %v1291, 0
    %v1821 = vsel %vm193, %v601, 0
    %1823 = vmatprep.subr.mxu0 0.0
    %1824 = vmatpush1.msra.mxu0 %v1821
    %1825 = vmatprep.subr.mxu0 0.0
    %1826 = vmatpush1.msra.mxu0 0.0
    %1827 = vmatprep.subr.mxu0 0.0
    %1828 = vmatpush1.msra.mxu0 0.0
    %1829 = vmatprep.subr.mxu0 0.0
    %1830 = vmatpush1.msra.mxu0 0.0
    %1831 = vmatprep.subr.mxu0 0.0
    %1832 = vmatpush1.msra.mxu0 0.0
    %1833 = vmatprep.subr.mxu0 0.0
    %1834 = vmatpush1.msra.mxu0 0.0
    %1835 = vmatprep.subr.mxu0 0.0
    %1836 = vmatpush1.msra.mxu0 0.0
    %1837 = vmatprep.subr.mxu0 0.0
    %1838 = vmatpush1.msra.mxu0 0.0
    %1839 = vmatprep.subr.mxu0 0.0
    %1840 = vmatpush1.msra.mxu0 0.0
    %1841 = vmatprep.subr.mxu0 0.0
    %1842 = vmatpush1.msra.mxu0 0.0
    %1843 = vmatprep.subr.mxu0 0.0
    %1844 = vmatpush1.msra.mxu0 0.0
    %1845 = vmatprep.subr.mxu0 0.0
    %1846 = vmatpush1.msra.mxu0 0.0
    %1847 = vmatprep.subr.mxu0 0.0
    %1848 = vmatpush1.msra.mxu0 0.0
    %1849 = vmatprep.subr.mxu0 0.0
    %1850 = vmatpush1.msra.mxu0 0.0
    %1851 = vmatprep.subr.mxu0 0.0
    %1852 = vmatpush1.msra.mxu0 0.0
    %1853 = vmatprep.subr.mxu0 0.0
    %1854 = vmatpush1.msra.mxu0 0.0
    %1855 = vmatprep.subr.mxu0 0.0
    %1856 = vmatpush1.msra.mxu0 0.0
    %1857 = vmatprep.subr.mxu0 0.0
    %1858 = vmatpush1.msra.mxu0 0.0
    %1859 = vmatprep.subr.mxu0 0.0
    %1860 = vmatpush1.msra.mxu0 0.0
    %1861 = vmatprep.subr.mxu0 0.0
    %1862 = vmatpush1.msra.mxu0 0.0
    %1863 = vmatprep.subr.mxu0 0.0
    %1864 = vmatpush1.msra.mxu0 0.0
    %1865 = vmatprep.subr.mxu0 0.0
    %1866 = vmatpush1.msra.mxu0 0.0
    %1867 = vmatprep.subr.mxu0 0.0
    %1868 = vmatpush1.msra.mxu0 0.0
    %1869 = vmatprep.subr.mxu0 0.0
    %1870 = vmatpush1.msra.mxu0 0.0
    %1871 = vmatprep.subr.mxu0 0.0
    %1872 = vmatpush1.msra.mxu0 0.0
    %1873 = vmatprep.subr.mxu0 0.0
    %1874 = vmatpush1.msra.mxu0 0.0
    %1875 = vmatprep.subr.mxu0 0.0
    %1876 = vmatpush1.msra.mxu0 0.0
    %1877 = vmatprep.subr.mxu0 0.0
    %1878 = vmatpush1.msra.mxu0 0.0
    %1879 = vmatprep.subr.mxu0 0.0
    %1880 = vmatpush1.msra.mxu0 0.0
    %1881 = vmatprep.subr.mxu0 0.0
    %1882 = vmatpush1.msra.mxu0 0.0
    %1883 = vmatprep.subr.mxu0 0.0
    %1884 = vmatpush1.msra.mxu0 0.0
    %1885 = vmatprep.subr.mxu0 0.0
    %1886 = vmatpush1.msra.mxu0 0.0
    %1887 = vmatprep.mubr.f32.mxu0 0.0
    %1888 = vmatmul.mubr.f32.gmra.mrb[0].mxu0 %v1819
    %v1889 = vpop.f32.mrb[0].mxu0
    %v1890 = vadd.f32 0.0, %v1889
    %v1891 = vpop.f32.mrb[0].mxu0
    %1892 = vdwg.mxu0
    %1894 = vrot.lane.b32.xlu0 %v1440, 8
    %v1895 = vpop.permute.xlu0 %1894
    %1898 = vrot.lane.b32.xlu0 %v1515, 16
    %v1899 = vpop.permute.xlu0 %1898
    %1902 = vrot.lane.b32.xlu0 %v1590, 24
    %v1903 = vpop.permute.xlu0 %1902
    %v1905 = vsel %vm602, %v1365, %v1895
    %vm1906 = vcmask 130048
    %v1907 = vsel %vm1906, %v1905, %v1899
    %vm1908 = vcmask 195584
    %v1909 = vsel %vm1908, %v1907, %v1903
    %1911 = vrot.lane.b32.xlu0 %v1740, 8
    %v1912 = vpop.permute.xlu0 %1911
    %1915 = vrot.lane.b32.xlu0 %v1815, 16
    %v1916 = vpop.permute.xlu0 %1915
    %1919 = vrot.lane.b32.xlu0 %v1890, 24
    %v1920 = vpop.permute.xlu0 %1919
    %v1922 = vsel %vm602, %v1665, %v1912
    %v1923 = vsel %vm1906, %v1922, %v1916
    %v1924 = vsel %vm1908, %v1923, %v1920
    %v1926 = vrot.slane %v1924, 3
    %v1928 = vsel %vm193, %v1909, %v1926
    %v1929 = vld [vmem:[%s14] sm:$0xff]
    %v1930 = vld [vmem:[%s14 + $0x8] sm:$0xff]
    %v1931 = vld [vmem:[%s14 + $0x10] sm:$0xff]
    %v1932 = vld [vmem:[%s14 + $0x18] sm:$0xff]
    %v1933 = vld [vmem:[%s15] sm:$0x1]
    %v1935 = vlaneseq
    %v1936 = vshrl.u32 %v1935, 7
    %v1937 = vsub.s32 0, %v1936
    %v1938 = vrot.slane %v1933, %v1937
    %v1941 = vsel %vm197, %v1928, 0
    %v1943 = vsel %vm197, %v1926, 0
    %1945 = vmatprep.subr.mxu0 0.0
    %1946 = vmatpush1.msra.mxu0 %v1929
    %1947 = vmatprep.subr.mxu0 0.0
    %1948 = vmatpush1.msra.mxu0 %v1930
    %1949 = vmatprep.subr.mxu0 0.0
    %1950 = vmatpush1.msra.mxu0 %v1931
    %1951 = vmatprep.subr.mxu0 0.0
    %1952 = vmatpush1.msra.mxu0 %v1932
    %1953 = vmatprep.subr.mxu0 0.0
    %1954 = vmatpush1.msra.mxu0 0.0
    %1955 = vmatprep.subr.mxu0 0.0
    %1956 = vmatpush1.msra.mxu0 0.0
    %1957 = vmatprep.subr.mxu0 0.0
    %1958 = vmatpush1.msra.mxu0 0.0
    %1959 = vmatprep.subr.mxu0 0.0
    %1960 = vmatpush1.msra.mxu0 0.0
    %1961 = vmatprep.subr.mxu0 0.0
    %1962 = vmatpush1.msra.mxu0 0.0
    %1963 = vmatprep.subr.mxu0 0.0
    %1964 = vmatpush1.msra.mxu0 0.0
    %1965 = vmatprep.subr.mxu0 0.0
    %1966 = vmatpush1.msra.mxu0 0.0
    %1967 = vmatprep.subr.mxu0 0.0
    %1968 = vmatpush1.msra.mxu0 0.0
    %1969 = vmatprep.subr.mxu0 0.0
    %1970 = vmatpush1.msra.mxu0 0.0
    %1971 = vmatprep.subr.mxu0 0.0
    %1972 = vmatpush1.msra.mxu0 0.0
    %1973 = vmatprep.subr.mxu0 0.0
    %1974 = vmatpush1.msra.mxu0 0.0
    %1975 = vmatprep.subr.mxu0 0.0
    %1976 = vmatpush1.msra.mxu0 0.0
    %1977 = vmatprep.subr.mxu0 0.0
    %1978 = vmatpush1.msra.mxu0 0.0
    %1979 = vmatprep.subr.mxu0 0.0
    %1980 = vmatpush1.msra.mxu0 0.0
    %1981 = vmatprep.subr.mxu0 0.0
    %1982 = vmatpush1.msra.mxu0 0.0
    %1983 = vmatprep.subr.mxu0 0.0
    %1984 = vmatpush1.msra.mxu0 0.0
    %1985 = vmatprep.subr.mxu0 0.0
    %1986 = vmatpush1.msra.mxu0 0.0
    %1987 = vmatprep.subr.mxu0 0.0
    %1988 = vmatpush1.msra.mxu0 0.0
    %1989 = vmatprep.subr.mxu0 0.0
    %1990 = vmatpush1.msra.mxu0 0.0
    %1991 = vmatprep.subr.mxu0 0.0
    %1992 = vmatpush1.msra.mxu0 0.0
    %1993 = vmatprep.subr.mxu0 0.0
    %1994 = vmatpush1.msra.mxu0 0.0
    %1995 = vmatprep.subr.mxu0 0.0
    %1996 = vmatpush1.msra.mxu0 0.0
    %1997 = vmatprep.subr.mxu0 0.0
    %1998 = vmatpush1.msra.mxu0 0.0
    %1999 = vmatprep.subr.mxu0 0.0
    %2000 = vmatpush1.msra.mxu0 0.0
    %2001 = vmatprep.subr.mxu0 0.0
    %2002 = vmatpush1.msra.mxu0 0.0
    %2003 = vmatprep.subr.mxu0 0.0
    %2004 = vmatpush1.msra.mxu0 0.0
    %2005 = vmatprep.subr.mxu0 0.0
    %2006 = vmatpush1.msra.mxu0 0.0
    %2007 = vmatprep.subr.mxu0 0.0
    %2008 = vmatpush1.msra.mxu0 0.0
    %2009 = vmatprep.mubr.f32.mxu0 0.0
    %2010 = vmatmul.mubr.f32.gmra.mrb[0].mxu0 %v1941
    %v2011 = vpop.f32.mrb[0].mxu0
    %v2012 = vadd.f32 %v1938, %v2011
    %v2013 = vpop.f32.mrb[0].mxu0
    %2014 = vmatprep.mubr.f32.mxu0 0.0
    %2015 = vmatmul.mubr.f32.gmra.mrb[0].mxu0 %v1943
    %v2016 = vpop.f32.mrb[0].mxu0
    %v2017 = vadd.f32 %v1938, %v2016
    %v2018 = vpop.f32.mrb[0].mxu0
    %2019 = vdwg.mxu0
    %v2020 = vadd.f32 %v240, %v2012
    %v2021 = vadd.f32 %v241, %v2017
    %v2022 = vld [vmem:[%s16] sm:$0x1]
    %v2023 = vld [vmem:[%s17] sm:$0x1]
    %v2024 = vsel %vm197, %v2020, 0.0
    %2025 = vadd.xlane.f32.xlu0 %v2024
    %v2026 = vpop.xlane.xlu0 %2025
    %v2027 = vsel %vm201, %v2021, 0.0
    %2028 = vadd.xlane.f32.xlu0 %v2027
    %v2029 = vpop.xlane.xlu0 %2028
    %v2030 = vmul.f32 %v2026, %v205
    %v2031 = vmul.f32 %v2029, %v205
    %v2032 = vsub.f32 %v2020, %v2030
    %v2033 = vsub.f32 %v2021, %v2031
    %v2034 = vmul.f32 %v2032, %v2032
    %v2035 = vmul.f32 %v2033, %v2033
    %v2036 = vsel %vm197, %v2034, 0.0
    %2037 = vadd.xlane.f32.xlu0 %v2036
    %v2038 = vpop.xlane.xlu0 %2037
    %v2039 = vsel %vm201, %v2035, 0.0
    %2040 = vadd.xlane.f32.xlu0 %v2039
    %v2041 = vpop.xlane.xlu0 %2040
    %v2042 = vmul.f32 %v2038, %v205
    %v2043 = vmul.f32 %v2041, %v205
    %v2044 = vadd.f32 %v2042, 1e-05
    %v2045 = vadd.f32 %v2043, 1e-05
    %v2046 = vrsqrt.pop %v2044
    %v2047 = vrsqrt.pop %v2045
    %v2048 = vmul.f32 %v2032, %v2046
    %v2049 = vmul.f32 %v2033, %v2047
    %v2051 = vlaneseq
    %v2052 = vshrl.u32 %v2051, 7
    %v2053 = vsub.s32 0, %v2052
    %v2054 = vrot.slane %v2022, %v2053
    %v2056 = vmul.f32 %v2048, %v2054
    %v2057 = vmul.f32 %v2049, %v2054
    %v2059 = vlaneseq
    %v2060 = vshrl.u32 %v2059, 7
    %v2061 = vsub.s32 0, %v2060
    %v2062 = vrot.slane %v2023, %v2061
    %v2064 = vadd.f32 %v2056, %v2062
    %v2065 = vadd.f32 %v2057, %v2062
    %v2066 = vld [vmem:[%s18] sm:$0xff]
    %v2067 = vld [vmem:[%s18 + $0x8] sm:$0xff]
    %v2068 = vld [vmem:[%s18 + $0x10] sm:$0xff]
    %v2069 = vld [vmem:[%s18 + $0x18] sm:$0xff]
    %v2070 = vld [vmem:[%s19] sm:$0x1]
    %v2072 = vlaneseq
    %v2073 = vshrl.u32 %v2072, 7
    %v2074 = vsub.s32 0, %v2073
    %v2075 = vrot.slane %v2070, %v2074
    %v2078 = vsel %vm197, %v2064, 0
    %v2081 = vsel %vm197, %v2065, 0
    %2083 = vmatprep.subr.mxu0 0.0
    %2084 = vmatpush1.msra.mxu0 %v2066
    %2085 = vmatprep.subr.mxu0 0.0
    %2086 = vmatpush1.msra.mxu0 %v2067
    %2087 = vmatprep.subr.mxu0 0.0
    %2088 = vmatpush1.msra.mxu0 %v2068
    %2089 = vmatprep.subr.mxu0 0.0
    %2090 = vmatpush1.msra.mxu0 %v2069
    %2091 = vmatprep.subr.mxu0 0.0
    %2092 = vmatpush1.msra.mxu0 0.0
    %2093 = vmatprep.subr.mxu0 0.0
    %2094 = vmatpush1.msra.mxu0 0.0
    %2095 = vmatprep.subr.mxu0 0.0
    %2096 = vmatpush1.msra.mxu0 0.0
    %2097 = vmatprep.subr.mxu0 0.0
    %2098 = vmatpush1.msra.mxu0 0.0
    %2099 = vmatprep.subr.mxu0 0.0
    %2100 = vmatpush1.msra.mxu0 0.0
    %2101 = vmatprep.subr.mxu0 0.0
    %2102 = vmatpush1.msra.mxu0 0.0
    %2103 = vmatprep.subr.mxu0 0.0
    %2104 = vmatpush1.msra.mxu0 0.0
    %2105 = vmatprep.subr.mxu0 0.0
    %2106 = vmatpush1.msra.mxu0 0.0
    %2107 = vmatprep.subr.mxu0 0.0
    %2108 = vmatpush1.msra.mxu0 0.0
    %2109 = vmatprep.subr.mxu0 0.0
    %2110 = vmatpush1.msra.mxu0 0.0
    %2111 = vmatprep.subr.mxu0 0.0
    %2112 = vmatpush1.msra.mxu0 0.0
    %2113 = vmatprep.subr.mxu0 0.0
    %2114 = vmatpush1.msra.mxu0 0.0
    %2115 = vmatprep.subr.mxu0 0.0
    %2116 = vmatpush1.msra.mxu0 0.0
    %2117 = vmatprep.subr.mxu0 0.0
    %2118 = vmatpush1.msra.mxu0 0.0
    %2119 = vmatprep.subr.mxu0 0.0
    %2120 = vmatpush1.msra.mxu0 0.0
    %2121 = vmatprep.subr.mxu0 0.0
    %2122 = vmatpush1.msra.mxu0 0.0
    %2123 = vmatprep.subr.mxu0 0.0
    %2124 = vmatpush1.msra.mxu0 0.0
    %2125 = vmatprep.subr.mxu0 0.0
    %2126 = vmatpush1.msra.mxu0 0.0
    %2127 = vmatprep.subr.mxu0 0.0
    %2128 = vmatpush1.msra.mxu0 0.0
    %2129 = vmatprep.subr.mxu0 0.0
    %2130 = vmatpush1.msra.mxu0 0.0
    %2131 = vmatprep.subr.mxu0 0.0
    %2132 = vmatpush1.msra.mxu0 0.0
    %2133 = vmatprep.subr.mxu0 0.0
    %2134 = vmatpush1.msra.mxu0 0.0
    %2135 = vmatprep.subr.mxu0 0.0
    %2136 = vmatpush1.msra.mxu0 0.0
    %2137 = vmatprep.subr.mxu0 0.0
    %2138 = vmatpush1.msra.mxu0 0.0
    %2139 = vmatprep.subr.mxu0 0.0
    %2140 = vmatpush1.msra.mxu0 0.0
    %2141 = vmatprep.subr.mxu0 0.0
    %2142 = vmatpush1.msra.mxu0 0.0
    %2143 = vmatprep.subr.mxu0 0.0
    %2144 = vmatpush1.msra.mxu0 0.0
    %2145 = vmatprep.subr.mxu0 0.0
    %2146 = vmatpush1.msra.mxu0 0.0
    %2147 = vmatprep.mubr.f32.mxu0 0.0
    %2148 = vmatmul.mubr.f32.gmra.mrb[0].mxu0 %v2078
    %v2149 = vpop.f32.mrb[0].mxu0
    %v2150 = vadd.f32 %v2075, %v2149
    %v2151 = vpop.f32.mrb[0].mxu0
    %2152 = vmatprep.mubr.f32.mxu0 0.0
    %2153 = vmatmul.mubr.f32.gmra.mrb[0].mxu0 %v2081
    %v2154 = vpop.f32.mrb[0].mxu0
    %v2155 = vadd.f32 %v2075, %v2154
    %v2156 = vpop.f32.mrb[0].mxu0
    %2157 = vdwg.mxu0
    %v2158 = vmul.f32 %v2150, 1.702
    %v2159 = vmul.f32 %v2155, 1.702
    %v2160 = vxor.u32 %v2158, 2147483648
    %v2161 = vxor.u32 %v2159, 2147483648
    %v2162 = vmul.f32 %v2160, 1.442695
    %v2163 = vpow.pop %v2162
    %v2164 = vmul.f32 %v2161, 1.442695
    %v2165 = vpow.pop %v2164
    %v2166 = vadd.f32 %v2163, 1.0
    %v2167 = vadd.f32 %v2165, 1.0
    %v2168 = vrcp.pop %v2166
    %v2169 = vmul.f32 1.0, %v2168
    %v2170 = vrcp.pop %v2167
    %v2171 = vmul.f32 1.0, %v2170
    %v2172 = vmul.f32 %v2150, %v2169
    %v2173 = vmul.f32 %v2155, %v2171
    %v2174 = vld [vmem:[%s20] sm:$0xff]
    %v2175 = vld [vmem:[%s20 + $0x8] sm:$0xff]
    %v2176 = vld [vmem:[%s20 + $0x10] sm:$0xff]
    %v2177 = vld [vmem:[%s20 + $0x18] sm:$0xff]
    %v2178 = vld [vmem:[%s20 + $0x20] sm:$0xff]
    %v2179 = vld [vmem:[%s20 + $0x28] sm:$0xff]
    %v2180 = vld [vmem:[%s20 + $0x30] sm:$0xff]
    %v2181 = vld [vmem:[%s20 + $0x38] sm:$0xff]
    %v2182 = vld [vmem:[%s20 + $0x40] sm:$0xff]
    %v2183 = vld [vmem:[%s20 + $0x48] sm:$0xff]
    %v2184 = vld [vmem:[%s20 + $0x50] sm:$0xff]
    %v2185 = vld [vmem:[%s20 + $0x58] sm:$0xff]
    %v2186 = vld [vmem:[%s20 + $0x60] sm:$0xff]
    %v2187 = vld [vmem:[%s20 + $0x68] sm:$0xff]
    %v2188 = vld [vmem:[%s20 + $0x70] sm:$0xff]
    %v2189 = vld [vmem:[%s20 + $0x78] sm:$0xff]
    %v2190 = vld [vmem:[%s21] sm:$0x1]
    %v2192 = vlaneseq
    %v2193 = vshrl.u32 %v2192, 7
    %v2194 = vsub.s32 0, %v2193
    %v2195 = vrot.slane %v2190, %v2194
    %2197 = vmatprep.subr.mxu0 0.0
    %2198 = vmatpush1.msra.mxu0 %v2174
    %2199 = vmatprep.subr.mxu0 0.0
    %2200 = vmatpush1.msra.mxu0 %v2175
    %2201 = vmatprep.subr.mxu0 0.0
    %2202 = vmatpush1.msra.mxu0 %v2176
    %2203 = vmatprep.subr.mxu0 0.0
    %2204 = vmatpush1.msra.mxu0 %v2177
    %2205 = vmatprep.subr.mxu0 0.0
    %2206 = vmatpush1.msra.mxu0 %v2178
    %2207 = vmatprep.subr.mxu0 0.0
    %2208 = vmatpush1.msra.mxu0 %v2179
    %2209 = vmatprep.subr.mxu0 0.0
    %2210 = vmatpush1.msra.mxu0 %v2180
    %2211 = vmatprep.subr.mxu0 0.0
    %2212 = vmatpush1.msra.mxu0 %v2181
    %2213 = vmatprep.subr.mxu0 0.0
    %2214 = vmatpush1.msra.mxu0 %v2182
    %2215 = vmatprep.subr.mxu0 0.0
    %2216 = vmatpush1.msra.mxu0 %v2183
    %2217 = vmatprep.subr.mxu0 0.0
    %2218 = vmatpush1.msra.mxu0 %v2184
    %2219 = vmatprep.subr.mxu0 0.0
    %2220 = vmatpush1.msra.mxu0 %v2185
    %2221 = vmatprep.subr.mxu0 0.0
    %2222 = vmatpush1.msra.mxu0 %v2186
    %2223 = vmatprep.subr.mxu0 0.0
    %2224 = vmatpush1.msra.mxu0 %v2187
    %2225 = vmatprep.subr.mxu0 0.0
    %2226 = vmatpush1.msra.mxu0 %v2188
    %2227 = vmatprep.subr.mxu0 0.0
    %2228 = vmatpush1.msra.mxu0 %v2189
    %2229 = vmatprep.subr.mxu0 0.0
    %2230 = vmatpush1.msra.mxu0 0.0
    %2231 = vmatprep.subr.mxu0 0.0
    %2232 = vmatpush1.msra.mxu0 0.0
    %2233 = vmatprep.subr.mxu0 0.0
    %2234 = vmatpush1.msra.mxu0 0.0
    %2235 = vmatprep.subr.mxu0 0.0
    %2236 = vmatpush1.msra.mxu0 0.0
    %2237 = vmatprep.subr.mxu0 0.0
    %2238 = vmatpush1.msra.mxu0 0.0
    %2239 = vmatprep.subr.mxu0 0.0
    %2240 = vmatpush1.msra.mxu0 0.0
    %2241 = vmatprep.subr.mxu0 0.0
    %2242 = vmatpush1.msra.mxu0 0.0
    %2243 = vmatprep.subr.mxu0 0.0
    %2244 = vmatpush1.msra.mxu0 0.0
    %2245 = vmatprep.subr.mxu0 0.0
    %2246 = vmatpush1.msra.mxu0 0.0
    %2247 = vmatprep.subr.mxu0 0.0
    %2248 = vmatpush1.msra.mxu0 0.0
    %2249 = vmatprep.subr.mxu0 0.0
    %2250 = vmatpush1.msra.mxu0 0.0
    %2251 = vmatprep.subr.mxu0 0.0
    %2252 = vmatpush1.msra.mxu0 0.0
    %2253 = vmatprep.subr.mxu0 0.0
    %2254 = vmatpush1.msra.mxu0 0.0
    %2255 = vmatprep.subr.mxu0 0.0
    %2256 = vmatpush1.msra.mxu0 0.0
    %2257 = vmatprep.subr.mxu0 0.0
    %2258 = vmatpush1.msra.mxu0 0.0
    %2259 = vmatprep.subr.mxu0 0.0
    %2260 = vmatpush1.msra.mxu0 0.0
    %2261 = vmatprep.mubr.f32.mxu0 0.0
    %2262 = vmatmul.mubr.f32.gmra.mrb[0].mxu0 %v2172
    %v2263 = vpop.f32.mrb[0].mxu0
    %v2264 = vadd.f32 %v2195, %v2263
    %v2265 = vpop.f32.mrb[0].mxu0
    %2266 = vmatprep.mubr.f32.mxu0 0.0
    %2267 = vmatmul.mubr.f32.gmra.mrb[0].mxu0 %v2173
    %v2268 = vpop.f32.mrb[0].mxu0
    %v2269 = vadd.f32 %v2195, %v2268
    %v2270 = vpop.f32.mrb[0].mxu0
    %2271 = vdwg.mxu0
    %v2272 = vadd.f32 %v2020, %v2264
    %v2273 = vadd.f32 %v2021, %v2269
    %s2274 = scalar_lea.vmem %s6, 1
    %v2275 = vld [vmem:[%s2274] sm:$0x1]
    %s2276 = scalar_lea.vmem %s7, 1
    %v2277 = vld [vmem:[%s2276] sm:$0x1]
    %v2278 = vsel %vm197, %v2272, 0.0
    %2279 = vadd.xlane.f32.xlu0 %v2278
    %v2280 = vpop.xlane.xlu0 %2279
    %v2281 = vsel %vm201, %v2273, 0.0
    %2282 = vadd.xlane.f32.xlu0 %v2281
    %v2283 = vpop.xlane.xlu0 %2282
    %v2284 = vmul.f32 %v2280, %v205
    %v2285 = vmul.f32 %v2283, %v205
    %v2286 = vsub.f32 %v2272, %v2284
    %v2287 = vsub.f32 %v2273, %v2285
    %v2288 = vmul.f32 %v2286, %v2286
    %v2289 = vmul.f32 %v2287, %v2287
    %v2290 = vsel %vm197, %v2288, 0.0
    %2291 = vadd.xlane.f32.xlu0 %v2290
    %v2292 = vpop.xlane.xlu0 %2291
    %v2293 = vsel %vm201, %v2289, 0.0
    %2294 = vadd.xlane.f32.xlu0 %v2293
    %v2295 = vpop.xlane.xlu0 %2294
    %v2296 = vmul.f32 %v2292, %v205
    %v2297 = vmul.f32 %v2295, %v205
    %v2298 = vadd.f32 %v2296, 1e-05
    %v2299 = vadd.f32 %v2297, 1e-05
    %v2300 = vrsqrt.pop %v2298
    %v2301 = vrsqrt.pop %v2299
    %v2302 = vmul.f32 %v2286, %v2300
    %v2303 = vmul.f32 %v2287, %v2301
    %v2305 = vlaneseq
    %v2306 = vshrl.u32 %v2305, 7
    %v2307 = vsub.s32 0, %v2306
    %v2308 = vrot.slane %v2275, %v2307
    %v2310 = vmul.f32 %v2302, %v2308
    %v2311 = vmul.f32 %v2303, %v2308
    %v2313 = vlaneseq
    %v2314 = vshrl.u32 %v2313, 7
    %v2315 = vsub.s32 0, %v2314
    %v2316 = vrot.slane %v2277, %v2315
    %v2318 = vadd.f32 %v2310, %v2316
    %v2319 = vadd.f32 %v2311, %v2316
    %s2320 = scalar_lea.vmem %s8, 32
    %v2321 = vld [vmem:[%s2320] sm:$0xff]
    %v2322 = vld [vmem:[%s2320 + $0x8] sm:$0xff]
    %v2323 = vld [vmem:[%s2320 + $0x10] sm:$0xff]
    %v2324 = vld [vmem:[%s2320 + $0x18] sm:$0xff]
    %s2325 = scalar_lea.vmem %s9, 1
    %v2326 = vld [vmem:[%s2325] sm:$0x1]
    %v2328 = vlaneseq
    %v2329 = vshrl.u32 %v2328, 7
    %v2330 = vsub.s32 0, %v2329
    %v2331 = vrot.slane %v2326, %v2330
    %v2334 = vsel %vm197, %v2318, 0
    %v2337 = vsel %vm197, %v2319, 0
    %2339 = vmatprep.subr.mxu0 0.0
    %2340 = vmatpush1.msra.mxu0 %v2321
    %2341 = vmatprep.subr.mxu0 0.0
    %2342 = vmatpush1.msra.mxu0 %v2322
    %2343 = vmatprep.subr.mxu0 0.0
    %2344 = vmatpush1.msra.mxu0 %v2323
    %2345 = vmatprep.subr.mxu0 0.0
    %2346 = vmatpush1.msra.mxu0 %v2324
    %2347 = vmatprep.subr.mxu0 0.0
    %2348 = vmatpush1.msra.mxu0 0.0
    %2349 = vmatprep.subr.mxu0 0.0
    %2350 = vmatpush1.msra.mxu0 0.0
    %2351 = vmatprep.subr.mxu0 0.0
    %2352 = vmatpush1.msra.mxu0 0.0
    %2353 = vmatprep.subr.mxu0 0.0
    %2354 = vmatpush1.msra.mxu0 0.0
    %2355 = vmatprep.subr.mxu0 0.0
    %2356 = vmatpush1.msra.mxu0 0.0
    %2357 = vmatprep.subr.mxu0 0.0
    %2358 = vmatpush1.msra.mxu0 0.0
    %2359 = vmatprep.subr.mxu0 0.0
    %2360 = vmatpush1.msra.mxu0 0.0
    %2361 = vmatprep.subr.mxu0 0.0
    %2362 = vmatpush1.msra.mxu0 0.0
    %2363 = vmatprep.subr.mxu0 0.0
    %2364 = vmatpush1.msra.mxu0 0.0
    %2365 = vmatprep.subr.mxu0 0.0
    %2366 = vmatpush1.msra.mxu0 0.0
    %2367 = vmatprep.subr.mxu0 0.0
    %2368 = vmatpush1.msra.mxu0 0.0
    %2369 = vmatprep.subr.mxu0 0.0
    %2370 = vmatpush1.msra.mxu0 0.0
    %2371 = vmatprep.subr.mxu0 0.0
    %2372 = vmatpush1.msra.mxu0 0.0
    %2373 = vmatprep.subr.mxu0 0.0
    %2374 = vmatpush1.msra.mxu0 0.0
    %2375 = vmatprep.subr.mxu0 0.0
    %2376 = vmatpush1.msra.mxu0 0.0
    %2377 = vmatprep.subr.mxu0 0.0
    %2378 = vmatpush1.msra.mxu0 0.0
    %2379 = vmatprep.subr.mxu0 0.0
    %2380 = vmatpush1.msra.mxu0 0.0
    %2381 = vmatprep.subr.mxu0 0.0
    %2382 = vmatpush1.msra.mxu0 0.0
    %2383 = vmatprep.subr.mxu0 0.0
    %2384 = vmatpush1.msra.mxu0 0.0
    %2385 = vmatprep.subr.mxu0 0.0
    %2386 = vmatpush1.msra.mxu0 0.0
    %2387 = vmatprep.subr.mxu0 0.0
    %2388 = vmatpush1.msra.mxu0 0.0
    %2389 = vmatprep.subr.mxu0 0.0
    %2390 = vmatpush1.msra.mxu0 0.0
    %2391 = vmatprep.subr.mxu0 0.0
    %2392 = vmatpush1.msra.mxu0 0.0
    %2393 = vmatprep.subr.mxu0 0.0
    %2394 = vmatpush1.msra.mxu0 0.0
    %2395 = vmatprep.subr.mxu0 0.0
    %2396 = vmatpush1.msra.mxu0 0.0
    %2397 = vmatprep.subr.mxu0 0.0
    %2398 = vmatpush1.msra.mxu0 0.0
    %2399 = vmatprep.subr.mxu0 0.0
    %2400 = vmatpush1.msra.mxu0 0.0
    %2401 = vmatprep.subr.mxu0 0.0
    %2402 = vmatpush1.msra.mxu0 0.0
    %2403 = vmatprep.mubr.f32.mxu0 0.0
    %2404 = vmatmul.mubr.f32.gmra.mrb[0].mxu0 %v2334
    %v2405 = vpop.f32.mrb[0].mxu0
    %v2406 = vadd.f32 %v2331, %v2405
    %v2407 = vpop.f32.mrb[0].mxu0
    %2408 = vmatprep.mubr.f32.mxu0 0.0
    %2409 = vmatmul.mubr.f32.gmra.mrb[0].mxu0 %v2337
    %v2410 = vpop.f32.mrb[0].mxu0
    %v2411 = vadd.f32 %v2331, %v2410
    %v2412 = vpop.f32.mrb[0].mxu0
    %2413 = vdwg.mxu0
    %s2414 = scalar_lea.vmem %s10, 32
    %v2415 = vld [vmem:[%s2414] sm:$0xff]
    %v2416 = vld [vmem:[%s2414 + $0x8] sm:$0xff]
    %v2417 = vld [vmem:[%s2414 + $0x10] sm:$0xff]
    %v2418 = vld [vmem:[%s2414 + $0x18] sm:$0xff]
    %s2419 = scalar_lea.vmem %s11, 1
    %v2420 = vld [vmem:[%s2419] sm:$0x1]
    %v2422 = vlaneseq
    %v2423 = vshrl.u32 %v2422, 7
    %v2424 = vsub.s32 0, %v2423
    %v2425 = vrot.slane %v2420, %v2424
    %2427 = vmatprep.subr.mxu0 0.0
    %2428 = vmatpush1.msra.mxu0 %v2415
    %2429 = vmatprep.subr.mxu0 0.0
    %2430 = vmatpush1.msra.mxu0 %v2416
    %2431 = vmatprep.subr.mxu0 0.0
    %2432 = vmatpush1.msra.mxu0 %v2417
    %2433 = vmatprep.subr.mxu0 0.0
    %2434 = vmatpush1.msra.mxu0 %v2418
    %2435 = vmatprep.subr.mxu0 0.0
    %2436 = vmatpush1.msra.mxu0 0.0
    %2437 = vmatprep.subr.mxu0 0.0
    %2438 = vmatpush1.msra.mxu0 0.0
    %2439 = vmatprep.subr.mxu0 0.0
    %2440 = vmatpush1.msra.mxu0 0.0
    %2441 = vmatprep.subr.mxu0 0.0
    %2442 = vmatpush1.msra.mxu0 0.0
    %2443 = vmatprep.subr.mxu0 0.0
    %2444 = vmatpush1.msra.mxu0 0.0
    %2445 = vmatprep.subr.mxu0 0.0
    %2446 = vmatpush1.msra.mxu0 0.0
    %2447 = vmatprep.subr.mxu0 0.0
    %2448 = vmatpush1.msra.mxu0 0.0
    %2449 = vmatprep.subr.mxu0 0.0
    %2450 = vmatpush1.msra.mxu0 0.0
    %2451 = vmatprep.subr.mxu0 0.0
    %2452 = vmatpush1.msra.mxu0 0.0
    %2453 = vmatprep.subr.mxu0 0.0
    %2454 = vmatpush1.msra.mxu0 0.0
    %2455 = vmatprep.subr.mxu0 0.0
    %2456 = vmatpush1.msra.mxu0 0.0
    %2457 = vmatprep.subr.mxu0 0.0
    %2458 = vmatpush1.msra.mxu0 0.0
    %2459 = vmatprep.subr.mxu0 0.0
    %2460 = vmatpush1.msra.mxu0 0.0
    %2461 = vmatprep.subr.mxu0 0.0
    %2462 = vmatpush1.msra.mxu0 0.0
    %2463 = vmatprep.subr.mxu0 0.0
    %2464 = vmatpush1.msra.mxu0 0.0
    %2465 = vmatprep.subr.mxu0 0.0
    %2466 = vmatpush1.msra.mxu0 0.0
    %2467 = vmatprep.subr.mxu0 0.0
    %2468 = vmatpush1.msra.mxu0 0.0
    %2469 = vmatprep.subr.mxu0 0.0
    %2470 = vmatpush1.msra.mxu0 0.0
    %2471 = vmatprep.subr.mxu0 0.0
    %2472 = vmatpush1.msra.mxu0 0.0
    %2473 = vmatprep.subr.mxu0 0.0
    %2474 = vmatpush1.msra.mxu0 0.0
    %2475 = vmatprep.subr.mxu0 0.0
    %2476 = vmatpush1.msra.mxu0 0.0
    %2477 = vmatprep.subr.mxu0 0.0
    %2478 = vmatpush1.msra.mxu0 0.0
    %2479 = vmatprep.subr.mxu0 0.0
    %2480 = vmatpush1.msra.mxu0 0.0
    %2481 = vmatprep.subr.mxu0 0.0
    %2482 = vmatpush1.msra.mxu0 0.0
    %2483 = vmatprep.subr.mxu0 0.0
    %2484 = vmatpush1.msra.mxu0 0.0
    %2485 = vmatprep.subr.mxu0 0.0
    %2486 = vmatpush1.msra.mxu0 0.0
    %2487 = vmatprep.subr.mxu0 0.0
    %2488 = vmatpush1.msra.mxu0 0.0
    %2489 = vmatprep.subr.mxu0 0.0
    %2490 = vmatpush1.msra.mxu0 0.0
    %2491 = vmatprep.mubr.f32.mxu0 0.0
    %2492 = vmatmul.mubr.f32.gmra.mrb[0].mxu0 %v2334
    %v2493 = vpop.f32.mrb[0].mxu0
    %v2494 = vadd.f32 %v2425, %v2493
    %v2495 = vpop.f32.mrb[0].mxu0
    %2496 = vmatprep.mubr.f32.mxu0 0.0
    %2497 = vmatmul.mubr.f32.gmra.mrb[0].mxu0 %v2337
    %v2498 = vpop.f32.mrb[0].mxu0
    %v2499 = vadd.f32 %v2425, %v2498
    %v2500 = vpop.f32.mrb[0].mxu0
    %2501 = vdwg.mxu0
    %s2502 = scalar_lea.vmem %s12, 32
    %v2503 = vld [vmem:[%s2502] sm:$0xff]
    %v2504 = vld [vmem:[%s2502 + $0x8] sm:$0xff]
    %v2505 = vld [vmem:[%s2502 + $0x10] sm:$0xff]
    %v2506 = vld [vmem:[%s2502 + $0x18] sm:$0xff]
    %s2507 = scalar_lea.vmem %s13, 1
    %v2508 = vld [vmem:[%s2507] sm:$0x1]
    %v2510 = vlaneseq
    %v2511 = vshrl.u32 %v2510, 7
    %v2512 = vsub.s32 0, %v2511
    %v2513 = vrot.slane %v2508, %v2512
    %2515 = vmatprep.subr.mxu0 0.0
    %2516 = vmatpush1.msra.mxu0 %v2503
    %2517 = vmatprep.subr.mxu0 0.0
    %2518 = vmatpush1.msra.mxu0 %v2504
    %2519 = vmatprep.subr.mxu0 0.0
    %2520 = vmatpush1.msra.mxu0 %v2505
    %2521 = vmatprep.subr.mxu0 0.0
    %2522 = vmatpush1.msra.mxu0 %v2506
    %2523 = vmatprep.subr.mxu0 0.0
    %2524 = vmatpush1.msra.mxu0 0.0
    %2525 = vmatprep.subr.mxu0 0.0
    %2526 = vmatpush1.msra.mxu0 0.0
    %2527 = vmatprep.subr.mxu0 0.0
    %2528 = vmatpush1.msra.mxu0 0.0
    %2529 = vmatprep.subr.mxu0 0.0
    %2530 = vmatpush1.msra.mxu0 0.0
    %2531 = vmatprep.subr.mxu0 0.0
    %2532 = vmatpush1.msra.mxu0 0.0
    %2533 = vmatprep.subr.mxu0 0.0
    %2534 = vmatpush1.msra.mxu0 0.0
    %2535 = vmatprep.subr.mxu0 0.0
    %2536 = vmatpush1.msra.mxu0 0.0
    %2537 = vmatprep.subr.mxu0 0.0
    %2538 = vmatpush1.msra.mxu0 0.0
    %2539 = vmatprep.subr.mxu0 0.0
    %2540 = vmatpush1.msra.mxu0 0.0
    %2541 = vmatprep.subr.mxu0 0.0
    %2542 = vmatpush1.msra.mxu0 0.0
    %2543 = vmatprep.subr.mxu0 0.0
    %2544 = vmatpush1.msra.mxu0 0.0
    %2545 = vmatprep.subr.mxu0 0.0
    %2546 = vmatpush1.msra.mxu0 0.0
    %2547 = vmatprep.subr.mxu0 0.0
    %2548 = vmatpush1.msra.mxu0 0.0
    %2549 = vmatprep.subr.mxu0 0.0
    %2550 = vmatpush1.msra.mxu0 0.0
    %2551 = vmatprep.subr.mxu0 0.0
    %2552 = vmatpush1.msra.mxu0 0.0
    %2553 = vmatprep.subr.mxu0 0.0
    %2554 = vmatpush1.msra.mxu0 0.0
    %2555 = vmatprep.subr.mxu0 0.0
    %2556 = vmatpush1.msra.mxu0 0.0
    %2557 = vmatprep.subr.mxu0 0.0
    %2558 = vmatpush1.msra.mxu0 0.0
    %2559 = vmatprep.subr.mxu0 0.0
    %2560 = vmatpush1.msra.mxu0 0.0
    %2561 = vmatprep.subr.mxu0 0.0
    %2562 = vmatpush1.msra.mxu0 0.0
    %2563 = vmatprep.subr.mxu0 0.0
    %2564 = vmatpush1.msra.mxu0 0.0
    %2565 = vmatprep.subr.mxu0 0.0
    %2566 = vmatpush1.msra.mxu0 0.0
    %2567 = vmatprep.subr.mxu0 0.0
    %2568 = vmatpush1.msra.mxu0 0.0
    %2569 = vmatprep.subr.mxu0 0.0
    %2570 = vmatpush1.msra.mxu0 0.0
    %2571 = vmatprep.subr.mxu0 0.0
    %2572 = vmatpush1.msra.mxu0 0.0
    %2573 = vmatprep.subr.mxu0 0.0
    %2574 = vmatpush1.msra.mxu0 0.0
    %2575 = vmatprep.subr.mxu0 0.0
    %2576 = vmatpush1.msra.mxu0 0.0
    %2577 = vmatprep.subr.mxu0 0.0
    %2578 = vmatpush1.msra.mxu0 0.0
    %2579 = vmatprep.mubr.f32.mxu0 0.0
    %2580 = vmatmul.mubr.f32.gmra.mrb[0].mxu0 %v2334
    %v2581 = vpop.f32.mrb[0].mxu0
    %v2582 = vadd.f32 %v2513, %v2581
    %v2583 = vpop.f32.mrb[0].mxu0
    %2584 = vmatprep.mubr.f32.mxu0 0.0
    %2585 = vmatmul.mubr.f32.gmra.mrb[0].mxu0 %v2337
    %v2586 = vpop.f32.mrb[0].mxu0
    %v2587 = vadd.f32 %v2513, %v2586
    %v2588 = vpop.f32.mrb[0].mxu0
    %2589 = vdwg.mxu0
    %2591 = vrot.lane.b32.xlu0 %v2406, 120
    %v2592 = vpop.permute.xlu0 %2591
    %2593 = vrot.lane.b32.xlu0 %v2406, 112
    %v2594 = vpop.permute.xlu0 %2593
    %2595 = vrot.lane.b32.xlu0 %v2406, 104
    %v2596 = vpop.permute.xlu0 %2595
    %v2598 = vrot.slane %v2406, 5
    %v2599 = vrot.slane %v2411, 5
    %v2600 = vsel %vm558, %v2598, %v2599
    %2601 = vrot.lane.b32.xlu0 %v2600, 120
    %v2602 = vpop.permute.xlu0 %2601
    %2603 = vrot.lane.b32.xlu0 %v2600, 112
    %v2604 = vpop.permute.xlu0 %2603
    %2605 = vrot.lane.b32.xlu0 %v2600, 104
    %v2606 = vpop.permute.xlu0 %2605
    %2608 = vrot.lane.b32.xlu0 %v2494, 120
    %v2609 = vpop.permute.xlu0 %2608
    %2610 = vrot.lane.b32.xlu0 %v2494, 112
    %v2611 = vpop.permute.xlu0 %2610
    %2612 = vrot.lane.b32.xlu0 %v2494, 104
    %v2613 = vpop.permute.xlu0 %2612
    %v2615 = vrot.slane %v2494, 5
    %v2616 = vrot.slane %v2499, 5
    %v2617 = vsel %vm558, %v2615, %v2616
    %2618 = vrot.lane.b32.xlu0 %v2617, 120
    %v2619 = vpop.permute.xlu0 %2618
    %2620 = vrot.lane.b32.xlu0 %v2617, 112
    %v2621 = vpop.permute.xlu0 %2620
    %2622 = vrot.lane.b32.xlu0 %v2617, 104
    %v2623 = vpop.permute.xlu0 %2622
    %2625 = vrot.lane.b32.xlu0 %v2582, 120
    %v2626 = vpop.permute.xlu0 %2625
    %2627 = vrot.lane.b32.xlu0 %v2582, 112
    %v2628 = vpop.permute.xlu0 %2627
    %2629 = vrot.lane.b32.xlu0 %v2582, 104
    %v2630 = vpop.permute.xlu0 %2629
    %v2632 = vrot.slane %v2582, 5
    %v2633 = vrot.slane %v2587, 5
    %v2634 = vsel %vm558, %v2632, %v2633
    %2635 = vrot.lane.b32.xlu0 %v2634, 120
    %v2636 = vpop.permute.xlu0 %2635
    %2637 = vrot.lane.b32.xlu0 %v2634, 112
    %v2638 = vpop.permute.xlu0 %2637
    %2639 = vrot.lane.b32.xlu0 %v2634, 104
    %v2640 = vpop.permute.xlu0 %2639
    %v2641 = vsel %vm602, %v2406, 0
    %v2643 = vsel %vm602, %v2494, 0
    %2645 = vmatprep.subr.mxu0 0.0
    %2646 = vmatpush1.xpose.msra.mxu0 %v2643
    %2647 = vmatprep.subr.mxu0 0.0
    %2648 = vmatpush1.xpose.msra.mxu0 0.0
    %2649 = vmatprep.subr.mxu0 0.0
    %2650 = vmatpush1.xpose.msra.mxu0 0.0
    %2651 = vmatprep.subr.mxu0 0.0
    %2652 = vmatpush1.xpose.msra.mxu0 0.0
    %2653 = vmatprep.subr.mxu0 0.0
    %2654 = vmatpush1.xpose.msra.mxu0 0.0
    %2655 = vmatprep.subr.mxu0 0.0
    %2656 = vmatpush1.xpose.msra.mxu0 0.0
    %2657 = vmatprep.subr.mxu0 0.0
    %2658 = vmatpush1.xpose.msra.mxu0 0.0
    %2659 = vmatprep.subr.mxu0 0.0
    %2660 = vmatpush1.xpose.msra.mxu0 0.0
    %2661 = vmatprep.subr.mxu0 0.0
    %2662 = vmatpush1.xpose.msra.mxu0 0.0
    %2663 = vmatprep.subr.mxu0 0.0
    %2664 = vmatpush1.xpose.msra.mxu0 0.0
    %2665 = vmatprep.subr.mxu0 0.0
    %2666 = vmatpush1.xpose.msra.mxu0 0.0
    %2667 = vmatprep.subr.mxu0 0.0
    %2668 = vmatpush1.xpose.msra.mxu0 0.0
    %2669 = vmatprep.subr.mxu0 0.0
    %2670 = vmatpush1.xpose.msra.mxu0 0.0
    %2671 = vmatprep.subr.mxu0 0.0
    %2672 = vmatpush1.xpose.msra.mxu0 0.0
    %2673 = vmatprep.subr.mxu0 0.0
    %2674 = vmatpush1.xpose.msra.mxu0 0.0
    %2675 = vmatprep.subr.mxu0 0.0
    %2676 = vmatpush1.xpose.msra.mxu0 0.0
    %2677 = vmatprep.subr.mxu0 0.0
    %2678 = vmatpush1.xpose.msra.mxu0 0.0
    %2679 = vmatprep.subr.mxu0 0.0
    %2680 = vmatpush1.xpose.msra.mxu0 0.0
    %2681 = vmatprep.subr.mxu0 0.0
    %2682 = vmatpush1.xpose.msra.mxu0 0.0
    %2683 = vmatprep.subr.mxu0 0.0
    %2684 = vmatpush1.xpose.msra.mxu0 0.0
    %2685 = vmatprep.subr.mxu0 0.0
    %2686 = vmatpush1.xpose.msra.mxu0 0.0
    %2687 = vmatprep.subr.mxu0 0.0
    %2688 = vmatpush1.xpose.msra.mxu0 0.0
    %2689 = vmatprep.subr.mxu0 0.0
    %2690 = vmatpush1.xpose.msra.mxu0 0.0
    %2691 = vmatprep.subr.mxu0 0.0
    %2692 = vmatpush1.xpose.msra.mxu0 0.0
    %2693 = vmatprep.subr.mxu0 0.0
    %2694 = vmatpush1.xpose.msra.mxu0 0.0
    %2695 = vmatprep.subr.mxu0 0.0
    %2696 = vmatpush1.xpose.msra.mxu0 0.0
    %2697 = vmatprep.subr.mxu0 0.0
    %2698 = vmatpush1.xpose.msra.mxu0 0.0
    %2699 = vmatprep.subr.mxu0 0.0
    %2700 = vmatpush1.xpose.msra.mxu0 0.0
    %2701 = vmatprep.subr.mxu0 0.0
    %2702 = vmatpush1.xpose.msra.mxu0 0.0
    %2703 = vmatprep.subr.mxu0 0.0
    %2704 = vmatpush1.xpose.msra.mxu0 0.0
    %2705 = vmatprep.subr.mxu0 0.0
    %2706 = vmatpush1.xpose.msra.mxu0 0.0
    %2707 = vmatprep.subr.mxu0 0.0
    %2708 = vmatpush1.xpose.msra.mxu0 0.0
    %2709 = vmatprep.mubr.f32.mxu0 0.0
    %2710 = vmatmul.mubr.f32.gmra.mrb[0].mxu0 %v2641
    %v2711 = vpop.f32.mrb[0].mxu0
    %v2712 = vadd.f32 0.0, %v2711
    %v2713 = vpop.f32.mrb[0].mxu0
    %2714 = vdwg.mxu0
    %v2715 = vsel %vm602, %v2592, 0
    %v2717 = vsel %vm602, %v2609, 0
    %2719 = vmatprep.subr.mxu0 0.0
    %2720 = vmatpush1.xpose.msra.mxu0 %v2717
    %2721 = vmatprep.subr.mxu0 0.0
    %2722 = vmatpush1.xpose.msra.mxu0 0.0
    %2723 = vmatprep.subr.mxu0 0.0
    %2724 = vmatpush1.xpose.msra.mxu0 0.0
    %2725 = vmatprep.subr.mxu0 0.0
    %2726 = vmatpush1.xpose.msra.mxu0 0.0
    %2727 = vmatprep.subr.mxu0 0.0
    %2728 = vmatpush1.xpose.msra.mxu0 0.0
    %2729 = vmatprep.subr.mxu0 0.0
    %2730 = vmatpush1.xpose.msra.mxu0 0.0
    %2731 = vmatprep.subr.mxu0 0.0
    %2732 = vmatpush1.xpose.msra.mxu0 0.0
    %2733 = vmatprep.subr.mxu0 0.0
    %2734 = vmatpush1.xpose.msra.mxu0 0.0
    %2735 = vmatprep.subr.mxu0 0.0
    %2736 = vmatpush1.xpose.msra.mxu0 0.0
    %2737 = vmatprep.subr.mxu0 0.0
    %2738 = vmatpush1.xpose.msra.mxu0 0.0
    %2739 = vmatprep.subr.mxu0 0.0
    %2740 = vmatpush1.xpose.msra.mxu0 0.0
    %2741 = vmatprep.subr.mxu0 0.0
    %2742 = vmatpush1.xpose.msra.mxu0 0.0
    %2743 = vmatprep.subr.mxu0 0.0
    %2744 = vmatpush1.xpose.msra.mxu0 0.0
    %2745 = vmatprep.subr.mxu0 0.0
    %2746 = vmatpush1.xpose.msra.mxu0 0.0
    %2747 = vmatprep.subr.mxu0 0.0
    %2748 = vmatpush1.xpose.msra.mxu0 0.0
    %2749 = vmatprep.subr.mxu0 0.0
    %2750 = vmatpush1.xpose.msra.mxu0 0.0
    %2751 = vmatprep.subr.mxu0 0.0
    %2752 = vmatpush1.xpose.msra.mxu0 0.0
    %2753 = vmatprep.subr.mxu0 0.0
    %2754 = vmatpush1.xpose.msra.mxu0 0.0
    %2755 = vmatprep.subr.mxu0 0.0
    %2756 = vmatpush1.xpose.msra.mxu0 0.0
    %2757 = vmatprep.subr.mxu0 0.0
    %2758 = vmatpush1.xpose.msra.mxu0 0.0
    %2759 = vmatprep.subr.mxu0 0.0
    %2760 = vmatpush1.xpose.msra.mxu0 0.0
    %2761 = vmatprep.subr.mxu0 0.0
    %2762 = vmatpush1.xpose.msra.mxu0 0.0
    %2763 = vmatprep.subr.mxu0 0.0
    %2764 = vmatpush1.xpose.msra.mxu0 0.0
    %2765 = vmatprep.subr.mxu0 0.0
    %2766 = vmatpush1.xpose.msra.mxu0 0.0
    %2767 = vmatprep.subr.mxu0 0.0
    %2768 = vmatpush1.xpose.msra.mxu0 0.0
    %2769 = vmatprep.subr.mxu0 0.0
    %2770 = vmatpush1.xpose.msra.mxu0 0.0
    %2771 = vmatprep.subr.mxu0 0.0
    %2772 = vmatpush1.xpose.msra.mxu0 0.0
    %2773 = vmatprep.subr.mxu0 0.0
    %2774 = vmatpush1.xpose.msra.mxu0 0.0
    %2775 = vmatprep.subr.mxu0 0.0
    %2776 = vmatpush1.xpose.msra.mxu0 0.0
    %2777 = vmatprep.subr.mxu0 0.0
    %2778 = vmatpush1.xpose.msra.mxu0 0.0
    %2779 = vmatprep.subr.mxu0 0.0
    %2780 = vmatpush1.xpose.msra.mxu0 0.0
    %2781 = vmatprep.subr.mxu0 0.0
    %2782 = vmatpush1.xpose.msra.mxu0 0.0
    %2783 = vmatprep.mubr.f32.mxu0 0.0
    %2784 = vmatmul.mubr.f32.gmra.mrb[0].mxu0 %v2715
    %v2785 = vpop.f32.mrb[0].mxu0
    %v2786 = vadd.f32 0.0, %v2785
    %v2787 = vpop.f32.mrb[0].mxu0
    %2788 = vdwg.mxu0
    %v2789 = vsel %vm602, %v2594, 0
    %v2791 = vsel %vm602, %v2611, 0
    %2793 = vmatprep.subr.mxu0 0.0
    %2794 = vmatpush1.xpose.msra.mxu0 %v2791
    %2795 = vmatprep.subr.mxu0 0.0
    %2796 = vmatpush1.xpose.msra.mxu0 0.0
    %2797 = vmatprep.subr.mxu0 0.0
    %2798 = vmatpush1.xpose.msra.mxu0 0.0
    %2799 = vmatprep.subr.mxu0 0.0
    %2800 = vmatpush1.xpose.msra.mxu0 0.0
    %2801 = vmatprep.subr.mxu0 0.0
    %2802 = vmatpush1.xpose.msra.mxu0 0.0
    %2803 = vmatprep.subr.mxu0 0.0
    %2804 = vmatpush1.xpose.msra.mxu0 0.0
    %2805 = vmatprep.subr.mxu0 0.0
    %2806 = vmatpush1.xpose.msra.mxu0 0.0
    %2807 = vmatprep.subr.mxu0 0.0
    %2808 = vmatpush1.xpose.msra.mxu0 0.0
    %2809 = vmatprep.subr.mxu0 0.0
    %2810 = vmatpush1.xpose.msra.mxu0 0.0
    %2811 = vmatprep.subr.mxu0 0.0
    %2812 = vmatpush1.xpose.msra.mxu0 0.0
    %2813 = vmatprep.subr.mxu0 0.0
    %2814 = vmatpush1.xpose.msra.mxu0 0.0
    %2815 = vmatprep.subr.mxu0 0.0
    %2816 = vmatpush1.xpose.msra.mxu0 0.0
    %2817 = vmatprep.subr.mxu0 0.0
    %2818 = vmatpush1.xpose.msra.mxu0 0.0
    %2819 = vmatprep.subr.mxu0 0.0
    %2820 = vmatpush1.xpose.msra.mxu0 0.0
    %2821 = vmatprep.subr.mxu0 0.0
    %2822 = vmatpush1.xpose.msra.mxu0 0.0
    %2823 = vmatprep.subr.mxu0 0.0
    %2824 = vmatpush1.xpose.msra.mxu0 0.0
    %2825 = vmatprep.subr.mxu0 0.0
    %2826 = vmatpush1.xpose.msra.mxu0 0.0
    %2827 = vmatprep.subr.mxu0 0.0
    %2828 = vmatpush1.xpose.msra.mxu0 0.0
    %2829 = vmatprep.subr.mxu0 0.0
    %2830 = vmatpush1.xpose.msra.mxu0 0.0
    %2831 = vmatprep.subr.mxu0 0.0
    %2832 = vmatpush1.xpose.msra.mxu0 0.0
    %2833 = vmatprep.subr.mxu0 0.0
    %2834 = vmatpush1.xpose.msra.mxu0 0.0
    %2835 = vmatprep.subr.mxu0 0.0
    %2836 = vmatpush1.xpose.msra.mxu0 0.0
    %2837 = vmatprep.subr.mxu0 0.0
    %2838 = vmatpush1.xpose.msra.mxu0 0.0
    %2839 = vmatprep.subr.mxu0 0.0
    %2840 = vmatpush1.xpose.msra.mxu0 0.0
    %2841 = vmatprep.subr.mxu0 0.0
    %2842 = vmatpush1.xpose.msra.mxu0 0.0
    %2843 = vmatprep.subr.mxu0 0.0
    %2844 = vmatpush1.xpose.msra.mxu0 0.0
    %2845 = vmatprep.subr.mxu0 0.0
    %2846 = vmatpush1.xpose.msra.mxu0 0.0
    %2847 = vmatprep.subr.mxu0 0.0
    %2848 = vmatpush1.xpose.msra.mxu0 0.0
    %2849 = vmatprep.subr.mxu0 0.0
    %2850 = vmatpush1.xpose.msra.mxu0 0.0
    %2851 = vmatprep.subr.mxu0 0.0
    %2852 = vmatpush1.xpose.msra.mxu0 0.0
    %2853 = vmatprep.subr.mxu0 0.0
    %2854 = vmatpush1.xpose.msra.mxu0 0.0
    %2855 = vmatprep.subr.mxu0 0.0
    %2856 = vmatpush1.xpose.msra.mxu0 0.0
    %2857 = vmatprep.mubr.f32.mxu0 0.0
    %2858 = vmatmul.mubr.f32.gmra.mrb[0].mxu0 %v2789
    %v2859 = vpop.f32.mrb[0].mxu0
    %v2860 = vadd.f32 0.0, %v2859
    %v2861 = vpop.f32.mrb[0].mxu0
    %2862 = vdwg.mxu0
    %v2863 = vsel %vm602, %v2596, 0
    %v2865 = vsel %vm602, %v2613, 0
    %2867 = vmatprep.subr.mxu0 0.0
    %2868 = vmatpush1.xpose.msra.mxu0 %v2865
    %2869 = vmatprep.subr.mxu0 0.0
    %2870 = vmatpush1.xpose.msra.mxu0 0.0
    %2871 = vmatprep.subr.mxu0 0.0
    %2872 = vmatpush1.xpose.msra.mxu0 0.0
    %2873 = vmatprep.subr.mxu0 0.0
    %2874 = vmatpush1.xpose.msra.mxu0 0.0
    %2875 = vmatprep.subr.mxu0 0.0
    %2876 = vmatpush1.xpose.msra.mxu0 0.0
    %2877 = vmatprep.subr.mxu0 0.0
    %2878 = vmatpush1.xpose.msra.mxu0 0.0
    %2879 = vmatprep.subr.mxu0 0.0
    %2880 = vmatpush1.xpose.msra.mxu0 0.0
    %2881 = vmatprep.subr.mxu0 0.0
    %2882 = vmatpush1.xpose.msra.mxu0 0.0
    %2883 = vmatprep.subr.mxu0 0.0
    %2884 = vmatpush1.xpose.msra.mxu0 0.0
    %2885 = vmatprep.subr.mxu0 0.0
    %2886 = vmatpush1.xpose.msra.mxu0 0.0
    %2887 = vmatprep.subr.mxu0 0.0
    %2888 = vmatpush1.xpose.msra.mxu0 0.0
    %2889 = vmatprep.subr.mxu0 0.0
    %2890 = vmatpush1.xpose.msra.mxu0 0.0
    %2891 = vmatprep.subr.mxu0 0.0
    %2892 = vmatpush1.xpose.msra.mxu0 0.0
    %2893 = vmatprep.subr.mxu0 0.0
    %2894 = vmatpush1.xpose.msra.mxu0 0.0
    %2895 = vmatprep.subr.mxu0 0.0
    %2896 = vmatpush1.xpose.msra.mxu0 0.0
    %2897 = vmatprep.subr.mxu0 0.0
    %2898 = vmatpush1.xpose.msra.mxu0 0.0
    %2899 = vmatprep.subr.mxu0 0.0
    %2900 = vmatpush1.xpose.msra.mxu0 0.0
    %2901 = vmatprep.subr.mxu0 0.0
    %2902 = vmatpush1.xpose.msra.mxu0 0.0
    %2903 = vmatprep.subr.mxu0 0.0
    %2904 = vmatpush1.xpose.msra.mxu0 0.0
    %2905 = vmatprep.subr.mxu0 0.0
    %2906 = vmatpush1.xpose.msra.mxu0 0.0
    %2907 = vmatprep.subr.mxu0 0.0
    %2908 = vmatpush1.xpose.msra.mxu0 0.0
    %2909 = vmatprep.subr.mxu0 0.0
    %2910 = vmatpush1.xpose.msra.mxu0 0.0
    %2911 = vmatprep.subr.mxu0 0.0
    %2912 = vmatpush1.xpose.msra.mxu0 0.0
    %2913 = vmatprep.subr.mxu0 0.0
    %2914 = vmatpush1.xpose.msra.mxu0 0.0
    %2915 = vmatprep.subr.mxu0 0.0
    %2916 = vmatpush1.xpose.msra.mxu0 0.0
    %2917 = vmatprep.subr.mxu0 0.0
    %2918 = vmatpush1.xpose.msra.mxu0 0.0
    %2919 = vmatprep.subr.mxu0 0.0
    %2920 = vmatpush1.xpose.msra.mxu0 0.0
    %2921 = vmatprep.subr.mxu0 0.0
    %2922 = vmatpush1.xpose.msra.mxu0 0.0
    %2923 = vmatprep.subr.mxu0 0.0
    %2924 = vmatpush1.xpose.msra.mxu0 0.0
    %2925 = vmatprep.subr.mxu0 0.0
    %2926 = vmatpush1.xpose.msra.mxu0 0.0
    %2927 = vmatprep.subr.mxu0 0.0
    %2928 = vmatpush1.xpose.msra.mxu0 0.0
    %2929 = vmatprep.subr.mxu0 0.0
    %2930 = vmatpush1.xpose.msra.mxu0 0.0
    %2931 = vmatprep.mubr.f32.mxu0 0.0
    %2932 = vmatmul.mubr.f32.gmra.mrb[0].mxu0 %v2863
    %v2933 = vpop.f32.mrb[0].mxu0
    %v2934 = vadd.f32 0.0, %v2933
    %v2935 = vpop.f32.mrb[0].mxu0
    %2936 = vdwg.mxu0
    %v2937 = vsel %vm602, %v2600, 0
    %v2939 = vsel %vm602, %v2617, 0
    %2941 = vmatprep.subr.mxu0 0.0
    %2942 = vmatpush1.xpose.msra.mxu0 %v2939
    %2943 = vmatprep.subr.mxu0 0.0
    %2944 = vmatpush1.xpose.msra.mxu0 0.0
    %2945 = vmatprep.subr.mxu0 0.0
    %2946 = vmatpush1.xpose.msra.mxu0 0.0
    %2947 = vmatprep.subr.mxu0 0.0
    %2948 = vmatpush1.xpose.msra.mxu0 0.0
    %2949 = vmatprep.subr.mxu0 0.0
    %2950 = vmatpush1.xpose.msra.mxu0 0.0
    %2951 = vmatprep.subr.mxu0 0.0
    %2952 = vmatpush1.xpose.msra.mxu0 0.0
    %2953 = vmatprep.subr.mxu0 0.0
    %2954 = vmatpush1.xpose.msra.mxu0 0.0
    %2955 = vmatprep.subr.mxu0 0.0
    %2956 = vmatpush1.xpose.msra.mxu0 0.0
    %2957 = vmatprep.subr.mxu0 0.0
    %2958 = vmatpush1.xpose.msra.mxu0 0.0
    %2959 = vmatprep.subr.mxu0 0.0
    %2960 = vmatpush1.xpose.msra.mxu0 0.0
    %2961 = vmatprep.subr.mxu0 0.0
    %2962 = vmatpush1.xpose.msra.mxu0 0.0
    %2963 = vmatprep.subr.mxu0 0.0
    %2964 = vmatpush1.xpose.msra.mxu0 0.0
    %2965 = vmatprep.subr.mxu0 0.0
    %2966 = vmatpush1.xpose.msra.mxu0 0.0
    %2967 = vmatprep.subr.mxu0 0.0
    %2968 = vmatpush1.xpose.msra.mxu0 0.0
    %2969 = vmatprep.subr.mxu0 0.0
    %2970 = vmatpush1.xpose.msra.mxu0 0.0
    %2971 = vmatprep.subr.mxu0 0.0
    %2972 = vmatpush1.xpose.msra.mxu0 0.0
    %2973 = vmatprep.subr.mxu0 0.0
    %2974 = vmatpush1.xpose.msra.mxu0 0.0
    %2975 = vmatprep.subr.mxu0 0.0
    %2976 = vmatpush1.xpose.msra.mxu0 0.0
    %2977 = vmatprep.subr.mxu0 0.0
    %2978 = vmatpush1.xpose.msra.mxu0 0.0
    %2979 = vmatprep.subr.mxu0 0.0
    %2980 = vmatpush1.xpose.msra.mxu0 0.0
    %2981 = vmatprep.subr.mxu0 0.0
    %2982 = vmatpush1.xpose.msra.mxu0 0.0
    %2983 = vmatprep.subr.mxu0 0.0
    %2984 = vmatpush1.xpose.msra.mxu0 0.0
    %2985 = vmatprep.subr.mxu0 0.0
    %2986 = vmatpush1.xpose.msra.mxu0 0.0
    %2987 = vmatprep.subr.mxu0 0.0
    %2988 = vmatpush1.xpose.msra.mxu0 0.0
    %2989 = vmatprep.subr.mxu0 0.0
    %2990 = vmatpush1.xpose.msra.mxu0 0.0
    %2991 = vmatprep.subr.mxu0 0.0
    %2992 = vmatpush1.xpose.msra.mxu0 0.0
    %2993 = vmatprep.subr.mxu0 0.0
    %2994 = vmatpush1.xpose.msra.mxu0 0.0
    %2995 = vmatprep.subr.mxu0 0.0
    %2996 = vmatpush1.xpose.msra.mxu0 0.0
    %2997 = vmatprep.subr.mxu0 0.0
    %2998 = vmatpush1.xpose.msra.mxu0 0.0
    %2999 = vmatprep.subr.mxu0 0.0
    %3000 = vmatpush1.xpose.msra.mxu0 0.0
    %3001 = vmatprep.subr.mxu0 0.0
    %3002 = vmatpush1.xpose.msra.mxu0 0.0
    %3003 = vmatprep.subr.mxu0 0.0
    %3004 = vmatpush1.xpose.msra.mxu0 0.0
    %3005 = vmatprep.mubr.f32.mxu0 0.0
    %3006 = vmatmul.mubr.f32.gmra.mrb[0].mxu0 %v2937
    %v3007 = vpop.f32.mrb[0].mxu0
    %v3008 = vadd.f32 0.0, %v3007
    %v3009 = vpop.f32.mrb[0].mxu0
    %3010 = vdwg.mxu0
    %v3011 = vsel %vm602, %v2602, 0
    %v3013 = vsel %vm602, %v2619, 0
    %3015 = vmatprep.subr.mxu0 0.0
    %3016 = vmatpush1.xpose.msra.mxu0 %v3013
    %3017 = vmatprep.subr.mxu0 0.0
    %3018 = vmatpush1.xpose.msra.mxu0 0.0
    %3019 = vmatprep.subr.mxu0 0.0
    %3020 = vmatpush1.xpose.msra.mxu0 0.0
    %3021 = vmatprep.subr.mxu0 0.0
    %3022 = vmatpush1.xpose.msra.mxu0 0.0
    %3023 = vmatprep.subr.mxu0 0.0
    %3024 = vmatpush1.xpose.msra.mxu0 0.0
    %3025 = vmatprep.subr.mxu0 0.0
    %3026 = vmatpush1.xpose.msra.mxu0 0.0
    %3027 = vmatprep.subr.mxu0 0.0
    %3028 = vmatpush1.xpose.msra.mxu0 0.0
    %3029 = vmatprep.subr.mxu0 0.0
    %3030 = vmatpush1.xpose.msra.mxu0 0.0
    %3031 = vmatprep.subr.mxu0 0.0
    %3032 = vmatpush1.xpose.msra.mxu0 0.0
    %3033 = vmatprep.subr.mxu0 0.0
    %3034 = vmatpush1.xpose.msra.mxu0 0.0
    %3035 = vmatprep.subr.mxu0 0.0
    %3036 = vmatpush1.xpose.msra.mxu0 0.0
    %3037 = vmatprep.subr.mxu0 0.0
    %3038 = vmatpush1.xpose.msra.mxu0 0.0
    %3039 = vmatprep.subr.mxu0 0.0
    %3040 = vmatpush1.xpose.msra.mxu0 0.0
    %3041 = vmatprep.subr.mxu0 0.0
    %3042 = vmatpush1.xpose.msra.mxu0 0.0
    %3043 = vmatprep.subr.mxu0 0.0
    %3044 = vmatpush1.xpose.msra.mxu0 0.0
    %3045 = vmatprep.subr.mxu0 0.0
    %3046 = vmatpush1.xpose.msra.mxu0 0.0
    %3047 = vmatprep.subr.mxu0 0.0
    %3048 = vmatpush1.xpose.msra.mxu0 0.0
    %3049 = vmatprep.subr.mxu0 0.0
    %3050 = vmatpush1.xpose.msra.mxu0 0.0
    %3051 = vmatprep.subr.mxu0 0.0
    %3052 = vmatpush1.xpose.msra.mxu0 0.0
    %3053 = vmatprep.subr.mxu0 0.0
    %3054 = vmatpush1.xpose.msra.mxu0 0.0
    %3055 = vmatprep.subr.mxu0 0.0
    %3056 = vmatpush1.xpose.msra.mxu0 0.0
    %3057 = vmatprep.subr.mxu0 0.0
    %3058 = vmatpush1.xpose.msra.mxu0 0.0
    %3059 = vmatprep.subr.mxu0 0.0
    %3060 = vmatpush1.xpose.msra.mxu0 0.0
    %3061 = vmatprep.subr.mxu0 0.0
    %3062 = vmatpush1.xpose.msra.mxu0 0.0
    %3063 = vmatprep.subr.mxu0 0.0
    %3064 = vmatpush1.xpose.msra.mxu0 0.0
    %3065 = vmatprep.subr.mxu0 0.0
    %3066 = vmatpush1.xpose.msra.mxu0 0.0
    %3067 = vmatprep.subr.mxu0 0.0
    %3068 = vmatpush1.xpose.msra.mxu0 0.0
    %3069 = vmatprep.subr.mxu0 0.0
    %3070 = vmatpush1.xpose.msra.mxu0 0.0
    %3071 = vmatprep.subr.mxu0 0.0
    %3072 = vmatpush1.xpose.msra.mxu0 0.0
    %3073 = vmatprep.subr.mxu0 0.0
    %3074 = vmatpush1.xpose.msra.mxu0 0.0
    %3075 = vmatprep.subr.mxu0 0.0
    %3076 = vmatpush1.xpose.msra.mxu0 0.0
    %3077 = vmatprep.subr.mxu0 0.0
    %3078 = vmatpush1.xpose.msra.mxu0 0.0
    %3079 = vmatprep.mubr.f32.mxu0 0.0
    %3080 = vmatmul.mubr.f32.gmra.mrb[0].mxu0 %v3011
    %v3081 = vpop.f32.mrb[0].mxu0
    %v3082 = vadd.f32 0.0, %v3081
    %v3083 = vpop.f32.mrb[0].mxu0
    %3084 = vdwg.mxu0
    %v3085 = vsel %vm602, %v2604, 0
    %v3087 = vsel %vm602, %v2621, 0
    %3089 = vmatprep.subr.mxu0 0.0
    %3090 = vmatpush1.xpose.msra.mxu0 %v3087
    %3091 = vmatprep.subr.mxu0 0.0
    %3092 = vmatpush1.xpose.msra.mxu0 0.0
    %3093 = vmatprep.subr.mxu0 0.0
    %3094 = vmatpush1.xpose.msra.mxu0 0.0
    %3095 = vmatprep.subr.mxu0 0.0
    %3096 = vmatpush1.xpose.msra.mxu0 0.0
    %3097 = vmatprep.subr.mxu0 0.0
    %3098 = vmatpush1.xpose.msra.mxu0 0.0
    %3099 = vmatprep.subr.mxu0 0.0
    %3100 = vmatpush1.xpose.msra.mxu0 0.0
    %3101 = vmatprep.subr.mxu0 0.0
    %3102 = vmatpush1.xpose.msra.mxu0 0.0
    %3103 = vmatprep.subr.mxu0 0.0
    %3104 = vmatpush1.xpose.msra.mxu0 0.0
    %3105 = vmatprep.subr.mxu0 0.0
    %3106 = vmatpush1.xpose.msra.mxu0 0.0
    %3107 = vmatprep.subr.mxu0 0.0
    %3108 = vmatpush1.xpose.msra.mxu0 0.0
    %3109 = vmatprep.subr.mxu0 0.0
    %3110 = vmatpush1.xpose.msra.mxu0 0.0
    %3111 = vmatprep.subr.mxu0 0.0
    %3112 = vmatpush1.xpose.msra.mxu0 0.0
    %3113 = vmatprep.subr.mxu0 0.0
    %3114 = vmatpush1.xpose.msra.mxu0 0.0
    %3115 = vmatprep.subr.mxu0 0.0
    %3116 = vmatpush1.xpose.msra.mxu0 0.0
    %3117 = vmatprep.subr.mxu0 0.0
    %3118 = vmatpush1.xpose.msra.mxu0 0.0
    %3119 = vmatprep.subr.mxu0 0.0
    %3120 = vmatpush1.xpose.msra.mxu0 0.0
    %3121 = vmatprep.subr.mxu0 0.0
    %3122 = vmatpush1.xpose.msra.mxu0 0.0
    %3123 = vmatprep.subr.mxu0 0.0
    %3124 = vmatpush1.xpose.msra.mxu0 0.0
    %3125 = vmatprep.subr.mxu0 0.0
    %3126 = vmatpush1.xpose.msra.mxu0 0.0
    %3127 = vmatprep.subr.mxu0 0.0
    %3128 = vmatpush1.xpose.msra.mxu0 0.0
    %3129 = vmatprep.subr.mxu0 0.0
    %3130 = vmatpush1.xpose.msra.mxu0 0.0
    %3131 = vmatprep.subr.mxu0 0.0
    %3132 = vmatpush1.xpose.msra.mxu0 0.0
    %3133 = vmatprep.subr.mxu0 0.0
    %3134 = vmatpush1.xpose.msra.mxu0 0.0
    %3135 = vmatprep.subr.mxu0 0.0
    %3136 = vmatpush1.xpose.msra.mxu0 0.0
    %3137 = vmatprep.subr.mxu0 0.0
    %3138 = vmatpush1.xpose.msra.mxu0 0.0
    %3139 = vmatprep.subr.mxu0 0.0
    %3140 = vmatpush1.xpose.msra.mxu0 0.0
    %3141 = vmatprep.subr.mxu0 0.0
    %3142 = vmatpush1.xpose.msra.mxu0 0.0
    %3143 = vmatprep.subr.mxu0 0.0
    %3144 = vmatpush1.xpose.msra.mxu0 0.0
    %3145 = vmatprep.subr.mxu0 0.0
    %3146 = vmatpush1.xpose.msra.mxu0 0.0
    %3147 = vmatprep.subr.mxu0 0.0
    %3148 = vmatpush1.xpose.msra.mxu0 0.0
    %3149 = vmatprep.subr.mxu0 0.0
    %3150 = vmatpush1.xpose.msra.mxu0 0.0
    %3151 = vmatprep.subr.mxu0 0.0
    %3152 = vmatpush1.xpose.msra.mxu0 0.0
    %3153 = vmatprep.mubr.f32.mxu0 0.0
    %3154 = vmatmul.mubr.f32.gmra.mrb[0].mxu0 %v3085
    %v3155 = vpop.f32.mrb[0].mxu0
    %v3156 = vadd.f32 0.0, %v3155
    %v3157 = vpop.f32.mrb[0].mxu0
    %3158 = vdwg.mxu0
    %v3159 = vsel %vm602, %v2606, 0
    %v3161 = vsel %vm602, %v2623, 0
    %3163 = vmatprep.subr.mxu0 0.0
    %3164 = vmatpush1.xpose.msra.mxu0 %v3161
    %3165 = vmatprep.subr.mxu0 0.0
    %3166 = vmatpush1.xpose.msra.mxu0 0.0
    %3167 = vmatprep.subr.mxu0 0.0
    %3168 = vmatpush1.xpose.msra.mxu0 0.0
    %3169 = vmatprep.subr.mxu0 0.0
    %3170 = vmatpush1.xpose.msra.mxu0 0.0
    %3171 = vmatprep.subr.mxu0 0.0
    %3172 = vmatpush1.xpose.msra.mxu0 0.0
    %3173 = vmatprep.subr.mxu0 0.0
    %3174 = vmatpush1.xpose.msra.mxu0 0.0
    %3175 = vmatprep.subr.mxu0 0.0
    %3176 = vmatpush1.xpose.msra.mxu0 0.0
    %3177 = vmatprep.subr.mxu0 0.0
    %3178 = vmatpush1.xpose.msra.mxu0 0.0
    %3179 = vmatprep.subr.mxu0 0.0
    %3180 = vmatpush1.xpose.msra.mxu0 0.0
    %3181 = vmatprep.subr.mxu0 0.0
    %3182 = vmatpush1.xpose.msra.mxu0 0.0
    %3183 = vmatprep.subr.mxu0 0.0
    %3184 = vmatpush1.xpose.msra.mxu0 0.0
    %3185 = vmatprep.subr.mxu0 0.0
    %3186 = vmatpush1.xpose.msra.mxu0 0.0
    %3187 = vmatprep.subr.mxu0 0.0
    %3188 = vmatpush1.xpose.msra.mxu0 0.0
    %3189 = vmatprep.subr.mxu0 0.0
    %3190 = vmatpush1.xpose.msra.mxu0 0.0
    %3191 = vmatprep.subr.mxu0 0.0
    %3192 = vmatpush1.xpose.msra.mxu0 0.0
    %3193 = vmatprep.subr.mxu0 0.0
    %3194 = vmatpush1.xpose.msra.mxu0 0.0
    %3195 = vmatprep.subr.mxu0 0.0
    %3196 = vmatpush1.xpose.msra.mxu0 0.0
    %3197 = vmatprep.subr.mxu0 0.0
    %3198 = vmatpush1.xpose.msra.mxu0 0.0
    %3199 = vmatprep.subr.mxu0 0.0
    %3200 = vmatpush1.xpose.msra.mxu0 0.0
    %3201 = vmatprep.subr.mxu0 0.0
    %3202 = vmatpush1.xpose.msra.mxu0 0.0
    %3203 = vmatprep.subr.mxu0 0.0
    %3204 = vmatpush1.xpose.msra.mxu0 0.0
    %3205 = vmatprep.subr.mxu0 0.0
    %3206 = vmatpush1.xpose.msra.mxu0 0.0
    %3207 = vmatprep.subr.mxu0 0.0
    %3208 = vmatpush1.xpose.msra.mxu0 0.0
    %3209 = vmatprep.subr.mxu0 0.0
    %3210 = vmatpush1.xpose.msra.mxu0 0.0
    %3211 = vmatprep.subr.mxu0 0.0
    %3212 = vmatpush1.xpose.msra.mxu0 0.0
    %3213 = vmatprep.subr.mxu0 0.0
    %3214 = vmatpush1.xpose.msra.mxu0 0.0
    %3215 = vmatprep.subr.mxu0 0.0
    %3216 = vmatpush1.xpose.msra.mxu0 0.0
    %3217 = vmatprep.subr.mxu0 0.0
    %3218 = vmatpush1.xpose.msra.mxu0 0.0
    %3219 = vmatprep.subr.mxu0 0.0
    %3220 = vmatpush1.xpose.msra.mxu0 0.0
    %3221 = vmatprep.subr.mxu0 0.0
    %3222 = vmatpush1.xpose.msra.mxu0 0.0
    %3223 = vmatprep.subr.mxu0 0.0
    %3224 = vmatpush1.xpose.msra.mxu0 0.0
    %3225 = vmatprep.subr.mxu0 0.0
    %3226 = vmatpush1.xpose.msra.mxu0 0.0
    %3227 = vmatprep.mubr.f32.mxu0 0.0
    %3228 = vmatmul.mubr.f32.gmra.mrb[0].mxu0 %v3159
    %v3229 = vpop.f32.mrb[0].mxu0
    %v3230 = vadd.f32 0.0, %v3229
    %v3231 = vpop.f32.mrb[0].mxu0
    %3232 = vdwg.mxu0
    %v3233 = vmul.f32 %v2712, 0.35355338
    %v3234 = vmul.f32 %v2786, 0.35355338
    %v3235 = vmul.f32 %v2860, 0.35355338
    %v3236 = vmul.f32 %v2934, 0.35355338
    %v3237 = vmul.f32 %v3008, 0.35355338
    %v3238 = vmul.f32 %v3082, 0.35355338
    %v3239 = vmul.f32 %v3156, 0.35355338
    %v3240 = vmul.f32 %v3230, 0.35355338
    %v3241 = vsel %vm1203, %v3233, -inf
    %3242 = vmax.xlane.f32.xlu0 %v3241
    %v3243 = vpop.xlane.xlu0 %3242
    %v3244 = vsel %vm1203, %v3234, -inf
    %3245 = vmax.xlane.f32.xlu0 %v3244
    %v3246 = vpop.xlane.xlu0 %3245
    %v3247 = vsel %vm1203, %v3235, -inf
    %3248 = vmax.xlane.f32.xlu0 %v3247
    %v3249 = vpop.xlane.xlu0 %3248
    %v3250 = vsel %vm1203, %v3236, -inf
    %3251 = vmax.xlane.f32.xlu0 %v3250
    %v3252 = vpop.xlane.xlu0 %3251
    %v3253 = vsel %vm1203, %v3237, -inf
    %3254 = vmax.xlane.f32.xlu0 %v3253
    %v3255 = vpop.xlane.xlu0 %3254
    %v3256 = vsel %vm1203, %v3238, -inf
    %3257 = vmax.xlane.f32.xlu0 %v3256
    %v3258 = vpop.xlane.xlu0 %3257
    %v3259 = vsel %vm1203, %v3239, -inf
    %3260 = vmax.xlane.f32.xlu0 %v3259
    %v3261 = vpop.xlane.xlu0 %3260
    %v3262 = vsel %vm1203, %v3240, -inf
    %3263 = vmax.xlane.f32.xlu0 %v3262
    %v3264 = vpop.xlane.xlu0 %3263
    %v3265 = vsub.f32 %v3233, %v3243
    %v3266 = vsub.f32 %v3234, %v3246
    %v3267 = vsub.f32 %v3235, %v3249
    %v3268 = vsub.f32 %v3236, %v3252
    %v3269 = vsub.f32 %v3237, %v3255
    %v3270 = vsub.f32 %v3238, %v3258
    %v3271 = vsub.f32 %v3239, %v3261
    %v3272 = vsub.f32 %v3240, %v3264
    %v3273 = vmul.f32 %v3265, 1.442695
    %v3274 = vpow.pop %v3273
    %v3275 = vmul.f32 %v3266, 1.442695
    %v3276 = vpow.pop %v3275
    %v3277 = vmul.f32 %v3267, 1.442695
    %v3278 = vpow.pop %v3277
    %v3279 = vmul.f32 %v3268, 1.442695
    %v3280 = vpow.pop %v3279
    %v3281 = vmul.f32 %v3269, 1.442695
    %v3282 = vpow.pop %v3281
    %v3283 = vmul.f32 %v3270, 1.442695
    %v3284 = vpow.pop %v3283
    %v3285 = vmul.f32 %v3271, 1.442695
    %v3286 = vpow.pop %v3285
    %v3287 = vmul.f32 %v3272, 1.442695
    %v3288 = vpow.pop %v3287
    %v3289 = vsel %vm1203, %v3274, 0.0
    %3290 = vadd.xlane.f32.xlu0 %v3289
    %v3291 = vpop.xlane.xlu0 %3290
    %v3292 = vsel %vm1203, %v3276, 0.0
    %3293 = vadd.xlane.f32.xlu0 %v3292
    %v3294 = vpop.xlane.xlu0 %3293
    %v3295 = vsel %vm1203, %v3278, 0.0
    %3296 = vadd.xlane.f32.xlu0 %v3295
    %v3297 = vpop.xlane.xlu0 %3296
    %v3298 = vsel %vm1203, %v3280, 0.0
    %3299 = vadd.xlane.f32.xlu0 %v3298
    %v3300 = vpop.xlane.xlu0 %3299
    %v3301 = vsel %vm1203, %v3282, 0.0
    %3302 = vadd.xlane.f32.xlu0 %v3301
    %v3303 = vpop.xlane.xlu0 %3302
    %v3304 = vsel %vm1203, %v3284, 0.0
    %3305 = vadd.xlane.f32.xlu0 %v3304
    %v3306 = vpop.xlane.xlu0 %3305
    %v3307 = vsel %vm1203, %v3286, 0.0
    %3308 = vadd.xlane.f32.xlu0 %v3307
    %v3309 = vpop.xlane.xlu0 %3308
    %v3310 = vsel %vm1203, %v3288, 0.0
    %3311 = vadd.xlane.f32.xlu0 %v3310
    %v3312 = vpop.xlane.xlu0 %3311
    %v3313 = vrcp.pop %v3291
    %v3314 = vrcp.pop %v3294
    %v3315 = vrcp.pop %v3297
    %v3316 = vrcp.pop %v3300
    %v3317 = vrcp.pop %v3303
    %v3318 = vrcp.pop %v3306
    %v3319 = vrcp.pop %v3309
    %v3320 = vrcp.pop %v3312
    %v3321 = vmul.f32 %v3274, %v3313
    %v3322 = vmul.f32 %v3276, %v3314
    %v3323 = vmul.f32 %v3278, %v3315
    %v3324 = vmul.f32 %v3280, %v3316
    %v3325 = vmul.f32 %v3282, %v3317
    %v3326 = vmul.f32 %v3284, %v3318
    %v3327 = vmul.f32 %v3286, %v3319
    %v3328 = vmul.f32 %v3288, %v3320
    %v3330 = vsel %vm1292, %v3321, 0
    %v3332 = vsel %vm193, %v2582, 0
    %3334 = vmatprep.subr.mxu0 0.0
    %3335 = vmatpush1.msra.mxu0 %v3332
    %3336 = vmatprep.subr.mxu0 0.0
    %3337 = vmatpush1.msra.mxu0 0.0
    %3338 = vmatprep.subr.mxu0 0.0
    %3339 = vmatpush1.msra.mxu0 0.0
    %3340 = vmatprep.subr.mxu0 0.0
    %3341 = vmatpush1.msra.mxu0 0.0
    %3342 = vmatprep.subr.mxu0 0.0
    %3343 = vmatpush1.msra.mxu0 0.0
    %3344 = vmatprep.subr.mxu0 0.0
    %3345 = vmatpush1.msra.mxu0 0.0
    %3346 = vmatprep.subr.mxu0 0.0
    %3347 = vmatpush1.msra.mxu0 0.0
    %3348 = vmatprep.subr.mxu0 0.0
    %3349 = vmatpush1.msra.mxu0 0.0
    %3350 = vmatprep.subr.mxu0 0.0
    %3351 = vmatpush1.msra.mxu0 0.0
    %3352 = vmatprep.subr.mxu0 0.0
    %3353 = vmatpush1.msra.mxu0 0.0
    %3354 = vmatprep.subr.mxu0 0.0
    %3355 = vmatpush1.msra.mxu0 0.0
    %3356 = vmatprep.subr.mxu0 0.0
    %3357 = vmatpush1.msra.mxu0 0.0
    %3358 = vmatprep.subr.mxu0 0.0
    %3359 = vmatpush1.msra.mxu0 0.0
    %3360 = vmatprep.subr.mxu0 0.0
    %3361 = vmatpush1.msra.mxu0 0.0
    %3362 = vmatprep.subr.mxu0 0.0
    %3363 = vmatpush1.msra.mxu0 0.0
    %3364 = vmatprep.subr.mxu0 0.0
    %3365 = vmatpush1.msra.mxu0 0.0
    %3366 = vmatprep.subr.mxu0 0.0
    %3367 = vmatpush1.msra.mxu0 0.0
    %3368 = vmatprep.subr.mxu0 0.0
    %3369 = vmatpush1.msra.mxu0 0.0
    %3370 = vmatprep.subr.mxu0 0.0
    %3371 = vmatpush1.msra.mxu0 0.0
    %3372 = vmatprep.subr.mxu0 0.0
    %3373 = vmatpush1.msra.mxu0 0.0
    %3374 = vmatprep.subr.mxu0 0.0
    %3375 = vmatpush1.msra.mxu0 0.0
    %3376 = vmatprep.subr.mxu0 0.0
    %3377 = vmatpush1.msra.mxu0 0.0
    %3378 = vmatprep.subr.mxu0 0.0
    %3379 = vmatpush1.msra.mxu0 0.0
    %3380 = vmatprep.subr.mxu0 0.0
    %3381 = vmatpush1.msra.mxu0 0.0
    %3382 = vmatprep.subr.mxu0 0.0
    %3383 = vmatpush1.msra.mxu0 0.0
    %3384 = vmatprep.subr.mxu0 0.0
    %3385 = vmatpush1.msra.mxu0 0.0
    %3386 = vmatprep.subr.mxu0 0.0
    %3387 = vmatpush1.msra.mxu0 0.0
    %3388 = vmatprep.subr.mxu0 0.0
    %3389 = vmatpush1.msra.mxu0 0.0
    %3390 = vmatprep.subr.mxu0 0.0
    %3391 = vmatpush1.msra.mxu0 0.0
    %3392 = vmatprep.subr.mxu0 0.0
    %3393 = vmatpush1.msra.mxu0 0.0
    %3394 = vmatprep.subr.mxu0 0.0
    %3395 = vmatpush1.msra.mxu0 0.0
    %3396 = vmatprep.subr.mxu0 0.0
    %3397 = vmatpush1.msra.mxu0 0.0
    %3398 = vmatprep.mubr.f32.mxu0 0.0
    %3399 = vmatmul.mubr.f32.gmra.mrb[0].mxu0 %v3330
    %v3400 = vpop.f32.mrb[0].mxu0
    %v3401 = vadd.f32 0.0, %v3400
    %v3402 = vpop.f32.mrb[0].mxu0
    %3403 = vdwg.mxu0
    %v3405 = vsel %vm1292, %v3322, 0
    %v3407 = vsel %vm193, %v2626, 0
    %3409 = vmatprep.subr.mxu0 0.0
    %3410 = vmatpush1.msra.mxu0 %v3407
    %3411 = vmatprep.subr.mxu0 0.0
    %3412 = vmatpush1.msra.mxu0 0.0
    %3413 = vmatprep.subr.mxu0 0.0
    %3414 = vmatpush1.msra.mxu0 0.0
    %3415 = vmatprep.subr.mxu0 0.0
    %3416 = vmatpush1.msra.mxu0 0.0
    %3417 = vmatprep.subr.mxu0 0.0
    %3418 = vmatpush1.msra.mxu0 0.0
    %3419 = vmatprep.subr.mxu0 0.0
    %3420 = vmatpush1.msra.mxu0 0.0
    %3421 = vmatprep.subr.mxu0 0.0
    %3422 = vmatpush1.msra.mxu0 0.0
    %3423 = vmatprep.subr.mxu0 0.0
    %3424 = vmatpush1.msra.mxu0 0.0
    %3425 = vmatprep.subr.mxu0 0.0
    %3426 = vmatpush1.msra.mxu0 0.0
    %3427 = vmatprep.subr.mxu0 0.0
    %3428 = vmatpush1.msra.mxu0 0.0
    %3429 = vmatprep.subr.mxu0 0.0
    %3430 = vmatpush1.msra.mxu0 0.0
    %3431 = vmatprep.subr.mxu0 0.0
    %3432 = vmatpush1.msra.mxu0 0.0
    %3433 = vmatprep.subr.mxu0 0.0
    %3434 = vmatpush1.msra.mxu0 0.0
    %3435 = vmatprep.subr.mxu0 0.0
    %3436 = vmatpush1.msra.mxu0 0.0
    %3437 = vmatprep.subr.mxu0 0.0
    %3438 = vmatpush1.msra.mxu0 0.0
    %3439 = vmatprep.subr.mxu0 0.0
    %3440 = vmatpush1.msra.mxu0 0.0
    %3441 = vmatprep.subr.mxu0 0.0
    %3442 = vmatpush1.msra.mxu0 0.0
    %3443 = vmatprep.subr.mxu0 0.0
    %3444 = vmatpush1.msra.mxu0 0.0
    %3445 = vmatprep.subr.mxu0 0.0
    %3446 = vmatpush1.msra.mxu0 0.0
    %3447 = vmatprep.subr.mxu0 0.0
    %3448 = vmatpush1.msra.mxu0 0.0
    %3449 = vmatprep.subr.mxu0 0.0
    %3450 = vmatpush1.msra.mxu0 0.0
    %3451 = vmatprep.subr.mxu0 0.0
    %3452 = vmatpush1.msra.mxu0 0.0
    %3453 = vmatprep.subr.mxu0 0.0
    %3454 = vmatpush1.msra.mxu0 0.0
    %3455 = vmatprep.subr.mxu0 0.0
    %3456 = vmatpush1.msra.mxu0 0.0
    %3457 = vmatprep.subr.mxu0 0.0
    %3458 = vmatpush1.msra.mxu0 0.0
    %3459 = vmatprep.subr.mxu0 0.0
    %3460 = vmatpush1.msra.mxu0 0.0
    %3461 = vmatprep.subr.mxu0 0.0
    %3462 = vmatpush1.msra.mxu0 0.0
    %3463 = vmatprep.subr.mxu0 0.0
    %3464 = vmatpush1.msra.mxu0 0.0
    %3465 = vmatprep.subr.mxu0 0.0
    %3466 = vmatpush1.msra.mxu0 0.0
    %3467 = vmatprep.subr.mxu0 0.0
    %3468 = vmatpush1.msra.mxu0 0.0
    %3469 = vmatprep.subr.mxu0 0.0
    %3470 = vmatpush1.msra.mxu0 0.0
    %3471 = vmatprep.subr.mxu0 0.0
    %3472 = vmatpush1.msra.mxu0 0.0
    %3473 = vmatprep.mubr.f32.mxu0 0.0
    %3474 = vmatmul.mubr.f32.gmra.mrb[0].mxu0 %v3405
    %v3475 = vpop.f32.mrb[0].mxu0
    %v3476 = vadd.f32 0.0, %v3475
    %v3477 = vpop.f32.mrb[0].mxu0
    %3478 = vdwg.mxu0
    %v3480 = vsel %vm1292, %v3323, 0
    %v3482 = vsel %vm193, %v2628, 0
    %3484 = vmatprep.subr.mxu0 0.0
    %3485 = vmatpush1.msra.mxu0 %v3482
    %3486 = vmatprep.subr.mxu0 0.0
    %3487 = vmatpush1.msra.mxu0 0.0
    %3488 = vmatprep.subr.mxu0 0.0
    %3489 = vmatpush1.msra.mxu0 0.0
    %3490 = vmatprep.subr.mxu0 0.0
    %3491 = vmatpush1.msra.mxu0 0.0
    %3492 = vmatprep.subr.mxu0 0.0
    %3493 = vmatpush1.msra.mxu0 0.0
    %3494 = vmatprep.subr.mxu0 0.0
    %3495 = vmatpush1.msra.mxu0 0.0
    %3496 = vmatprep.subr.mxu0 0.0
    %3497 = vmatpush1.msra.mxu0 0.0
    %3498 = vmatprep.subr.mxu0 0.0
    %3499 = vmatpush1.msra.mxu0 0.0
    %3500 = vmatprep.subr.mxu0 0.0
    %3501 = vmatpush1.msra.mxu0 0.0
    %3502 = vmatprep.subr.mxu0 0.0
    %3503 = vmatpush1.msra.mxu0 0.0
    %3504 = vmatprep.subr.mxu0 0.0
    %3505 = vmatpush1.msra.mxu0 0.0
    %3506 = vmatprep.subr.mxu0 0.0
    %3507 = vmatpush1.msra.mxu0 0.0
    %3508 = vmatprep.subr.mxu0 0.0
    %3509 = vmatpush1.msra.mxu0 0.0
    %3510 = vmatprep.subr.mxu0 0.0
    %3511 = vmatpush1.msra.mxu0 0.0
    %3512 = vmatprep.subr.mxu0 0.0
    %3513 = vmatpush1.msra.mxu0 0.0
    %3514 = vmatprep.subr.mxu0 0.0
    %3515 = vmatpush1.msra.mxu0 0.0
    %3516 = vmatprep.subr.mxu0 0.0
    %3517 = vmatpush1.msra.mxu0 0.0
    %3518 = vmatprep.subr.mxu0 0.0
    %3519 = vmatpush1.msra.mxu0 0.0
    %3520 = vmatprep.subr.mxu0 0.0
    %3521 = vmatpush1.msra.mxu0 0.0
    %3522 = vmatprep.subr.mxu0 0.0
    %3523 = vmatpush1.msra.mxu0 0.0
    %3524 = vmatprep.subr.mxu0 0.0
    %3525 = vmatpush1.msra.mxu0 0.0
    %3526 = vmatprep.subr.mxu0 0.0
    %3527 = vmatpush1.msra.mxu0 0.0
    %3528 = vmatprep.subr.mxu0 0.0
    %3529 = vmatpush1.msra.mxu0 0.0
    %3530 = vmatprep.subr.mxu0 0.0
    %3531 = vmatpush1.msra.mxu0 0.0
    %3532 = vmatprep.subr.mxu0 0.0
    %3533 = vmatpush1.msra.mxu0 0.0
    %3534 = vmatprep.subr.mxu0 0.0
    %3535 = vmatpush1.msra.mxu0 0.0
    %3536 = vmatprep.subr.mxu0 0.0
    %3537 = vmatpush1.msra.mxu0 0.0
    %3538 = vmatprep.subr.mxu0 0.0
    %3539 = vmatpush1.msra.mxu0 0.0
    %3540 = vmatprep.subr.mxu0 0.0
    %3541 = vmatpush1.msra.mxu0 0.0
    %3542 = vmatprep.subr.mxu0 0.0
    %3543 = vmatpush1.msra.mxu0 0.0
    %3544 = vmatprep.subr.mxu0 0.0
    %3545 = vmatpush1.msra.mxu0 0.0
    %3546 = vmatprep.subr.mxu0 0.0
    %3547 = vmatpush1.msra.mxu0 0.0
    %3548 = vmatprep.mubr.f32.mxu0 0.0
    %3549 = vmatmul.mubr.f32.gmra.mrb[0].mxu0 %v3480
    %v3550 = vpop.f32.mrb[0].mxu0
    %v3551 = vadd.f32 0.0, %v3550
    %v3552 = vpop.f32.mrb[0].mxu0
    %3553 = vdwg.mxu0
    %v3555 = vsel %vm1292, %v3324, 0
    %v3557 = vsel %vm193, %v2630, 0
    %3559 = vmatprep.subr.mxu0 0.0
    %3560 = vmatpush1.msra.mxu0 %v3557
    %3561 = vmatprep.subr.mxu0 0.0
    %3562 = vmatpush1.msra.mxu0 0.0
    %3563 = vmatprep.subr.mxu0 0.0
    %3564 = vmatpush1.msra.mxu0 0.0
    %3565 = vmatprep.subr.mxu0 0.0
    %3566 = vmatpush1.msra.mxu0 0.0
    %3567 = vmatprep.subr.mxu0 0.0
    %3568 = vmatpush1.msra.mxu0 0.0
    %3569 = vmatprep.subr.mxu0 0.0
    %3570 = vmatpush1.msra.mxu0 0.0
    %3571 = vmatprep.subr.mxu0 0.0
    %3572 = vmatpush1.msra.mxu0 0.0
    %3573 = vmatprep.subr.mxu0 0.0
    %3574 = vmatpush1.msra.mxu0 0.0
    %3575 = vmatprep.subr.mxu0 0.0
    %3576 = vmatpush1.msra.mxu0 0.0
    %3577 = vmatprep.subr.mxu0 0.0
    %3578 = vmatpush1.msra.mxu0 0.0
    %3579 = vmatprep.subr.mxu0 0.0
    %3580 = vmatpush1.msra.mxu0 0.0
    %3581 = vmatprep.subr.mxu0 0.0
    %3582 = vmatpush1.msra.mxu0 0.0
    %3583 = vmatprep.subr.mxu0 0.0
    %3584 = vmatpush1.msra.mxu0 0.0
    %3585 = vmatprep.subr.mxu0 0.0
    %3586 = vmatpush1.msra.mxu0 0.0
    %3587 = vmatprep.subr.mxu0 0.0
    %3588 = vmatpush1.msra.mxu0 0.0
    %3589 = vmatprep.subr.mxu0 0.0
    %3590 = vmatpush1.msra.mxu0 0.0
    %3591 = vmatprep.subr.mxu0 0.0
    %3592 = vmatpush1.msra.mxu0 0.0
    %3593 = vmatprep.subr.mxu0 0.0
    %3594 = vmatpush1.msra.mxu0 0.0
    %3595 = vmatprep.subr.mxu0 0.0
    %3596 = vmatpush1.msra.mxu0 0.0
    %3597 = vmatprep.subr.mxu0 0.0
    %3598 = vmatpush1.msra.mxu0 0.0
    %3599 = vmatprep.subr.mxu0 0.0
    %3600 = vmatpush1.msra.mxu0 0.0
    %3601 = vmatprep.subr.mxu0 0.0
    %3602 = vmatpush1.msra.mxu0 0.0
    %3603 = vmatprep.subr.mxu0 0.0
    %3604 = vmatpush1.msra.mxu0 0.0
    %3605 = vmatprep.subr.mxu0 0.0
    %3606 = vmatpush1.msra.mxu0 0.0
    %3607 = vmatprep.subr.mxu0 0.0
    %3608 = vmatpush1.msra.mxu0 0.0
    %3609 = vmatprep.subr.mxu0 0.0
    %3610 = vmatpush1.msra.mxu0 0.0
    %3611 = vmatprep.subr.mxu0 0.0
    %3612 = vmatpush1.msra.mxu0 0.0
    %3613 = vmatprep.subr.mxu0 0.0
    %3614 = vmatpush1.msra.mxu0 0.0
    %3615 = vmatprep.subr.mxu0 0.0
    %3616 = vmatpush1.msra.mxu0 0.0
    %3617 = vmatprep.subr.mxu0 0.0
    %3618 = vmatpush1.msra.mxu0 0.0
    %3619 = vmatprep.subr.mxu0 0.0
    %3620 = vmatpush1.msra.mxu0 0.0
    %3621 = vmatprep.subr.mxu0 0.0
    %3622 = vmatpush1.msra.mxu0 0.0
    %3623 = vmatprep.mubr.f32.mxu0 0.0
    %3624 = vmatmul.mubr.f32.gmra.mrb[0].mxu0 %v3555
    %v3625 = vpop.f32.mrb[0].mxu0
    %v3626 = vadd.f32 0.0, %v3625
    %v3627 = vpop.f32.mrb[0].mxu0
    %3628 = vdwg.mxu0
    %v3630 = vsel %vm1292, %v3325, 0
    %v3632 = vsel %vm193, %v2634, 0
    %3634 = vmatprep.subr.mxu0 0.0
    %3635 = vmatpush1.msra.mxu0 %v3632
    %3636 = vmatprep.subr.mxu0 0.0
    %3637 = vmatpush1.msra.mxu0 0.0
    %3638 = vmatprep.subr.mxu0 0.0
    %3639 = vmatpush1.msra.mxu0 0.0
    %3640 = vmatprep.subr.mxu0 0.0
    %3641 = vmatpush1.msra.mxu0 0.0
    %3642 = vmatprep.subr.mxu0 0.0
    %3643 = vmatpush1.msra.mxu0 0.0
    %3644 = vmatprep.subr.mxu0 0.0
    %3645 = vmatpush1.msra.mxu0 0.0
    %3646 = vmatprep.subr.mxu0 0.0
    %3647 = vmatpush1.msra.mxu0 0.0
    %3648 = vmatprep.subr.mxu0 0.0
    %3649 = vmatpush1.msra.mxu0 0.0
    %3650 = vmatprep.subr.mxu0 0.0
    %3651 = vmatpush1.msra.mxu0 0.0
    %3652 = vmatprep.subr.mxu0 0.0
    %3653 = vmatpush1.msra.mxu0 0.0
    %3654 = vmatprep.subr.mxu0 0.0
    %3655 = vmatpush1.msra.mxu0 0.0
    %3656 = vmatprep.subr.mxu0 0.0
    %3657 = vmatpush1.msra.mxu0 0.0
    %3658 = vmatprep.subr.mxu0 0.0
    %3659 = vmatpush1.msra.mxu0 0.0
    %3660 = vmatprep.subr.mxu0 0.0
    %3661 = vmatpush1.msra.mxu0 0.0
    %3662 = vmatprep.subr.mxu0 0.0
    %3663 = vmatpush1.msra.mxu0 0.0
    %3664 = vmatprep.subr.mxu0 0.0
    %3665 = vmatpush1.msra.mxu0 0.0
    %3666 = vmatprep.subr.mxu0 0.0
    %3667 = vmatpush1.msra.mxu0 0.0
    %3668 = vmatprep.subr.mxu0 0.0
    %3669 = vmatpush1.msra.mxu0 0.0
    %3670 = vmatprep.subr.mxu0 0.0
    %3671 = vmatpush1.msra.mxu0 0.0
    %3672 = vmatprep.subr.mxu0 0.0
    %3673 = vmatpush1.msra.mxu0 0.0
    %3674 = vmatprep.subr.mxu0 0.0
    %3675 = vmatpush1.msra.mxu0 0.0
    %3676 = vmatprep.subr.mxu0 0.0
    %3677 = vmatpush1.msra.mxu0 0.0
    %3678 = vmatprep.subr.mxu0 0.0
    %3679 = vmatpush1.msra.mxu0 0.0
    %3680 = vmatprep.subr.mxu0 0.0
    %3681 = vmatpush1.msra.mxu0 0.0
    %3682 = vmatprep.subr.mxu0 0.0
    %3683 = vmatpush1.msra.mxu0 0.0
    %3684 = vmatprep.subr.mxu0 0.0
    %3685 = vmatpush1.msra.mxu0 0.0
    %3686 = vmatprep.subr.mxu0 0.0
    %3687 = vmatpush1.msra.mxu0 0.0
    %3688 = vmatprep.subr.mxu0 0.0
    %3689 = vmatpush1.msra.mxu0 0.0
    %3690 = vmatprep.subr.mxu0 0.0
    %3691 = vmatpush1.msra.mxu0 0.0
    %3692 = vmatprep.subr.mxu0 0.0
    %3693 = vmatpush1.msra.mxu0 0.0
    %3694 = vmatprep.subr.mxu0 0.0
    %3695 = vmatpush1.msra.mxu0 0.0
    %3696 = vmatprep.subr.mxu0 0.0
    %3697 = vmatpush1.msra.mxu0 0.0
    %3698 = vmatprep.mubr.f32.mxu0 0.0
    %3699 = vmatmul.mubr.f32.gmra.mrb[0].mxu0 %v3630
    %v3700 = vpop.f32.mrb[0].mxu0
    %v3701 = vadd.f32 0.0, %v3700
    %v3702 = vpop.f32.mrb[0].mxu0
    %3703 = vdwg.mxu0
    %v3705 = vsel %vm1292, %v3326, 0
    %v3707 = vsel %vm193, %v2636, 0
    %3709 = vmatprep.subr.mxu0 0.0
    %3710 = vmatpush1.msra.mxu0 %v3707
    %3711 = vmatprep.subr.mxu0 0.0
    %3712 = vmatpush1.msra.mxu0 0.0
    %3713 = vmatprep.subr.mxu0 0.0
    %3714 = vmatpush1.msra.mxu0 0.0
    %3715 = vmatprep.subr.mxu0 0.0
    %3716 = vmatpush1.msra.mxu0 0.0
    %3717 = vmatprep.subr.mxu0 0.0
    %3718 = vmatpush1.msra.mxu0 0.0
    %3719 = vmatprep.subr.mxu0 0.0
    %3720 = vmatpush1.msra.mxu0 0.0
    %3721 = vmatprep.subr.mxu0 0.0
    %3722 = vmatpush1.msra.mxu0 0.0
    %3723 = vmatprep.subr.mxu0 0.0
    %3724 = vmatpush1.msra.mxu0 0.0
    %3725 = vmatprep.subr.mxu0 0.0
    %3726 = vmatpush1.msra.mxu0 0.0
    %3727 = vmatprep.subr.mxu0 0.0
    %3728 = vmatpush1.msra.mxu0 0.0
    %3729 = vmatprep.subr.mxu0 0.0
    %3730 = vmatpush1.msra.mxu0 0.0
    %3731 = vmatprep.subr.mxu0 0.0
    %3732 = vmatpush1.msra.mxu0 0.0
    %3733 = vmatprep.subr.mxu0 0.0
    %3734 = vmatpush1.msra.mxu0 0.0
    %3735 = vmatprep.subr.mxu0 0.0
    %3736 = vmatpush1.msra.mxu0 0.0
    %3737 = vmatprep.subr.mxu0 0.0
    %3738 = vmatpush1.msra.mxu0 0.0
    %3739 = vmatprep.subr.mxu0 0.0
    %3740 = vmatpush1.msra.mxu0 0.0
    %3741 = vmatprep.subr.mxu0 0.0
    %3742 = vmatpush1.msra.mxu0 0.0
    %3743 = vmatprep.subr.mxu0 0.0
    %3744 = vmatpush1.msra.mxu0 0.0
    %3745 = vmatprep.subr.mxu0 0.0
    %3746 = vmatpush1.msra.mxu0 0.0
    %3747 = vmatprep.subr.mxu0 0.0
    %3748 = vmatpush1.msra.mxu0 0.0
    %3749 = vmatprep.subr.mxu0 0.0
    %3750 = vmatpush1.msra.mxu0 0.0
    %3751 = vmatprep.subr.mxu0 0.0
    %3752 = vmatpush1.msra.mxu0 0.0
    %3753 = vmatprep.subr.mxu0 0.0
    %3754 = vmatpush1.msra.mxu0 0.0
    %3755 = vmatprep.subr.mxu0 0.0
    %3756 = vmatpush1.msra.mxu0 0.0
    %3757 = vmatprep.subr.mxu0 0.0
    %3758 = vmatpush1.msra.mxu0 0.0
    %3759 = vmatprep.subr.mxu0 0.0
    %3760 = vmatpush1.msra.mxu0 0.0
    %3761 = vmatprep.subr.mxu0 0.0
    %3762 = vmatpush1.msra.mxu0 0.0
    %3763 = vmatprep.subr.mxu0 0.0
    %3764 = vmatpush1.msra.mxu0 0.0
    %3765 = vmatprep.subr.mxu0 0.0
    %3766 = vmatpush1.msra.mxu0 0.0
    %3767 = vmatprep.subr.mxu0 0.0
    %3768 = vmatpush1.msra.mxu0 0.0
    %3769 = vmatprep.subr.mxu0 0.0
    %3770 = vmatpush1.msra.mxu0 0.0
    %3771 = vmatprep.subr.mxu0 0.0
    %3772 = vmatpush1.msra.mxu0 0.0
    %3773 = vmatprep.mubr.f32.mxu0 0.0
    %3774 = vmatmul.mubr.f32.gmra.mrb[0].mxu0 %v3705
    %v3775 = vpop.f32.mrb[0].mxu0
    %v3776 = vadd.f32 0.0, %v3775
    %v3777 = vpop.f32.mrb[0].mxu0
    %3778 = vdwg.mxu0
    %v3780 = vsel %vm1292, %v3327, 0
    %v3782 = vsel %vm193, %v2638, 0
    %3784 = vmatprep.subr.mxu0 0.0
    %3785 = vmatpush1.msra.mxu0 %v3782
    %3786 = vmatprep.subr.mxu0 0.0
    %3787 = vmatpush1.msra.mxu0 0.0
    %3788 = vmatprep.subr.mxu0 0.0
    %3789 = vmatpush1.msra.mxu0 0.0
    %3790 = vmatprep.subr.mxu0 0.0
    %3791 = vmatpush1.msra.mxu0 0.0
    %3792 = vmatprep.subr.mxu0 0.0
    %3793 = vmatpush1.msra.mxu0 0.0
    %3794 = vmatprep.subr.mxu0 0.0
    %3795 = vmatpush1.msra.mxu0 0.0
    %3796 = vmatprep.subr.mxu0 0.0
    %3797 = vmatpush1.msra.mxu0 0.0
    %3798 = vmatprep.subr.mxu0 0.0
    %3799 = vmatpush1.msra.mxu0 0.0
    %3800 = vmatprep.subr.mxu0 0.0
    %3801 = vmatpush1.msra.mxu0 0.0
    %3802 = vmatprep.subr.mxu0 0.0
    %3803 = vmatpush1.msra.mxu0 0.0
    %3804 = vmatprep.subr.mxu0 0.0
    %3805 = vmatpush1.msra.mxu0 0.0
    %3806 = vmatprep.subr.mxu0 0.0
    %3807 = vmatpush1.msra.mxu0 0.0
    %3808 = vmatprep.subr.mxu0 0.0
    %3809 = vmatpush1.msra.mxu0 0.0
    %3810 = vmatprep.subr.mxu0 0.0
    %3811 = vmatpush1.msra.mxu0 0.0
    %3812 = vmatprep.subr.mxu0 0.0
    %3813 = vmatpush1.msra.mxu0 0.0
    %3814 = vmatprep.subr.mxu0 0.0
    %3815 = vmatpush1.msra.mxu0 0.0
    %3816 = vmatprep.subr.mxu0 0.0
    %3817 = vmatpush1.msra.mxu0 0.0
    %3818 = vmatprep.subr.mxu0 0.0
    %3819 = vmatpush1.msra.mxu0 0.0
    %3820 = vmatprep.subr.mxu0 0.0
    %3821 = vmatpush1.msra.mxu0 0.0
    %3822 = vmatprep.subr.mxu0 0.0
    %3823 = vmatpush1.msra.mxu0 0.0
    %3824 = vmatprep.subr.mxu0 0.0
    %3825 = vmatpush1.msra.mxu0 0.0
    %3826 = vmatprep.subr.mxu0 0.0
    %3827 = vmatpush1.msra.mxu0 0.0
    %3828 = vmatprep.subr.mxu0 0.0
    %3829 = vmatpush1.msra.mxu0 0.0
    %3830 = vmatprep.subr.mxu0 0.0
    %3831 = vmatpush1.msra.mxu0 0.0
    %3832 = vmatprep.subr.mxu0 0.0
    %3833 = vmatpush1.msra.mxu0 0.0
    %3834 = vmatprep.subr.mxu0 0.0
    %3835 = vmatpush1.msra.mxu0 0.0
    %3836 = vmatprep.subr.mxu0 0.0
    %3837 = vmatpush1.msra.mxu0 0.0
    %3838 = vmatprep.subr.mxu0 0.0
    %3839 = vmatpush1.msra.mxu0 0.0
    %3840 = vmatprep.subr.mxu0 0.0
    %3841 = vmatpush1.msra.mxu0 0.0
    %3842 = vmatprep.subr.mxu0 0.0
    %3843 = vmatpush1.msra.mxu0 0.0
    %3844 = vmatprep.subr.mxu0 0.0
    %3845 = vmatpush1.msra.mxu0 0.0
    %3846 = vmatprep.subr.mxu0 0.0
    %3847 = vmatpush1.msra.mxu0 0.0
    %3848 = vmatprep.mubr.f32.mxu0 0.0
    %3849 = vmatmul.mubr.f32.gmra.mrb[0].mxu0 %v3780
    %v3850 = vpop.f32.mrb[0].mxu0
    %v3851 = vadd.f32 0.0, %v3850
    %v3852 = vpop.f32.mrb[0].mxu0
    %3853 = vdwg.mxu0
    %v3855 = vsel %vm1292, %v3328, 0
    %v3857 = vsel %vm193, %v2640, 0
    %3859 = vmatprep.subr.mxu0 0.0
    %3860 = vmatpush1.msra.mxu0 %v3857
    %3861 = vmatprep.subr.mxu0 0.0
    %3862 = vmatpush1.msra.mxu0 0.0
    %3863 = vmatprep.subr.mxu0 0.0
    %3864 = vmatpush1.msra.mxu0 0.0
    %3865 = vmatprep.subr.mxu0 0.0
    %3866 = vmatpush1.msra.mxu0 0.0
    %3867 = vmatprep.subr.mxu0 0.0
    %3868 = vmatpush1.msra.mxu0 0.0
    %3869 = vmatprep.subr.mxu0 0.0
    %3870 = vmatpush1.msra.mxu0 0.0
    %3871 = vmatprep.subr.mxu0 0.0
    %3872 = vmatpush1.msra.mxu0 0.0
    %3873 = vmatprep.subr.mxu0 0.0
    %3874 = vmatpush1.msra.mxu0 0.0
    %3875 = vmatprep.subr.mxu0 0.0
    %3876 = vmatpush1.msra.mxu0 0.0
    %3877 = vmatprep.subr.mxu0 0.0
    %3878 = vmatpush1.msra.mxu0 0.0
    %3879 = vmatprep.subr.mxu0 0.0
    %3880 = vmatpush1.msra.mxu0 0.0
    %3881 = vmatprep.subr.mxu0 0.0
    %3882 = vmatpush1.msra.mxu0 0.0
    %3883 = vmatprep.subr.mxu0 0.0
    %3884 = vmatpush1.msra.mxu0 0.0
    %3885 = vmatprep.subr.mxu0 0.0
    %3886 = vmatpush1.msra.mxu0 0.0
    %3887 = vmatprep.subr.mxu0 0.0
    %3888 = vmatpush1.msra.mxu0 0.0
    %3889 = vmatprep.subr.mxu0 0.0
    %3890 = vmatpush1.msra.mxu0 0.0
    %3891 = vmatprep.subr.mxu0 0.0
    %3892 = vmatpush1.msra.mxu0 0.0
    %3893 = vmatprep.subr.mxu0 0.0
    %3894 = vmatpush1.msra.mxu0 0.0
    %3895 = vmatprep.subr.mxu0 0.0
    %3896 = vmatpush1.msra.mxu0 0.0
    %3897 = vmatprep.subr.mxu0 0.0
    %3898 = vmatpush1.msra.mxu0 0.0
    %3899 = vmatprep.subr.mxu0 0.0
    %3900 = vmatpush1.msra.mxu0 0.0
    %3901 = vmatprep.subr.mxu0 0.0
    %3902 = vmatpush1.msra.mxu0 0.0
    %3903 = vmatprep.subr.mxu0 0.0
    %3904 = vmatpush1.msra.mxu0 0.0
    %3905 = vmatprep.subr.mxu0 0.0
    %3906 = vmatpush1.msra.mxu0 0.0
    %3907 = vmatprep.subr.mxu0 0.0
    %3908 = vmatpush1.msra.mxu0 0.0
    %3909 = vmatprep.subr.mxu0 0.0
    %3910 = vmatpush1.msra.mxu0 0.0
    %3911 = vmatprep.subr.mxu0 0.0
    %3912 = vmatpush1.msra.mxu0 0.0
    %3913 = vmatprep.subr.mxu0 0.0
    %3914 = vmatpush1.msra.mxu0 0.0
    %3915 = vmatprep.subr.mxu0 0.0
    %3916 = vmatpush1.msra.mxu0 0.0
    %3917 = vmatprep.subr.mxu0 0.0
    %3918 = vmatpush1.msra.mxu0 0.0
    %3919 = vmatprep.subr.mxu0 0.0
    %3920 = vmatpush1.msra.mxu0 0.0
    %3921 = vmatprep.subr.mxu0 0.0
    %3922 = vmatpush1.msra.mxu0 0.0
    %3923 = vmatprep.mubr.f32.mxu0 0.0
    %3924 = vmatmul.mubr.f32.gmra.mrb[0].mxu0 %v3855
    %v3925 = vpop.f32.mrb[0].mxu0
    %v3926 = vadd.f32 0.0, %v3925
    %v3927 = vpop.f32.mrb[0].mxu0
    %3928 = vdwg.mxu0
    %3930 = vrot.lane.b32.xlu0 %v3476, 8
    %v3931 = vpop.permute.xlu0 %3930
    %3934 = vrot.lane.b32.xlu0 %v3551, 16
    %v3935 = vpop.permute.xlu0 %3934
    %3938 = vrot.lane.b32.xlu0 %v3626, 24
    %v3939 = vpop.permute.xlu0 %3938
    %v3941 = vsel %vm602, %v3401, %v3931
    %v3942 = vsel %vm1906, %v3941, %v3935
    %v3943 = vsel %vm1908, %v3942, %v3939
    %3945 = vrot.lane.b32.xlu0 %v3776, 8
    %v3946 = vpop.permute.xlu0 %3945
    %3949 = vrot.lane.b32.xlu0 %v3851, 16
    %v3950 = vpop.permute.xlu0 %3949
    %3953 = vrot.lane.b32.xlu0 %v3926, 24
    %v3954 = vpop.permute.xlu0 %3953
    %v3956 = vsel %vm602, %v3701, %v3946
    %v3957 = vsel %vm1906, %v3956, %v3950
    %v3958 = vsel %vm1908, %v3957, %v3954
    %v3960 = vrot.slane %v3958, 3
    %v3962 = vsel %vm193, %v3943, %v3960
    %s3963 = scalar_lea.vmem %s14, 32
    %v3964 = vld [vmem:[%s3963] sm:$0xff]
    %v3965 = vld [vmem:[%s3963 + $0x8] sm:$0xff]
    %v3966 = vld [vmem:[%s3963 + $0x10] sm:$0xff]
    %v3967 = vld [vmem:[%s3963 + $0x18] sm:$0xff]
    %s3968 = scalar_lea.vmem %s15, 1
    %v3969 = vld [vmem:[%s3968] sm:$0x1]
    %v3971 = vlaneseq
    %v3972 = vshrl.u32 %v3971, 7
    %v3973 = vsub.s32 0, %v3972
    %v3974 = vrot.slane %v3969, %v3973
    %v3977 = vsel %vm197, %v3962, 0
    %v3979 = vsel %vm197, %v3960, 0
    %3981 = vmatprep.subr.mxu0 0.0
    %3982 = vmatpush1.msra.mxu0 %v3964
    %3983 = vmatprep.subr.mxu0 0.0
    %3984 = vmatpush1.msra.mxu0 %v3965
    %3985 = vmatprep.subr.mxu0 0.0
    %3986 = vmatpush1.msra.mxu0 %v3966
    %3987 = vmatprep.subr.mxu0 0.0
    %3988 = vmatpush1.msra.mxu0 %v3967
    %3989 = vmatprep.subr.mxu0 0.0
    %3990 = vmatpush1.msra.mxu0 0.0
    %3991 = vmatprep.subr.mxu0 0.0
    %3992 = vmatpush1.msra.mxu0 0.0
    %3993 = vmatprep.subr.mxu0 0.0
    %3994 = vmatpush1.msra.mxu0 0.0
    %3995 = vmatprep.subr.mxu0 0.0
    %3996 = vmatpush1.msra.mxu0 0.0
    %3997 = vmatprep.subr.mxu0 0.0
    %3998 = vmatpush1.msra.mxu0 0.0
    %3999 = vmatprep.subr.mxu0 0.0
    %4000 = vmatpush1.msra.mxu0 0.0
    %4001 = vmatprep.subr.mxu0 0.0
    %4002 = vmatpush1.msra.mxu0 0.0
    %4003 = vmatprep.subr.mxu0 0.0
    %4004 = vmatpush1.msra.mxu0 0.0
    %4005 = vmatprep.subr.mxu0 0.0
    %4006 = vmatpush1.msra.mxu0 0.0
    %4007 = vmatprep.subr.mxu0 0.0
    %4008 = vmatpush1.msra.mxu0 0.0
    %4009 = vmatprep.subr.mxu0 0.0
    %4010 = vmatpush1.msra.mxu0 0.0
    %4011 = vmatprep.subr.mxu0 0.0
    %4012 = vmatpush1.msra.mxu0 0.0
    %4013 = vmatprep.subr.mxu0 0.0
    %4014 = vmatpush1.msra.mxu0 0.0
    %4015 = vmatprep.subr.mxu0 0.0
    %4016 = vmatpush1.msra.mxu0 0.0
    %4017 = vmatprep.subr.mxu0 0.0
    %4018 = vmatpush1.msra.mxu0 0.0
    %4019 = vmatprep.subr.mxu0 0.0
    %4020 = vmatpush1.msra.mxu0 0.0
    %4021 = vmatprep.subr.mxu0 0.0
    %4022 = vmatpush1.msra.mxu0 0.0
    %4023 = vmatprep.subr.mxu0 0.0
    %4024 = vmatpush1.msra.mxu0 0.0
    %4025 = vmatprep.subr.mxu0 0.0
    %4026 = vmatpush1.msra.mxu0 0.0
    %4027 = vmatprep.subr.mxu0 0.0
    %4028 = vmatpush1.msra.mxu0 0.0
    %4029 = vmatprep.subr.mxu0 0.0
    %4030 = vmatpush1.msra.mxu0 0.0
    %4031 = vmatprep.subr.mxu0 0.0
    %4032 = vmatpush1.msra.mxu0 0.0
    %4033 = vmatprep.subr.mxu0 0.0
    %4034 = vmatpush1.msra.mxu0 0.0
    %4035 = vmatprep.subr.mxu0 0.0
    %4036 = vmatpush1.msra.mxu0 0.0
    %4037 = vmatprep.subr.mxu0 0.0
    %4038 = vmatpush1.msra.mxu0 0.0
    %4039 = vmatprep.subr.mxu0 0.0
    %4040 = vmatpush1.msra.mxu0 0.0
    %4041 = vmatprep.subr.mxu0 0.0
    %4042 = vmatpush1.msra.mxu0 0.0
    %4043 = vmatprep.subr.mxu0 0.0
    %4044 = vmatpush1.msra.mxu0 0.0
    %4045 = vmatprep.mubr.f32.mxu0 0.0
    %4046 = vmatmul.mubr.f32.gmra.mrb[0].mxu0 %v3977
    %v4047 = vpop.f32.mrb[0].mxu0
    %v4048 = vadd.f32 %v3974, %v4047
    %v4049 = vpop.f32.mrb[0].mxu0
    %4050 = vmatprep.mubr.f32.mxu0 0.0
    %4051 = vmatmul.mubr.f32.gmra.mrb[0].mxu0 %v3979
    %v4052 = vpop.f32.mrb[0].mxu0
    %v4053 = vadd.f32 %v3974, %v4052
    %v4054 = vpop.f32.mrb[0].mxu0
    %4055 = vdwg.mxu0
    %v4056 = vadd.f32 %v2272, %v4048
    %v4057 = vadd.f32 %v2273, %v4053
    %s4058 = scalar_lea.vmem %s16, 1
    %v4059 = vld [vmem:[%s4058] sm:$0x1]
    %s4060 = scalar_lea.vmem %s17, 1
    %v4061 = vld [vmem:[%s4060] sm:$0x1]
    %v4062 = vsel %vm197, %v4056, 0.0
    %4063 = vadd.xlane.f32.xlu0 %v4062
    %v4064 = vpop.xlane.xlu0 %4063
    %v4065 = vsel %vm201, %v4057, 0.0
    %4066 = vadd.xlane.f32.xlu0 %v4065
    %v4067 = vpop.xlane.xlu0 %4066
    %v4068 = vmul.f32 %v4064, %v205
    %v4069 = vmul.f32 %v4067, %v205
    %v4070 = vsub.f32 %v4056, %v4068
    %v4071 = vsub.f32 %v4057, %v4069
    %v4072 = vmul.f32 %v4070, %v4070
    %v4073 = vmul.f32 %v4071, %v4071
    %v4074 = vsel %vm197, %v4072, 0.0
    %4075 = vadd.xlane.f32.xlu0 %v4074
    %v4076 = vpop.xlane.xlu0 %4075
    %v4077 = vsel %vm201, %v4073, 0.0
    %4078 = vadd.xlane.f32.xlu0 %v4077
    %v4079 = vpop.xlane.xlu0 %4078
    %v4080 = vmul.f32 %v4076, %v205
    %v4081 = vmul.f32 %v4079, %v205
    %v4082 = vadd.f32 %v4080, 1e-05
    %v4083 = vadd.f32 %v4081, 1e-05
    %v4084 = vrsqrt.pop %v4082
    %v4085 = vrsqrt.pop %v4083
    %v4086 = vmul.f32 %v4070, %v4084
    %v4087 = vmul.f32 %v4071, %v4085
    %v4089 = vlaneseq
    %v4090 = vshrl.u32 %v4089, 7
    %v4091 = vsub.s32 0, %v4090
    %v4092 = vrot.slane %v4059, %v4091
    %v4094 = vmul.f32 %v4086, %v4092
    %v4095 = vmul.f32 %v4087, %v4092
    %v4097 = vlaneseq
    %v4098 = vshrl.u32 %v4097, 7
    %v4099 = vsub.s32 0, %v4098
    %v4100 = vrot.slane %v4061, %v4099
    %v4102 = vadd.f32 %v4094, %v4100
    %v4103 = vadd.f32 %v4095, %v4100
    %s4104 = scalar_lea.vmem %s18, 32
    %v4105 = vld [vmem:[%s4104] sm:$0xff]
    %v4106 = vld [vmem:[%s4104 + $0x8] sm:$0xff]
    %v4107 = vld [vmem:[%s4104 + $0x10] sm:$0xff]
    %v4108 = vld [vmem:[%s4104 + $0x18] sm:$0xff]
    %s4109 = scalar_lea.vmem %s19, 1
    %v4110 = vld [vmem:[%s4109] sm:$0x1]
    %v4112 = vlaneseq
    %v4113 = vshrl.u32 %v4112, 7
    %v4114 = vsub.s32 0, %v4113
    %v4115 = vrot.slane %v4110, %v4114
    %v4118 = vsel %vm197, %v4102, 0
    %v4121 = vsel %vm197, %v4103, 0
    %4123 = vmatprep.subr.mxu0 0.0
    %4124 = vmatpush1.msra.mxu0 %v4105
    %4125 = vmatprep.subr.mxu0 0.0
    %4126 = vmatpush1.msra.mxu0 %v4106
    %4127 = vmatprep.subr.mxu0 0.0
    %4128 = vmatpush1.msra.mxu0 %v4107
    %4129 = vmatprep.subr.mxu0 0.0
    %4130 = vmatpush1.msra.mxu0 %v4108
    %4131 = vmatprep.subr.mxu0 0.0
    %4132 = vmatpush1.msra.mxu0 0.0
    %4133 = vmatprep.subr.mxu0 0.0
    %4134 = vmatpush1.msra.mxu0 0.0
    %4135 = vmatprep.subr.mxu0 0.0
    %4136 = vmatpush1.msra.mxu0 0.0
    %4137 = vmatprep.subr.mxu0 0.0
    %4138 = vmatpush1.msra.mxu0 0.0
    %4139 = vmatprep.subr.mxu0 0.0
    %4140 = vmatpush1.msra.mxu0 0.0
    %4141 = vmatprep.subr.mxu0 0.0
    %4142 = vmatpush1.msra.mxu0 0.0
    %4143 = vmatprep.subr.mxu0 0.0
    %4144 = vmatpush1.msra.mxu0 0.0
    %4145 = vmatprep.subr.mxu0 0.0
    %4146 = vmatpush1.msra.mxu0 0.0
    %4147 = vmatprep.subr.mxu0 0.0
    %4148 = vmatpush1.msra.mxu0 0.0
    %4149 = vmatprep.subr.mxu0 0.0
    %4150 = vmatpush1.msra.mxu0 0.0
    %4151 = vmatprep.subr.mxu0 0.0
    %4152 = vmatpush1.msra.mxu0 0.0
    %4153 = vmatprep.subr.mxu0 0.0
    %4154 = vmatpush1.msra.mxu0 0.0
    %4155 = vmatprep.subr.mxu0 0.0
    %4156 = vmatpush1.msra.mxu0 0.0
    %4157 = vmatprep.subr.mxu0 0.0
    %4158 = vmatpush1.msra.mxu0 0.0
    %4159 = vmatprep.subr.mxu0 0.0
    %4160 = vmatpush1.msra.mxu0 0.0
    %4161 = vmatprep.subr.mxu0 0.0
    %4162 = vmatpush1.msra.mxu0 0.0
    %4163 = vmatprep.subr.mxu0 0.0
    %4164 = vmatpush1.msra.mxu0 0.0
    %4165 = vmatprep.subr.mxu0 0.0
    %4166 = vmatpush1.msra.mxu0 0.0
    %4167 = vmatprep.subr.mxu0 0.0
    %4168 = vmatpush1.msra.mxu0 0.0
    %4169 = vmatprep.subr.mxu0 0.0
    %4170 = vmatpush1.msra.mxu0 0.0
    %4171 = vmatprep.subr.mxu0 0.0
    %4172 = vmatpush1.msra.mxu0 0.0
    %4173 = vmatprep.subr.mxu0 0.0
    %4174 = vmatpush1.msra.mxu0 0.0
    %4175 = vmatprep.subr.mxu0 0.0
    %4176 = vmatpush1.msra.mxu0 0.0
    %4177 = vmatprep.subr.mxu0 0.0
    %4178 = vmatpush1.msra.mxu0 0.0
    %4179 = vmatprep.subr.mxu0 0.0
    %4180 = vmatpush1.msra.mxu0 0.0
    %4181 = vmatprep.subr.mxu0 0.0
    %4182 = vmatpush1.msra.mxu0 0.0
    %4183 = vmatprep.subr.mxu0 0.0
    %4184 = vmatpush1.msra.mxu0 0.0
    %4185 = vmatprep.subr.mxu0 0.0
    %4186 = vmatpush1.msra.mxu0 0.0
    %4187 = vmatprep.mubr.f32.mxu0 0.0
    %4188 = vmatmul.mubr.f32.gmra.mrb[0].mxu0 %v4118
    %v4189 = vpop.f32.mrb[0].mxu0
    %v4190 = vadd.f32 %v4115, %v4189
    %v4191 = vpop.f32.mrb[0].mxu0
    %4192 = vmatprep.mubr.f32.mxu0 0.0
    %4193 = vmatmul.mubr.f32.gmra.mrb[0].mxu0 %v4121
    %v4194 = vpop.f32.mrb[0].mxu0
    %v4195 = vadd.f32 %v4115, %v4194
    %v4196 = vpop.f32.mrb[0].mxu0
    %4197 = vdwg.mxu0
    %v4198 = vmul.f32 %v4190, 1.702
    %v4199 = vmul.f32 %v4195, 1.702
    %v4200 = vxor.u32 %v4198, 2147483648
    %v4201 = vxor.u32 %v4199, 2147483648
    %v4202 = vmul.f32 %v4200, 1.442695
    %v4203 = vpow.pop %v4202
    %v4204 = vmul.f32 %v4201, 1.442695
    %v4205 = vpow.pop %v4204
    %v4206 = vadd.f32 %v4203, 1.0
    %v4207 = vadd.f32 %v4205, 1.0
    %v4208 = vrcp.pop %v4206
    %v4209 = vmul.f32 1.0, %v4208
    %v4210 = vrcp.pop %v4207
    %v4211 = vmul.f32 1.0, %v4210
    %v4212 = vmul.f32 %v4190, %v4209
    %v4213 = vmul.f32 %v4195, %v4211
    %s4214 = scalar_lea.vmem %s20, 128
    %v4215 = vld [vmem:[%s4214] sm:$0xff]
    %v4216 = vld [vmem:[%s4214 + $0x8] sm:$0xff]
    %v4217 = vld [vmem:[%s4214 + $0x10] sm:$0xff]
    %v4218 = vld [vmem:[%s4214 + $0x18] sm:$0xff]
    %v4219 = vld [vmem:[%s4214 + $0x20] sm:$0xff]
    %v4220 = vld [vmem:[%s4214 + $0x28] sm:$0xff]
    %v4221 = vld [vmem:[%s4214 + $0x30] sm:$0xff]
    %v4222 = vld [vmem:[%s4214 + $0x38] sm:$0xff]
    %v4223 = vld [vmem:[%s4214 + $0x40] sm:$0xff]
    %v4224 = vld [vmem:[%s4214 + $0x48] sm:$0xff]
    %v4225 = vld [vmem:[%s4214 + $0x50] sm:$0xff]
    %v4226 = vld [vmem:[%s4214 + $0x58] sm:$0xff]
    %v4227 = vld [vmem:[%s4214 + $0x60] sm:$0xff]
    %v4228 = vld [vmem:[%s4214 + $0x68] sm:$0xff]
    %v4229 = vld [vmem:[%s4214 + $0x70] sm:$0xff]
    %v4230 = vld [vmem:[%s4214 + $0x78] sm:$0xff]
    %s4231 = scalar_lea.vmem %s21, 1
    %v4232 = vld [vmem:[%s4231] sm:$0x1]
    %v4234 = vlaneseq
    %v4235 = vshrl.u32 %v4234, 7
    %v4236 = vsub.s32 0, %v4235
    %v4237 = vrot.slane %v4232, %v4236
    %4239 = vmatprep.subr.mxu0 0.0
    %4240 = vmatpush1.msra.mxu0 %v4215
    %4241 = vmatprep.subr.mxu0 0.0
    %4242 = vmatpush1.msra.mxu0 %v4216
    %4243 = vmatprep.subr.mxu0 0.0
    %4244 = vmatpush1.msra.mxu0 %v4217
    %4245 = vmatprep.subr.mxu0 0.0
    %4246 = vmatpush1.msra.mxu0 %v4218
    %4247 = vmatprep.subr.mxu0 0.0
    %4248 = vmatpush1.msra.mxu0 %v4219
    %4249 = vmatprep.subr.mxu0 0.0
    %4250 = vmatpush1.msra.mxu0 %v4220
    %4251 = vmatprep.subr.mxu0 0.0
    %4252 = vmatpush1.msra.mxu0 %v4221
    %4253 = vmatprep.subr.mxu0 0.0
    %4254 = vmatpush1.msra.mxu0 %v4222
    %4255 = vmatprep.subr.mxu0 0.0
    %4256 = vmatpush1.msra.mxu0 %v4223
    %4257 = vmatprep.subr.mxu0 0.0
    %4258 = vmatpush1.msra.mxu0 %v4224
    %4259 = vmatprep.subr.mxu0 0.0
    %4260 = vmatpush1.msra.mxu0 %v4225
    %4261 = vmatprep.subr.mxu0 0.0
    %4262 = vmatpush1.msra.mxu0 %v4226
    %4263 = vmatprep.subr.mxu0 0.0
    %4264 = vmatpush1.msra.mxu0 %v4227
    %4265 = vmatprep.subr.mxu0 0.0
    %4266 = vmatpush1.msra.mxu0 %v4228
    %4267 = vmatprep.subr.mxu0 0.0
    %4268 = vmatpush1.msra.mxu0 %v4229
    %4269 = vmatprep.subr.mxu0 0.0
    %4270 = vmatpush1.msra.mxu0 %v4230
    %4271 = vmatprep.subr.mxu0 0.0
    %4272 = vmatpush1.msra.mxu0 0.0
    %4273 = vmatprep.subr.mxu0 0.0
    %4274 = vmatpush1.msra.mxu0 0.0
    %4275 = vmatprep.subr.mxu0 0.0
    %4276 = vmatpush1.msra.mxu0 0.0
    %4277 = vmatprep.subr.mxu0 0.0
    %4278 = vmatpush1.msra.mxu0 0.0
    %4279 = vmatprep.subr.mxu0 0.0
    %4280 = vmatpush1.msra.mxu0 0.0
    %4281 = vmatprep.subr.mxu0 0.0
    %4282 = vmatpush1.msra.mxu0 0.0
    %4283 = vmatprep.subr.mxu0 0.0
    %4284 = vmatpush1.msra.mxu0 0.0
    %4285 = vmatprep.subr.mxu0 0.0
    %4286 = vmatpush1.msra.mxu0 0.0
    %4287 = vmatprep.subr.mxu0 0.0
    %4288 = vmatpush1.msra.mxu0 0.0
    %4289 = vmatprep.subr.mxu0 0.0
    %4290 = vmatpush1.msra.mxu0 0.0
    %4291 = vmatprep.subr.mxu0 0.0
    %4292 = vmatpush1.msra.mxu0 0.0
    %4293 = vmatprep.subr.mxu0 0.0
    %4294 = vmatpush1.msra.mxu0 0.0
    %4295 = vmatprep.subr.mxu0 0.0
    %4296 = vmatpush1.msra.mxu0 0.0
    %4297 = vmatprep.subr.mxu0 0.0
    %4298 = vmatpush1.msra.mxu0 0.0
    %4299 = vmatprep.subr.mxu0 0.0
    %4300 = vmatpush1.msra.mxu0 0.0
    %4301 = vmatprep.subr.mxu0 0.0
    %4302 = vmatpush1.msra.mxu0 0.0
    %4303 = vmatprep.mubr.f32.mxu0 0.0
    %4304 = vmatmul.mubr.f32.gmra.mrb[0].mxu0 %v4212
    %v4305 = vpop.f32.mrb[0].mxu0
    %v4306 = vadd.f32 %v4237, %v4305
    %v4307 = vpop.f32.mrb[0].mxu0
    %4308 = vmatprep.mubr.f32.mxu0 0.0
    %4309 = vmatmul.mubr.f32.gmra.mrb[0].mxu0 %v4213
    %v4310 = vpop.f32.mrb[0].mxu0
    %v4311 = vpop.f32.mrb[0].mxu0
    %4312 = vdwg.mxu0
    %v4313 = vadd.f32 %v4056, %v4306
    %v4315 = vrot.slane %v4313, 4
    %v4317 = vsel %vm182, %v4313, %v4315
    %v4318 = vld [vmem:[%s22] sm:$0xff]
    %v4319 = vld [vmem:[%s22 + $0x8] sm:$0xff]
    %v4320 = vld [vmem:[%s22 + $0x10] sm:$0xff]
    %v4321 = vld [vmem:[%s22 + $0x18] sm:$0xff]
    %v4322 = vld [vmem:[%s23] sm:$0x1]
    %v4324 = vlaneseq
    %v4325 = vshrl.u32 %v4324, 7
    %v4326 = vsub.s32 0, %v4325
    %v4327 = vrot.slane %v4322, %v4326
    %v4330 = vsel %vm197, %v4317, 0
    %4332 = vmatprep.subr.mxu0 0.0
    %4333 = vmatpush1.msra.mxu0 %v4318
    %4334 = vmatprep.subr.mxu0 0.0
    %4335 = vmatpush1.msra.mxu0 %v4319
    %4336 = vmatprep.subr.mxu0 0.0
    %4337 = vmatpush1.msra.mxu0 %v4320
    %4338 = vmatprep.subr.mxu0 0.0
    %4339 = vmatpush1.msra.mxu0 %v4321
    %4340 = vmatprep.subr.mxu0 0.0
    %4341 = vmatpush1.msra.mxu0 0.0
    %4342 = vmatprep.subr.mxu0 0.0
    %4343 = vmatpush1.msra.mxu0 0.0
    %4344 = vmatprep.subr.mxu0 0.0
    %4345 = vmatpush1.msra.mxu0 0.0
    %4346 = vmatprep.subr.mxu0 0.0
    %4347 = vmatpush1.msra.mxu0 0.0
    %4348 = vmatprep.subr.mxu0 0.0
    %4349 = vmatpush1.msra.mxu0 0.0
    %4350 = vmatprep.subr.mxu0 0.0
    %4351 = vmatpush1.msra.mxu0 0.0
    %4352 = vmatprep.subr.mxu0 0.0
    %4353 = vmatpush1.msra.mxu0 0.0
    %4354 = vmatprep.subr.mxu0 0.0
    %4355 = vmatpush1.msra.mxu0 0.0
    %4356 = vmatprep.subr.mxu0 0.0
    %4357 = vmatpush1.msra.mxu0 0.0
    %4358 = vmatprep.subr.mxu0 0.0
    %4359 = vmatpush1.msra.mxu0 0.0
    %4360 = vmatprep.subr.mxu0 0.0
    %4361 = vmatpush1.msra.mxu0 0.0
    %4362 = vmatprep.subr.mxu0 0.0
    %4363 = vmatpush1.msra.mxu0 0.0
    %4364 = vmatprep.subr.mxu0 0.0
    %4365 = vmatpush1.msra.mxu0 0.0
    %4366 = vmatprep.subr.mxu0 0.0
    %4367 = vmatpush1.msra.mxu0 0.0
    %4368 = vmatprep.subr.mxu0 0.0
    %4369 = vmatpush1.msra.mxu0 0.0
    %4370 = vmatprep.subr.mxu0 0.0
    %4371 = vmatpush1.msra.mxu0 0.0
    %4372 = vmatprep.subr.mxu0 0.0
    %4373 = vmatpush1.msra.mxu0 0.0
    %4374 = vmatprep.subr.mxu0 0.0
    %4375 = vmatpush1.msra.mxu0 0.0
    %4376 = vmatprep.subr.mxu0 0.0
    %4377 = vmatpush1.msra.mxu0 0.0
    %4378 = vmatprep.subr.mxu0 0.0
    %4379 = vmatpush1.msra.mxu0 0.0
    %4380 = vmatprep.subr.mxu0 0.0
    %4381 = vmatpush1.msra.mxu0 0.0
    %4382 = vmatprep.subr.mxu0 0.0
    %4383 = vmatpush1.msra.mxu0 0.0
    %4384 = vmatprep.subr.mxu0 0.0
    %4385 = vmatpush1.msra.mxu0 0.0
    %4386 = vmatprep.subr.mxu0 0.0
    %4387 = vmatpush1.msra.mxu0 0.0
    %4388 = vmatprep.subr.mxu0 0.0
    %4389 = vmatpush1.msra.mxu0 0.0
    %4390 = vmatprep.subr.mxu0 0.0
    %4391 = vmatpush1.msra.mxu0 0.0
    %4392 = vmatprep.subr.mxu0 0.0
    %4393 = vmatpush1.msra.mxu0 0.0
    %4394 = vmatprep.subr.mxu0 0.0
    %4395 = vmatpush1.msra.mxu0 0.0
    %4396 = vmatprep.mubr.f32.mxu0 0.0
    %4397 = vmatmul.mubr.f32.gmra.mrb[0].mxu0 %v4330
    %v4398 = vpop.f32.mrb[0].mxu0
    %v4399 = vadd.f32 %v4327, %v4398
    %v4400 = vpop.f32.mrb[0].mxu0
    %4401 = vdwg.mxu0
    %vm4402 = vcmask 123904
    %4403 = vst.msk [vmem:[#allocation2] sm:$0x3] %vm4402, %v4399
    // Predicated region
    $region98: #{image_prefix_captioner_forward.1} parent=1 // pred_check
      _
    $region99: #{image_prefix_captioner_forward.1} parent=1 // pred_check_branch
      %4405 = sbr.rel (0) target = $region101
    $region100: #{image_prefix_captioner_forward.1} parent=1 // pred_region
      %s4407 = ssub.s32 32, 32
      %4408 = vsyncadd [#allocation3], %s4407
      %s4410 = sshll.u32 [#allocation2], 4
      %s4411 = int_to_ptr.vmem [resolvable:$true] %s4410
      %4413 = dma.vmem_to_hbm [thread:$0]  %s4411, 32, %s24, [#allocation3]
    $region101: #{image_prefix_captioner_forward.1} parent=1 // pred_fallthru
      _
    // Predicated region
    $region102: #{image_prefix_captioner_forward.1} parent=1 // pred_check
      _
    $region103: #{image_prefix_captioner_forward.1} parent=1 // pred_check_branch
      %4415 = sbr.rel (0) target = $region105
    $region104: #{image_prefix_captioner_forward.1} parent=1 // pred_region
      %4416 = dma.done [#allocation3], 32
    $region105: #{image_prefix_captioner_forward.1} parent=1 // pred_fallthru
      _
    %4417 = vsyncpa [#allocation3], 1

</llo_original>
